<compile_context>
chip_gen: v7x
topology: tpu7x:2x2x1
jax: 0.10.0
libtpu: 0.0.40
codegen_flags: <defaults>
</compile_context>

<pallas_src>
import jax
import jax.numpy as jnp
from jax.experimental import pallas as pl
from jax.experimental.pallas import tpu as pltpu


# ---------------------------------------------------------------------------
# Pallas kernel: whole DecoderBottleneck hot path for one tile of pixels.
# ---------------------------------------------------------------------------
def _kernel(x_ref, w1wd_ref, b1_ref, w2_ref, b2_ref, w3_ref, bzd_ref, out_ref):
    dt = x_ref.dtype
    C4, _ = w3_ref.shape
    x = x_ref[...]                                                   # (T, Cin)

    # conv1 (1x1, bn1 scale folded) + downsample ConvTranspose taps (bn_d scale
    # folded), fused into ONE wide matmul from x, then split by lane slice.
    h = jnp.dot(x, w1wd_ref[...], preferred_element_type=jnp.float32)
    y1 = jnp.maximum(h[:, :C4] + b1_ref[...], 0.0)                   # (T, C4)
    d = h[:, C4:]                                                    # (T, 4*C2)

    # conv2: all 4 ConvTranspose2d taps as ONE wide matmul, + bn2 + relu
    y2 = jnp.dot(y1.astype(dt), w2_ref[...], preferred_element_type=jnp.float32)
    y2 = jnp.maximum(y2 + b2_ref[...], 0.0).astype(dt)               # (T, 4*C4)

    # conv3 (1x1, bn3 scale folded): per-tap matmuls sharing the single
    # (C4, C2) weight -- no block-diagonal zeros streamed through the MXU.
    z = jnp.concatenate(
        [jnp.dot(y2[:, k * C4:(k + 1) * C4], w3_ref[...],
                 preferred_element_type=jnp.float32)
         for k in range(4)], axis=1)                                 # (T, 4*C2)

    # residual add + combined (bn3 + downsample-bn) bias + relu,
    # single full-width lane-dense store in the MXU dtype.
    out_ref[...] = jnp.maximum(z + d + bzd_ref[...], 0.0).astype(out_ref.dtype)


# ---------------------------------------------------------------------------
# Wrapper
# ---------------------------------------------------------------------------
def _round_up(x, m):
    return ((x + m - 1) // m) * m


def _vmem_capacity_bytes():
    try:
        return int(pltpu.get_tpu_info().vmem_capacity_bytes)
    except Exception:  # interpret mode / older jax: assume the smallest (v7x)
        return 64 << 20


def _choose_tile(rows, per_row_bytes, resident_bytes, budget, tr_max=1024):
    """Largest pixel tile (multiple of 16 for bf16 sublane packing) that fits
    the VMEM budget; prefer >=2 (even) tiles when there is enough work so the
    'parallel' grid axis shards across both TensorCores on v7x."""
    rows16 = _round_up(rows, 16)
    cap = max(budget - resident_bytes, 2 << 20)
    fit = (cap // max(per_row_bytes, 1)) // 16 * 16
    tr = max(16, min(tr_max, rows16, fit))
    n = -(-rows16 // tr)                       # cdiv
    if n == 1 and rows16 >= 512:
        n = 2
    elif n > 1 and n % 2:
        n += 1
    return _round_up(-(-rows16 // n), 16)


def decoder_bottleneck_pallas(x_nchw, kparams, mxu_dtype=jnp.bfloat16):
    """x_nchw: (N, Cin, H, W) float32.  Returns (N, Cin//2, 2H, 2W) float32."""
    N, Cin, H, W = x_nchw.shape
    C4, C2 = Cin // 4, Cin // 2
    rows = N * H * W

    # NCHW -> (pixels, channels); MXU operands in mxu_dtype.
    x2d = jnp.transpose(x_nchw, (0, 2, 3, 1)).reshape(rows, Cin).astype(mxu_dtype)

    (w1wd, b1, w2, b2, w3, bzd) = kparams
    item = jnp.dtype(mxu_dtype).itemsize
    wt_bytes = sum(int(a.size) * a.dtype.itemsize for a in kparams)

    # Per-generation VMEM budget: ~0.85 * capacity with headroom for compiler
    # scratch (v5e/v6e ~108 MiB of 128 MiB; v7x ~48 MiB of 64 MiB per TC).
    vmem_cap = _vmem_capacity_bytes()
    vmem_limit = int(max(32 << 20, min(vmem_cap - (16 << 20),
                                       int(vmem_cap * 0.85))))

    # Per-row footprint: double-buffered I/O tiles plus the f32 intermediates
    # (h, y1, y2, z, out) and the bf16 casts feeding conv2/conv3.
    per_row = (2 * Cin * item + 2 * 4 * C2 * item          # pipelined I/O tiles
               + 4 * (C4 + 4 * C2)                         # h (f32)
               + 4 * C4 + 4 * 4 * C4                       # y1, y2 (f32)
               + item * (C4 + 4 * C4)                      # casts of y1, y2
               + 2 * 4 * 4 * C2)                           # z and z+d (f32)
    TR = _choose_tile(rows, per_row, 2 * wt_bytes, vmem_limit - (8 << 20))

    padded = _round_up(rows, TR)
    if padded != rows:
        x2d = jnp.pad(x2d, ((0, padded - rows), (0, 0)))
    grid = (padded // TR,)

    def run(single_buffer_weights):
        def const_spec(arr):
            if single_buffer_weights:
                # Grid-constant weights/biases: one VMEM buffer is enough.
                return pl.BlockSpec(arr.shape, lambda i: (0, 0),
                                    pipeline_mode=pl.Buffered(1))
            return pl.BlockSpec(arr.shape, lambda i: (0, 0))

        return pl.pallas_call(
            _kernel,
            out_shape=jax.ShapeDtypeStruct((padded, 4 * C2), mxu_dtype),
            grid=grid,
            in_specs=[pl.BlockSpec((TR, Cin), lambda i: (i, 0))] +
                     [const_spec(a) for a in kparams],
            out_specs=pl.BlockSpec((TR, 4 * C2), lambda i: (i, 0)),
            compiler_params=pltpu.CompilerParams(
                dimension_semantics=("parallel",),
                vmem_limit_bytes=vmem_limit),
        )(x2d, *kparams)

    try:
        out2d = run(True)
    except Exception:
        # Fallback if this jax version rejects pipeline_mode=pl.Buffered(1).
        out2d = run(False)

    out2d = out2d[:rows]
    # (rows, 4*C2) -> (N, H, W, ki, kj, C2) -> NHWC (N, 2H, 2W, C2) -> NCHW
    out6 = out2d.reshape(N, H, W, 2, 2, C2)
    out_nhwc = out6.transpose(0, 1, 3, 2, 4, 5).reshape(N, 2 * H, 2 * W, C2)
    return out_nhwc.transpose(0, 3, 1, 2).astype(jnp.float32)


# ---------------------------------------------------------------------------
# Parameter construction (deterministic, PyTorch-shaped) + folding for kernel.
# ---------------------------------------------------------------------------
def make_params(key, inchannels):
    C4, C2 = inchannels // 4, inchannels // 2
    ks = jax.random.split(key, 20)
    rn = lambda k, shp, s=0.1: (jax.random.normal(k, shp, jnp.float32) * s)
    ru = lambda k, shp: jax.random.uniform(k, shp, jnp.float32, 0.5, 1.5)

    p = {}
    # PyTorch weight shapes
    p["w1"] = rn(ks[0], (C4, inchannels, 1, 1))     # Conv2d(Cin, C4, 1)
    p["w2"] = rn(ks[1], (C4, C4, 2, 2))             # ConvTranspose2d(C4, C4, 2, 2)
    p["w3"] = rn(ks[2], (C2, C4, 1, 1))             # Conv2d(C4, C2, 1)
    p["wd"] = rn(ks[3], (inchannels, C2, 2, 2))     # ConvTranspose2d(Cin, C2, 2, 2)
    # BatchNorm params (gamma, beta, running_mean, running_var)
    for name, c, i in (("1", C4, 4), ("2", C4, 8), ("3", C2, 12), ("d", C2, 16)):
        p["g" + name] = rn(ks[i], (c,), 0.5) + 1.0
        p["b" + name] = rn(ks[i + 1], (c,), 0.5)
        p["m" + name] = rn(ks[i + 2], (c,), 0.5)
        p["v" + name] = ru(ks[i + 3], (c,))
    return p


def fold_for_kernel(p, eps=1e-5, mxu_dtype=jnp.bfloat16):
    """Fold BN scale/shift into weights/biases, concatenate ConvTranspose taps,
    fuse conv1 with the downsample branch, and cast MXU operands."""
    def bn_fold(g, b, m, v):
        s = g / jnp.sqrt(v + eps)
        return s, b - m * s

    s1, b1 = bn_fold(p["g1"], p["b1"], p["m1"], p["v1"])
    s2, b2 = bn_fold(p["g2"], p["b2"], p["m2"], p["v2"])
    s3, b3 = bn_fold(p["g3"], p["b3"], p["m3"], p["v3"])
    sd, bd = bn_fold(p["gd"], p["bd"], p["md"], p["vd"])

    # conv1: (C4, Cin, 1, 1) -> (Cin, C4), bn1 scale folded per output column
    w1 = p["w1"][:, :, 0, 0].T * s1[None, :]
    # downsample ConvTranspose2d taps (Cin, C2, 2, 2) -> (Cin, 4*C2), k=ki*2+kj
    wd_cat = jnp.concatenate(
        [p["wd"][:, :, ki, kj] * sd[None, :] for ki in (0, 1) for kj in (0, 1)],
        axis=1)
    # fuse conv1 + downsample into a single matmul from x
    w1wd = jnp.concatenate([w1, wd_cat], axis=1)          # (Cin, C4 + 4*C2)

    # conv2 ConvTranspose2d taps (C4, C4, 2, 2) -> (C4, 4*C4)
    w2_cat = jnp.concatenate(
        [p["w2"][:, :, ki, kj] * s2[None, :] for ki in (0, 1) for kj in (0, 1)],
        axis=1)
    b2_cat = jnp.tile(b2, 4)

    # conv3: single shared (C4, C2) weight (applied per tap inside the kernel)
    w3 = p["w3"][:, :, 0, 0].T * s3[None, :]

    # combined residual bias: bn3 shift + downsample-bn shift, tiled per tap
    bzd = jnp.tile(b3, 4) + jnp.tile(bd, 4)

    cast = lambda w: w.astype(mxu_dtype)
    row = lambda b: b.astype(jnp.float32).reshape(1, -1)
    return (cast(w1wd), row(b1), cast(w2_cat), row(b2_cat), cast(w3), row(bzd))


# ---------------------------------------------------------------------------
# Pure-JAX reference mimicking the PyTorch (eval-mode) forward, in NCHW.
# ---------------------------------------------------------------------------
def reference(x, p, eps=1e-5):
    def bn(y, g, b, m, v):
        sh = (1, -1, 1, 1)
        return (y - m.reshape(sh)) / jnp.sqrt(v + eps).reshape(sh) * g.reshape(sh) + b.reshape(sh)

    def conv1x1(y, w):                              # w: (out, in, 1, 1)
        return jnp.einsum('nchw,oc->nohw', y, w[:, :, 0, 0])

    def convT2x2s2(y, w):                           # w: (in, out, 2, 2)
        n, _, h, ww = y.shape
        cout = w.shape[1]
        t = jnp.einsum('ncij,cokl->noijkl', y, w)
        return t.transpose(0, 1, 2, 4, 3, 5).reshape(n, cout, 2 * h, 2 * ww)

    out = jax.nn.relu(bn(conv1x1(x, p["w1"]), p["g1"], p["b1"], p["m1"], p["v1"]))
    out = jax.nn.relu(bn(convT2x2s2(out, p["w2"]), p["g2"], p["b2"], p["m2"], p["v2"]))
    out = bn(conv1x1(out, p["w3"]), p["g3"], p["b3"], p["m3"], p["v3"])
    ident = bn(convT2x2s2(x, p["wd"]), p["gd"], p["bd"], p["md"], p["vd"])
    return jax.nn.relu(out + ident)


if __name__ == "__main__":
    N, Cin, H, W = 2, 16, 8, 8
    key = jax.random.PRNGKey(0)
    kx, kp = jax.random.split(key)
    x = jax.random.normal(kx, (N, Cin, H, W), jnp.float32)

    params = make_params(kp, Cin)
    ref = jax.block_until_ready(reference(x, params))

    # 1) f32 MXU path: tight correctness check of the kernel math.
    kparams32 = fold_for_kernel(params, mxu_dtype=jnp.float32)
    out32 = jax.block_until_ready(
        decoder_bottleneck_pallas(x, kparams32, mxu_dtype=jnp.float32))
    assert out32.shape == (N, Cin // 2, 2 * H, 2 * W), out32.shape
    assert jnp.allclose(out32, ref, rtol=1e-4, atol=1e-4), \
        float(jnp.max(jnp.abs(out32 - ref)))

    # 2) bf16 MXU fast path (default): looser tolerance (bf16 inputs + output).
    kparams16 = fold_for_kernel(params)
    out16 = jax.block_until_ready(decoder_bottleneck_pallas(x, kparams16))
    assert out16.shape == (N, Cin // 2, 2 * H, 2 * W), out16.shape
    assert jnp.allclose(out16, ref, rtol=5e-2, atol=5e-2), \
        float(jnp.max(jnp.abs(out16 - ref)))

    print("KERNEL_OK")
</pallas_src>

<mosaic_0001>
module attributes {stable_mosaic.version = 11 : i64} {
  func.func @_kernel(%arg0: i32, %arg1: memref<128x16xf32, #tpu.memory_space<vmem>>, %arg2: memref<16x36xf32, #tpu.memory_space<vmem>>, %arg3: memref<1x4xf32, #tpu.memory_space<vmem>>, %arg4: memref<4x16xf32, #tpu.memory_space<vmem>>, %arg5: memref<1x16xf32, #tpu.memory_space<vmem>>, %arg6: memref<4x8xf32, #tpu.memory_space<vmem>>, %arg7: memref<1x32xf32, #tpu.memory_space<vmem>>, %arg8: memref<128x32xf32, #tpu.memory_space<vmem>>) attributes {dimension_semantics = [#tpu.dimension_semantics<parallel>], iteration_bounds = array<i64: 1>, scalar_prefetch = 0 : i64, scratch_operands = 0 : i64, tpu.core_type = #tpu.core_type<tc>, window_params = [{transform_indices = @transform_0, window_bounds = array<i64: 128, 16>}, {pipeline_mode = #tpu.pipeline_mode<synchronous>, transform_indices = @transform_1, window_bounds = array<i64: 16, 36>}, {pipeline_mode = #tpu.pipeline_mode<synchronous>, transform_indices = @transform_2, window_bounds = array<i64: 1, 4>}, {pipeline_mode = #tpu.pipeline_mode<synchronous>, transform_indices = @transform_3, window_bounds = array<i64: 4, 16>}, {pipeline_mode = #tpu.pipeline_mode<synchronous>, transform_indices = @transform_4, window_bounds = array<i64: 1, 16>}, {pipeline_mode = #tpu.pipeline_mode<synchronous>, transform_indices = @transform_5, window_bounds = array<i64: 4, 8>}, {pipeline_mode = #tpu.pipeline_mode<synchronous>, transform_indices = @transform_6, window_bounds = array<i64: 1, 32>}, {transform_indices = @transform_7, window_bounds = array<i64: 128, 32>}]} {
    %c0 = arith.constant 0 : index
    %c0_0 = arith.constant 0 : index
    %0 = vector.load %arg1[%c0, %c0_0] : memref<128x16xf32, #tpu.memory_space<vmem>>, vector<128x16xf32>
    %c0_1 = arith.constant 0 : index
    %c0_2 = arith.constant 0 : index
    %1 = vector.load %arg2[%c0_1, %c0_2] : memref<16x36xf32, #tpu.memory_space<vmem>>, vector<16x36xf32>
    %cst = arith.constant dense<0.000000e+00> : vector<128x36xf32>
    %2 = tpu.matmul %0, %1, %cst {dimension_numbers = #tpu.dot_dimension_numbers<[1], [0], [0], [1], [0, 0, 1, 1], [], []>} : vector<128x16xf32>, vector<16x36xf32>, vector<128x36xf32> -> vector<128x36xf32>
    %3 = vector.extract_strided_slice %2 {offsets = [0, 0], sizes = [128, 4], strides = [1, 1]} : vector<128x36xf32> to vector<128x4xf32>
    %c0_3 = arith.constant 0 : index
    %c0_4 = arith.constant 0 : index
    %4 = vector.load %arg3[%c0_3, %c0_4] : memref<1x4xf32, #tpu.memory_space<vmem>>, vector<1x4xf32>
    %5 = vector.broadcast %4 : vector<1x4xf32> to vector<128x4xf32>
    %6 = arith.addf %3, %5 : vector<128x4xf32>
    %cst_5 = arith.constant 0.000000e+00 : f32
    %7 = vector.broadcast %cst_5 : f32 to vector<128x4xf32>
    %8 = arith.maximumf %6, %7 : vector<128x4xf32>
    %9 = vector.extract_strided_slice %2 {offsets = [0, 4], sizes = [128, 32], strides = [1, 1]} : vector<128x36xf32> to vector<128x32xf32>
    %c0_6 = arith.constant 0 : index
    %c0_7 = arith.constant 0 : index
    %10 = vector.load %arg4[%c0_6, %c0_7] : memref<4x16xf32, #tpu.memory_space<vmem>>, vector<4x16xf32>
    %cst_8 = arith.constant dense<0.000000e+00> : vector<128x16xf32>
    %11 = tpu.matmul %8, %10, %cst_8 {dimension_numbers = #tpu.dot_dimension_numbers<[1], [0], [0], [1], [0, 0, 1, 1], [], []>} : vector<128x4xf32>, vector<4x16xf32>, vector<128x16xf32> -> vector<128x16xf32>
    %c0_9 = arith.constant 0 : index
    %c0_10 = arith.constant 0 : index
    %12 = vector.load %arg5[%c0_9, %c0_10] : memref<1x16xf32, #tpu.memory_space<vmem>>, vector<1x16xf32>
    %13 = vector.broadcast %12 : vector<1x16xf32> to vector<128x16xf32>
    %14 = arith.addf %11, %13 : vector<128x16xf32>
    %cst_11 = arith.constant 0.000000e+00 : f32
    %15 = vector.broadcast %cst_11 : f32 to vector<128x16xf32>
    %16 = arith.maximumf %14, %15 : vector<128x16xf32>
    %17 = vector.extract_strided_slice %16 {offsets = [0, 0], sizes = [128, 4], strides = [1, 1]} : vector<128x16xf32> to vector<128x4xf32>
    %c0_12 = arith.constant 0 : index
    %c0_13 = arith.constant 0 : index
    %18 = vector.load %arg6[%c0_12, %c0_13] : memref<4x8xf32, #tpu.memory_space<vmem>>, vector<4x8xf32>
    %cst_14 = arith.constant dense<0.000000e+00> : vector<128x8xf32>
    %19 = tpu.matmul %17, %18, %cst_14 {dimension_numbers = #tpu.dot_dimension_numbers<[1], [0], [0], [1], [0, 0, 1, 1], [], []>} : vector<128x4xf32>, vector<4x8xf32>, vector<128x8xf32> -> vector<128x8xf32>
    %20 = vector.extract_strided_slice %16 {offsets = [0, 4], sizes = [128, 4], strides = [1, 1]} : vector<128x16xf32> to vector<128x4xf32>
    %c0_15 = arith.constant 0 : index
    %c0_16 = arith.constant 0 : index
    %21 = vector.load %arg6[%c0_15, %c0_16] : memref<4x8xf32, #tpu.memory_space<vmem>>, vector<4x8xf32>
    %cst_17 = arith.constant dense<0.000000e+00> : vector<128x8xf32>
    %22 = tpu.matmul %20, %21, %cst_17 {dimension_numbers = #tpu.dot_dimension_numbers<[1], [0], [0], [1], [0, 0, 1, 1], [], []>} : vector<128x4xf32>, vector<4x8xf32>, vector<128x8xf32> -> vector<128x8xf32>
    %23 = vector.extract_strided_slice %16 {offsets = [0, 8], sizes = [128, 4], strides = [1, 1]} : vector<128x16xf32> to vector<128x4xf32>
    %c0_18 = arith.constant 0 : index
    %c0_19 = arith.constant 0 : index
    %24 = vector.load %arg6[%c0_18, %c0_19] : memref<4x8xf32, #tpu.memory_space<vmem>>, vector<4x8xf32>
    %cst_20 = arith.constant dense<0.000000e+00> : vector<128x8xf32>
    %25 = tpu.matmul %23, %24, %cst_20 {dimension_numbers = #tpu.dot_dimension_numbers<[1], [0], [0], [1], [0, 0, 1, 1], [], []>} : vector<128x4xf32>, vector<4x8xf32>, vector<128x8xf32> -> vector<128x8xf32>
    %26 = vector.extract_strided_slice %16 {offsets = [0, 12], sizes = [128, 4], strides = [1, 1]} : vector<128x16xf32> to vector<128x4xf32>
    %c0_21 = arith.constant 0 : index
    %c0_22 = arith.constant 0 : index
    %27 = vector.load %arg6[%c0_21, %c0_22] : memref<4x8xf32, #tpu.memory_space<vmem>>, vector<4x8xf32>
    %cst_23 = arith.constant dense<0.000000e+00> : vector<128x8xf32>
    %28 = tpu.matmul %26, %27, %cst_23 {dimension_numbers = #tpu.dot_dimension_numbers<[1], [0], [0], [1], [0, 0, 1, 1], [], []>} : vector<128x4xf32>, vector<4x8xf32>, vector<128x8xf32> -> vector<128x8xf32>
    %29 = tpu.concatenate %19, %22, %25, %28 in 1 : vector<128x8xf32>, vector<128x8xf32>, vector<128x8xf32>, vector<128x8xf32> -> vector<128x32xf32>
    %30 = arith.addf %29, %9 : vector<128x32xf32>
    %c0_24 = arith.constant 0 : index
    %c0_25 = arith.constant 0 : index
    %31 = vector.load %arg7[%c0_24, %c0_25] : memref<1x32xf32, #tpu.memory_space<vmem>>, vector<1x32xf32>
    %32 = vector.broadcast %31 : vector<1x32xf32> to vector<128x32xf32>
    %33 = arith.addf %30, %32 : vector<128x32xf32>
    %cst_26 = arith.constant 0.000000e+00 : f32
    %34 = vector.broadcast %cst_26 : f32 to vector<128x32xf32>
    %35 = arith.maximumf %33, %34 : vector<128x32xf32>
    %c0_27 = arith.constant 0 : index
    %c0_28 = arith.constant 0 : index
    %36 = vector.load %arg8[%c0_27, %c0_28] : memref<128x32xf32, #tpu.memory_space<vmem>>, vector<128x32xf32>
    tpu.vector_store %arg8[%c0_27, %c0_28], %35 {strides = array<i32>} : memref<128x32xf32, #tpu.memory_space<vmem>>, vector<128x32xf32>,
    return
  }
  func.func @transform_0(%arg0: i32) -> (i32, i32) {
    %c0_i32 = arith.constant 0 : i32
    %c0_i32_0 = arith.constant 0 : i32
    return %arg0, %c0_i32 : i32, i32
  }
  func.func @transform_1(%arg0: i32) -> (i32, i32) {
    %c0_i32 = arith.constant 0 : i32
    %c0_i32_0 = arith.constant 0 : i32
    %c0_i32_1 = arith.constant 0 : i32
    return %c0_i32, %c0_i32_0 : i32, i32
  }
  func.func @transform_2(%arg0: i32) -> (i32, i32) {
    %c0_i32 = arith.constant 0 : i32
    %c0_i32_0 = arith.constant 0 : i32
    %c0_i32_1 = arith.constant 0 : i32
    return %c0_i32, %c0_i32_0 : i32, i32
  }
  func.func @transform_3(%arg0: i32) -> (i32, i32) {
    %c0_i32 = arith.constant 0 : i32
    %c0_i32_0 = arith.constant 0 : i32
    %c0_i32_1 = arith.constant 0 : i32
    return %c0_i32, %c0_i32_0 : i32, i32
  }
  func.func @transform_4(%arg0: i32) -> (i32, i32) {
    %c0_i32 = arith.constant 0 : i32
    %c0_i32_0 = arith.constant 0 : i32
    %c0_i32_1 = arith.constant 0 : i32
    return %c0_i32, %c0_i32_0 : i32, i32
  }
  func.func @transform_5(%arg0: i32) -> (i32, i32) {
    %c0_i32 = arith.constant 0 : i32
    %c0_i32_0 = arith.constant 0 : i32
    %c0_i32_1 = arith.constant 0 : i32
    return %c0_i32, %c0_i32_0 : i32, i32
  }
  func.func @transform_6(%arg0: i32) -> (i32, i32) {
    %c0_i32 = arith.constant 0 : i32
    %c0_i32_0 = arith.constant 0 : i32
    %c0_i32_1 = arith.constant 0 : i32
    return %c0_i32, %c0_i32_0 : i32, i32
  }
  func.func @transform_7(%arg0: i32) -> (i32, i32) {
    %c0_i32 = arith.constant 0 : i32
    %c0_i32_0 = arith.constant 0 : i32
    return %arg0, %c0_i32 : i32, i32
  }
}

module attributes {stable_mosaic.version = 11 : i64} {
  func.func @_kernel(%arg0: i32, %arg1: memref<128x16xf32, #tpu.memory_space<vmem>>, %arg2: memref<16x36xf32, #tpu.memory_space<vmem>>, %arg3: memref<1x4xf32, #tpu.memory_space<vmem>>, %arg4: memref<4x16xf32, #tpu.memory_space<vmem>>, %arg5: memref<1x16xf32, #tpu.memory_space<vmem>>, %arg6: memref<4x8xf32, #tpu.memory_space<vmem>>, %arg7: memref<1x32xf32, #tpu.memory_space<vmem>>, %arg8: memref<128x32xf32, #tpu.memory_space<vmem>>) attributes {dimension_semantics = [#tpu.dimension_semantics<parallel>], iteration_bounds = array<i64: 1>, scalar_prefetch = 0 : i64, scratch_operands = 0 : i64, tpu.core_type = #tpu.core_type<tc>, window_params = [{transform_indices = @transform_0, window_bounds = array<i64: 128, 16>}, {pipeline_mode = #tpu.pipeline_mode<synchronous>, transform_indices = @transform_1, window_bounds = array<i64: 16, 36>}, {pipeline_mode = #tpu.pipeline_mode<synchronous>, transform_indices = @transform_2, window_bounds = array<i64: 1, 4>}, {pipeline_mode = #tpu.pipeline_mode<synchronous>, transform_indices = @transform_3, window_bounds = array<i64: 4, 16>}, {pipeline_mode = #tpu.pipeline_mode<synchronous>, transform_indices = @transform_4, window_bounds = array<i64: 1, 16>}, {pipeline_mode = #tpu.pipeline_mode<synchronous>, transform_indices = @transform_5, window_bounds = array<i64: 4, 8>}, {pipeline_mode = #tpu.pipeline_mode<synchronous>, transform_indices = @transform_6, window_bounds = array<i64: 1, 32>}, {transform_indices = @transform_7, window_bounds = array<i64: 128, 32>}]} {
    %c0 = arith.constant 0 : index
    %c0_0 = arith.constant 0 : index
    %0 = vector.load %arg1[%c0, %c0_0] : memref<128x16xf32, #tpu.memory_space<vmem>>, vector<128x16xf32>
    %c0_1 = arith.constant 0 : index
    %c0_2 = arith.constant 0 : index
    %1 = vector.load %arg2[%c0_1, %c0_2] : memref<16x36xf32, #tpu.memory_space<vmem>>, vector<16x36xf32>
    %cst = arith.constant dense<0.000000e+00> : vector<128x36xf32>
    %2 = tpu.matmul %0, %1, %cst {dimension_numbers = #tpu.dot_dimension_numbers<[1], [0], [0], [1], [0, 0, 1, 1], [], []>} : vector<128x16xf32>, vector<16x36xf32>, vector<128x36xf32> -> vector<128x36xf32>
    %3 = vector.extract_strided_slice %2 {offsets = [0, 0], sizes = [128, 4], strides = [1, 1]} : vector<128x36xf32> to vector<128x4xf32>
    %c0_3 = arith.constant 0 : index
    %c0_4 = arith.constant 0 : index
    %4 = vector.load %arg3[%c0_3, %c0_4] : memref<1x4xf32, #tpu.memory_space<vmem>>, vector<1x4xf32>
    %5 = vector.broadcast %4 : vector<1x4xf32> to vector<128x4xf32>
    %6 = arith.addf %3, %5 : vector<128x4xf32>
    %cst_5 = arith.constant 0.000000e+00 : f32
    %7 = vector.broadcast %cst_5 : f32 to vector<128x4xf32>
    %8 = arith.maximumf %6, %7 : vector<128x4xf32>
    %9 = vector.extract_strided_slice %2 {offsets = [0, 4], sizes = [128, 32], strides = [1, 1]} : vector<128x36xf32> to vector<128x32xf32>
    %c0_6 = arith.constant 0 : index
    %c0_7 = arith.constant 0 : index
    %10 = vector.load %arg4[%c0_6, %c0_7] : memref<4x16xf32, #tpu.memory_space<vmem>>, vector<4x16xf32>
    %cst_8 = arith.constant dense<0.000000e+00> : vector<128x16xf32>
    %11 = tpu.matmul %8, %10, %cst_8 {dimension_numbers = #tpu.dot_dimension_numbers<[1], [0], [0], [1], [0, 0, 1, 1], [], []>} : vector<128x4xf32>, vector<4x16xf32>, vector<128x16xf32> -> vector<128x16xf32>
    %c0_9 = arith.constant 0 : index
    %c0_10 = arith.constant 0 : index
    %12 = vector.load %arg5[%c0_9, %c0_10] : memref<1x16xf32, #tpu.memory_space<vmem>>, vector<1x16xf32>
    %13 = vector.broadcast %12 : vector<1x16xf32> to vector<128x16xf32>
    %14 = arith.addf %11, %13 : vector<128x16xf32>
    %cst_11 = arith.constant 0.000000e+00 : f32
    %15 = vector.broadcast %cst_11 : f32 to vector<128x16xf32>
    %16 = arith.maximumf %14, %15 : vector<128x16xf32>
    %17 = vector.extract_strided_slice %16 {offsets = [0, 0], sizes = [128, 4], strides = [1, 1]} : vector<128x16xf32> to vector<128x4xf32>
    %c0_12 = arith.constant 0 : index
    %c0_13 = arith.constant 0 : index
    %18 = vector.load %arg6[%c0_12, %c0_13] : memref<4x8xf32, #tpu.memory_space<vmem>>, vector<4x8xf32>
    %cst_14 = arith.constant dense<0.000000e+00> : vector<128x8xf32>
    %19 = tpu.matmul %17, %18, %cst_14 {dimension_numbers = #tpu.dot_dimension_numbers<[1], [0], [0], [1], [0, 0, 1, 1], [], []>} : vector<128x4xf32>, vector<4x8xf32>, vector<128x8xf32> -> vector<128x8xf32>
    %20 = vector.extract_strided_slice %16 {offsets = [0, 4], sizes = [128, 4], strides = [1, 1]} : vector<128x16xf32> to vector<128x4xf32>
    %c0_15 = arith.constant 0 : index
    %c0_16 = arith.constant 0 : index
    %21 = vector.load %arg6[%c0_15, %c0_16] : memref<4x8xf32, #tpu.memory_space<vmem>>, vector<4x8xf32>
    %cst_17 = arith.constant dense<0.000000e+00> : vector<128x8xf32>
    %22 = tpu.matmul %20, %21, %cst_17 {dimension_numbers = #tpu.dot_dimension_numbers<[1], [0], [0], [1], [0, 0, 1, 1], [], []>} : vector<128x4xf32>, vector<4x8xf32>, vector<128x8xf32> -> vector<128x8xf32>
    %23 = vector.extract_strided_slice %16 {offsets = [0, 8], sizes = [128, 4], strides = [1, 1]} : vector<128x16xf32> to vector<128x4xf32>
    %c0_18 = arith.constant 0 : index
    %c0_19 = arith.constant 0 : index
    %24 = vector.load %arg6[%c0_18, %c0_19] : memref<4x8xf32, #tpu.memory_space<vmem>>, vector<4x8xf32>
    %cst_20 = arith.constant dense<0.000000e+00> : vector<128x8xf32>
    %25 = tpu.matmul %23, %24, %cst_20 {dimension_numbers = #tpu.dot_dimension_numbers<[1], [0], [0], [1], [0, 0, 1, 1], [], []>} : vector<128x4xf32>, vector<4x8xf32>, vector<128x8xf32> -> vector<128x8xf32>
    %26 = vector.extract_strided_slice %16 {offsets = [0, 12], sizes = [128, 4], strides = [1, 1]} : vector<128x16xf32> to vector<128x4xf32>
    %c0_21 = arith.constant 0 : index
    %c0_22 = arith.constant 0 : index
    %27 = vector.load %arg6[%c0_21, %c0_22] : memref<4x8xf32, #tpu.memory_space<vmem>>, vector<4x8xf32>
    %cst_23 = arith.constant dense<0.000000e+00> : vector<128x8xf32>
    %28 = tpu.matmul %26, %27, %cst_23 {dimension_numbers = #tpu.dot_dimension_numbers<[1], [0], [0], [1], [0, 0, 1, 1], [], []>} : vector<128x4xf32>, vector<4x8xf32>, vector<128x8xf32> -> vector<128x8xf32>
    %29 = tpu.concatenate %19, %22, %25, %28 in 1 : vector<128x8xf32>, vector<128x8xf32>, vector<128x8xf32>, vector<128x8xf32> -> vector<128x32xf32>
    %30 = arith.addf %29, %9 : vector<128x32xf32>
    %c0_24 = arith.constant 0 : index
    %c0_25 = arith.constant 0 : index
    %31 = vector.load %arg7[%c0_24, %c0_25] : memref<1x32xf32, #tpu.memory_space<vmem>>, vector<1x32xf32>
    %32 = vector.broadcast %31 : vector<1x32xf32> to vector<128x32xf32>
    %33 = arith.addf %30, %32 : vector<128x32xf32>
    %cst_26 = arith.constant 0.000000e+00 : f32
    %34 = vector.broadcast %cst_26 : f32 to vector<128x32xf32>
    %35 = arith.maximumf %33, %34 : vector<128x32xf32>
    %c0_27 = arith.constant 0 : index
    %c0_28 = arith.constant 0 : index
    %36 = vector.load %arg8[%c0_27, %c0_28] : memref<128x32xf32, #tpu.memory_space<vmem>>, vector<128x32xf32>
    tpu.vector_store %arg8[%c0_27, %c0_28], %35 {strides = array<i32>} : memref<128x32xf32, #tpu.memory_space<vmem>>, vector<128x32xf32>,
    return
  }
  func.func @transform_0(%arg0: i32) -> (i32, i32) {
    %c0_i32 = arith.constant 0 : i32
    %c0_i32_0 = arith.constant 0 : i32
    return %arg0, %c0_i32 : i32, i32
  }
  func.func @transform_1(%arg0: i32) -> (i32, i32) {
    %c0_i32 = arith.constant 0 : i32
    %c0_i32_0 = arith.constant 0 : i32
    %c0_i32_1 = arith.constant 0 : i32
    return %c0_i32, %c0_i32_0 : i32, i32
  }
  func.func @transform_2(%arg0: i32) -> (i32, i32) {
    %c0_i32 = arith.constant 0 : i32
    %c0_i32_0 = arith.constant 0 : i32
    %c0_i32_1 = arith.constant 0 : i32
    return %c0_i32, %c0_i32_0 : i32, i32
  }
  func.func @transform_3(%arg0: i32) -> (i32, i32) {
    %c0_i32 = arith.constant 0 : i32
    %c0_i32_0 = arith.constant 0 : i32
    %c0_i32_1 = arith.constant 0 : i32
    return %c0_i32, %c0_i32_0 : i32, i32
  }
  func.func @transform_4(%arg0: i32) -> (i32, i32) {
    %c0_i32 = arith.constant 0 : i32
    %c0_i32_0 = arith.constant 0 : i32
    %c0_i32_1 = arith.constant 0 : i32
    return %c0_i32, %c0_i32_0 : i32, i32
  }
  func.func @transform_5(%arg0: i32) -> (i32, i32) {
    %c0_i32 = arith.constant 0 : i32
    %c0_i32_0 = arith.constant 0 : i32
    %c0_i32_1 = arith.constant 0 : i32
    return %c0_i32, %c0_i32_0 : i32, i32
  }
  func.func @transform_6(%arg0: i32) -> (i32, i32) {
    %c0_i32 = arith.constant 0 : i32
    %c0_i32_0 = arith.constant 0 : i32
    %c0_i32_1 = arith.constant 0 : i32
    return %c0_i32, %c0_i32_0 : i32, i32
  }
  func.func @transform_7(%arg0: i32) -> (i32, i32) {
    %c0_i32 = arith.constant 0 : i32
    %c0_i32_0 = arith.constant 0 : i32
    return %arg0, %c0_i32 : i32, i32
  }
}

</mosaic_0001>

<llo_original>
// kernel: tpu_custom_call.1
$region0: #{tpu_custom_call.1}
  #allocation0 [shape = 'u32[]', space=smem, size = 0x4, offset = 0x4, fixed_abs, tag = 'smem constant byte address 0x4 - core index']
  #allocation1 [shape = 'u32[144,128]{1,0:T(1,128)}', space=vmem, size = 0x12000, scoped, tag = 'internal scratch']
  %s0 = inlined_call_operand.vmem [shape: f32[128,16], index: 0, kind: input, shape index: {}]
  %s1 = inlined_call_operand.vmem [shape: f32[16,36], index: 1, kind: input, shape index: {}]
  %s2 = inlined_call_operand.vmem [shape: f32[1,4], index: 2, kind: input, shape index: {}]
  %s3 = inlined_call_operand.vmem [shape: f32[4,16], index: 3, kind: input, shape index: {}]
  %s4 = inlined_call_operand.vmem [shape: f32[1,16], index: 4, kind: input, shape index: {}]
  %s5 = inlined_call_operand.vmem [shape: f32[4,8], index: 5, kind: input, shape index: {}]
  %s6 = inlined_call_operand.vmem [shape: f32[1,32], index: 6, kind: input, shape index: {}]
  %s7 = inlined_call_operand.vmem [shape: f32[128,32], index: 7, kind: output, shape index: {}]
  %s8 = sld [smem:[#allocation0]]
  $region38: #{tpu_custom_call.1} parent=0
    _
  %s10 = ssub.s32 1, %s8
  %s11 = scalar_select 0, %s10, %s8
  // Predicated region
  $region2: #{tpu_custom_call.1} parent=0 // pred_check
    _
  $region3: #{tpu_custom_call.1} parent=0 // pred_check_branch
    %13 = sbr.rel (0) target = $region5
  $region4: #{tpu_custom_call.1} parent=0 // pred_region
    _
  $region5: #{tpu_custom_call.1} parent=0 // pred_fallthru
    _
  // Predicated region
  $region6: #{tpu_custom_call.1} parent=0 // pred_check
    _
  $region7: #{tpu_custom_call.1} parent=0 // pred_check_branch
    %15 = sbr.rel (0) target = $region9
  $region8: #{tpu_custom_call.1} parent=0 // pred_region
    _
  $region9: #{tpu_custom_call.1} parent=0 // pred_fallthru
    _
  // Predicated region
  $region10: #{tpu_custom_call.1} parent=0 // pred_check
    _
  $region11: #{tpu_custom_call.1} parent=0 // pred_check_branch
    %17 = sbr.rel (0) target = $region13
  $region12: #{tpu_custom_call.1} parent=0 // pred_region
    _
  $region13: #{tpu_custom_call.1} parent=0 // pred_fallthru
    _
  // Predicated region
  $region14: #{tpu_custom_call.1} parent=0 // pred_check
    _
  $region15: #{tpu_custom_call.1} parent=0 // pred_check_branch
    %19 = sbr.rel (0) target = $region17
  $region16: #{tpu_custom_call.1} parent=0 // pred_region
    _
  $region17: #{tpu_custom_call.1} parent=0 // pred_fallthru
    _
  // Predicated region
  $region18: #{tpu_custom_call.1} parent=0 // pred_check
    _
  $region19: #{tpu_custom_call.1} parent=0 // pred_check_branch
    %21 = sbr.rel (0) target = $region21
  $region20: #{tpu_custom_call.1} parent=0 // pred_region
    _
  $region21: #{tpu_custom_call.1} parent=0 // pred_fallthru
    _
  // Predicated region
  $region22: #{tpu_custom_call.1} parent=0 // pred_check
    _
  $region23: #{tpu_custom_call.1} parent=0 // pred_check_branch
    %23 = sbr.rel (0) target = $region25
  $region24: #{tpu_custom_call.1} parent=0 // pred_region
    _
  $region25: #{tpu_custom_call.1} parent=0 // pred_fallthru
    _
  // Predicated region
  $region26: #{tpu_custom_call.1} parent=0 // pred_check
    _
  $region27: #{tpu_custom_call.1} parent=0 // pred_check_branch
    %25 = sbr.rel (0) target = $region29
  $region28: #{tpu_custom_call.1} parent=0 // pred_region
    _
  $region29: #{tpu_custom_call.1} parent=0 // pred_fallthru
    _
  %v26 = vld [vmem:[%s0] sm:$0xff]
  %v27 = vld [vmem:[%s0 + $0x8] sm:$0xff]
  %v28 = vld [vmem:[%s0 + $0x10] sm:$0xff]
  %v29 = vld [vmem:[%s0 + $0x18] sm:$0xff]
  %v30 = vld [vmem:[%s0 + $0x20] sm:$0xff]
  %v31 = vld [vmem:[%s0 + $0x28] sm:$0xff]
  %v32 = vld [vmem:[%s0 + $0x30] sm:$0xff]
  %v33 = vld [vmem:[%s0 + $0x38] sm:$0xff]
  %v34 = vld [vmem:[%s0 + $0x40] sm:$0xff]
  %v35 = vld [vmem:[%s0 + $0x48] sm:$0xff]
  %v36 = vld [vmem:[%s0 + $0x50] sm:$0xff]
  %v37 = vld [vmem:[%s0 + $0x58] sm:$0xff]
  %v38 = vld [vmem:[%s0 + $0x60] sm:$0xff]
  %v39 = vld [vmem:[%s0 + $0x68] sm:$0xff]
  %v40 = vld [vmem:[%s0 + $0x70] sm:$0xff]
  %v41 = vld [vmem:[%s0 + $0x78] sm:$0xff]
  %v42 = vld [vmem:[%s1] sm:$0xff]
  %v43 = vld [vmem:[%s1 + $0x8] sm:$0xff]
  %vm44 = vcmask 130048
  %v46 = vsel %vm44, %v26, 0
  %v49 = vsel %vm44, %v27, 0
  %v52 = vsel %vm44, %v28, 0
  %v55 = vsel %vm44, %v29, 0
  %v58 = vsel %vm44, %v30, 0
  %v61 = vsel %vm44, %v31, 0
  %v64 = vsel %vm44, %v32, 0
  %v67 = vsel %vm44, %v33, 0
  %v70 = vsel %vm44, %v34, 0
  %v73 = vsel %vm44, %v35, 0
  %v76 = vsel %vm44, %v36, 0
  %v79 = vsel %vm44, %v37, 0
  %v82 = vsel %vm44, %v38, 0
  %v85 = vsel %vm44, %v39, 0
  %v88 = vsel %vm44, %v40, 0
  %v91 = vsel %vm44, %v41, 0
  %93 = vmatprep.subr.mxu0 0.0
  %94 = vmatpush1.msra.mxu0 %v42
  %95 = vmatprep.subr.mxu0 0.0
  %96 = vmatpush1.msra.mxu0 %v43
  %97 = vmatprep.subr.mxu0 0.0
  %98 = vmatpush1.msra.mxu0 0.0
  %99 = vmatprep.subr.mxu0 0.0
  %100 = vmatpush1.msra.mxu0 0.0
  %101 = vmatprep.subr.mxu0 0.0
  %102 = vmatpush1.msra.mxu0 0.0
  %103 = vmatprep.subr.mxu0 0.0
  %104 = vmatpush1.msra.mxu0 0.0
  %105 = vmatprep.subr.mxu0 0.0
  %106 = vmatpush1.msra.mxu0 0.0
  %107 = vmatprep.subr.mxu0 0.0
  %108 = vmatpush1.msra.mxu0 0.0
  %109 = vmatprep.subr.mxu0 0.0
  %110 = vmatpush1.msra.mxu0 0.0
  %111 = vmatprep.subr.mxu0 0.0
  %112 = vmatpush1.msra.mxu0 0.0
  %113 = vmatprep.subr.mxu0 0.0
  %114 = vmatpush1.msra.mxu0 0.0
  %115 = vmatprep.subr.mxu0 0.0
  %116 = vmatpush1.msra.mxu0 0.0
  %117 = vmatprep.subr.mxu0 0.0
  %118 = vmatpush1.msra.mxu0 0.0
  %119 = vmatprep.subr.mxu0 0.0
  %120 = vmatpush1.msra.mxu0 0.0
  %121 = vmatprep.subr.mxu0 0.0
  %122 = vmatpush1.msra.mxu0 0.0
  %123 = vmatprep.subr.mxu0 0.0
  %124 = vmatpush1.msra.mxu0 0.0
  %125 = vmatprep.subr.mxu0 0.0
  %126 = vmatpush1.msra.mxu0 0.0
  %127 = vmatprep.subr.mxu0 0.0
  %128 = vmatpush1.msra.mxu0 0.0
  %129 = vmatprep.subr.mxu0 0.0
  %130 = vmatpush1.msra.mxu0 0.0
  %131 = vmatprep.subr.mxu0 0.0
  %132 = vmatpush1.msra.mxu0 0.0
  %133 = vmatprep.subr.mxu0 0.0
  %134 = vmatpush1.msra.mxu0 0.0
  %135 = vmatprep.subr.mxu0 0.0
  %136 = vmatpush1.msra.mxu0 0.0
  %137 = vmatprep.subr.mxu0 0.0
  %138 = vmatpush1.msra.mxu0 0.0
  %139 = vmatprep.subr.mxu0 0.0
  %140 = vmatpush1.msra.mxu0 0.0
  %141 = vmatprep.subr.mxu0 0.0
  %142 = vmatpush1.msra.mxu0 0.0
  %143 = vmatprep.subr.mxu0 0.0
  %144 = vmatpush1.msra.mxu0 0.0
  %145 = vmatprep.subr.mxu0 0.0
  %146 = vmatpush1.msra.mxu0 0.0
  %147 = vmatprep.subr.mxu0 0.0
  %148 = vmatpush1.msra.mxu0 0.0
  %149 = vmatprep.subr.mxu0 0.0
  %150 = vmatpush1.msra.mxu0 0.0
  %151 = vmatprep.subr.mxu0 0.0
  %152 = vmatpush1.msra.mxu0 0.0
  %153 = vmatprep.subr.mxu0 0.0
  %154 = vmatpush1.msra.mxu0 0.0
  %155 = vmatprep.subr.mxu0 0.0
  %156 = vmatpush1.msra.mxu0 0.0
  %157 = vmatprep.mubr.f32.mxu0 0.0
  %158 = vmatmul.mubr.f32.gmra.mrb[0].mxu0 %v46
  %v159 = vpop.f32.mrb[0].mxu0
  %v160 = vadd.f32 0.0, %v159
  %v161 = vpop.f32.mrb[0].mxu0
  %162 = vmatprep.mubr.f32.mxu0 0.0
  %163 = vmatmul.mubr.f32.gmra.mrb[0].mxu0 %v49
  %v164 = vpop.f32.mrb[0].mxu0
  %v165 = vadd.f32 0.0, %v164
  %v166 = vpop.f32.mrb[0].mxu0
  %167 = vmatprep.mubr.f32.mxu0 0.0
  %168 = vmatmul.mubr.f32.gmra.mrb[0].mxu0 %v52
  %v169 = vpop.f32.mrb[0].mxu0
  %v170 = vadd.f32 0.0, %v169
  %v171 = vpop.f32.mrb[0].mxu0
  %172 = vmatprep.mubr.f32.mxu0 0.0
  %173 = vmatmul.mubr.f32.gmra.mrb[0].mxu0 %v55
  %v174 = vpop.f32.mrb[0].mxu0
  %v175 = vadd.f32 0.0, %v174
  %v176 = vpop.f32.mrb[0].mxu0
  %177 = vmatprep.mubr.f32.mxu0 0.0
  %178 = vmatmul.mubr.f32.gmra.mrb[0].mxu0 %v58
  %v179 = vpop.f32.mrb[0].mxu0
  %v180 = vadd.f32 0.0, %v179
  %v181 = vpop.f32.mrb[0].mxu0
  %182 = vmatprep.mubr.f32.mxu0 0.0
  %183 = vmatmul.mubr.f32.gmra.mrb[0].mxu0 %v61
  %v184 = vpop.f32.mrb[0].mxu0
  %v185 = vadd.f32 0.0, %v184
  %v186 = vpop.f32.mrb[0].mxu0
  %187 = vmatprep.mubr.f32.mxu0 0.0
  %188 = vmatmul.mubr.f32.gmra.mrb[0].mxu0 %v64
  %v189 = vpop.f32.mrb[0].mxu0
  %v190 = vadd.f32 0.0, %v189
  %v191 = vpop.f32.mrb[0].mxu0
  %192 = vmatprep.mubr.f32.mxu0 0.0
  %193 = vmatmul.mubr.f32.gmra.mrb[0].mxu0 %v67
  %v194 = vpop.f32.mrb[0].mxu0
  %v195 = vadd.f32 0.0, %v194
  %v196 = vpop.f32.mrb[0].mxu0
  %197 = vmatprep.mubr.f32.mxu0 0.0
  %198 = vmatmul.mubr.f32.gmra.mrb[0].mxu0 %v70
  %v199 = vpop.f32.mrb[0].mxu0
  %v200 = vadd.f32 0.0, %v199
  %v201 = vpop.f32.mrb[0].mxu0
  %202 = vmatprep.mubr.f32.mxu0 0.0
  %203 = vmatmul.mubr.f32.gmra.mrb[0].mxu0 %v73
  %v204 = vpop.f32.mrb[0].mxu0
  %v205 = vadd.f32 0.0, %v204
  %v206 = vpop.f32.mrb[0].mxu0
  %207 = vmatprep.mubr.f32.mxu0 0.0
  %208 = vmatmul.mubr.f32.gmra.mrb[0].mxu0 %v76
  %v209 = vpop.f32.mrb[0].mxu0
  %v210 = vadd.f32 0.0, %v209
  %v211 = vpop.f32.mrb[0].mxu0
  %212 = vmatprep.mubr.f32.mxu0 0.0
  %213 = vmatmul.mubr.f32.gmra.mrb[0].mxu0 %v79
  %v214 = vpop.f32.mrb[0].mxu0
  %v215 = vadd.f32 0.0, %v214
  %v216 = vpop.f32.mrb[0].mxu0
  %217 = vmatprep.mubr.f32.mxu0 0.0
  %218 = vmatmul.mubr.f32.gmra.mrb[0].mxu0 %v82
  %v219 = vpop.f32.mrb[0].mxu0
  %v220 = vadd.f32 0.0, %v219
  %v221 = vpop.f32.mrb[0].mxu0
  %222 = vmatprep.mubr.f32.mxu0 0.0
  %223 = vmatmul.mubr.f32.gmra.mrb[0].mxu0 %v85
  %v224 = vpop.f32.mrb[0].mxu0
  %v225 = vadd.f32 0.0, %v224
  %v226 = vpop.f32.mrb[0].mxu0
  %227 = vmatprep.mubr.f32.mxu0 0.0
  %228 = vmatmul.mubr.f32.gmra.mrb[0].mxu0 %v88
  %v229 = vpop.f32.mrb[0].mxu0
  %v230 = vadd.f32 0.0, %v229
  %v231 = vpop.f32.mrb[0].mxu0
  %232 = vmatprep.mubr.f32.mxu0 0.0
  %233 = vmatmul.mubr.f32.gmra.mrb[0].mxu0 %v91
  %v234 = vpop.f32.mrb[0].mxu0
  %v235 = vadd.f32 0.0, %v234
  %v236 = vpop.f32.mrb[0].mxu0
  %237 = vdwg.mxu0
  %v238 = vld [vmem:[%s2] sm:$0x1]
  %v240 = vlaneseq
  %v241 = vshrl.u32 %v240, 7
  %v242 = vsub.s32 0, %v241
  %v243 = vrot.slane %v238, %v242
  %v245 = vadd.f32 %v160, %v243
  %v246 = vadd.f32 %v165, %v243
  %v247 = vadd.f32 %v170, %v243
  %v248 = vadd.f32 %v175, %v243
  %v249 = vadd.f32 %v180, %v243
  %v250 = vadd.f32 %v185, %v243
  %v251 = vadd.f32 %v190, %v243
  %v252 = vadd.f32 %v195, %v243
  %v253 = vadd.f32 %v200, %v243
  %v254 = vadd.f32 %v205, %v243
  %v255 = vadd.f32 %v210, %v243
  %v256 = vadd.f32 %v215, %v243
  %v257 = vadd.f32 %v220, %v243
  %v258 = vadd.f32 %v225, %v243
  %v259 = vadd.f32 %v230, %v243
  %v260 = vadd.f32 %v235, %v243
  %v261 = vmax.f32 %v245, 0.0
  %v262 = vmax.f32 %v246, 0.0
  %v263 = vmax.f32 %v247, 0.0
  %v264 = vmax.f32 %v248, 0.0
  %v265 = vmax.f32 %v249, 0.0
  %v266 = vmax.f32 %v250, 0.0
  %v267 = vmax.f32 %v251, 0.0
  %v268 = vmax.f32 %v252, 0.0
  %v269 = vmax.f32 %v253, 0.0
  %v270 = vmax.f32 %v254, 0.0
  %v271 = vmax.f32 %v255, 0.0
  %v272 = vmax.f32 %v256, 0.0
  %v273 = vmax.f32 %v257, 0.0
  %v274 = vmax.f32 %v258, 0.0
  %v275 = vmax.f32 %v259, 0.0
  %v276 = vmax.f32 %v260, 0.0
  %v277 = vld [vmem:[%s3] sm:$0xf]
  %v278 = vld [vmem:[%s4] sm:$0x1]
  %v280 = vlaneseq
  %v281 = vshrl.u32 %v280, 7
  %v282 = vsub.s32 0, %v281
  %v283 = vrot.slane %v278, %v282
  %vm285 = vcmask 31744
  %v287 = vsel %vm285, %v261, 0
  %v290 = vsel %vm285, %v262, 0
  %v293 = vsel %vm285, %v263, 0
  %v296 = vsel %vm285, %v264, 0
  %v299 = vsel %vm285, %v265, 0
  %v302 = vsel %vm285, %v266, 0
  %v305 = vsel %vm285, %v267, 0
  %v308 = vsel %vm285, %v268, 0
  %v311 = vsel %vm285, %v269, 0
  %v314 = vsel %vm285, %v270, 0
  %v317 = vsel %vm285, %v271, 0
  %v320 = vsel %vm285, %v272, 0
  %v323 = vsel %vm285, %v273, 0
  %v326 = vsel %vm285, %v274, 0
  %v329 = vsel %vm285, %v275, 0
  %v332 = vsel %vm285, %v276, 0
  %vm334 = vcmask 1043456
  %v336 = vsel %vm334, %v277, 0
  %338 = vmatprep.subr.mxu0 0.0
  %339 = vmatpush1.msra.mxu0 %v336
  %340 = vmatprep.subr.mxu0 0.0
  %341 = vmatpush1.msra.mxu0 0.0
  %342 = vmatprep.subr.mxu0 0.0
  %343 = vmatpush1.msra.mxu0 0.0
  %344 = vmatprep.subr.mxu0 0.0
  %345 = vmatpush1.msra.mxu0 0.0
  %346 = vmatprep.subr.mxu0 0.0
  %347 = vmatpush1.msra.mxu0 0.0
  %348 = vmatprep.subr.mxu0 0.0
  %349 = vmatpush1.msra.mxu0 0.0
  %350 = vmatprep.subr.mxu0 0.0
  %351 = vmatpush1.msra.mxu0 0.0
  %352 = vmatprep.subr.mxu0 0.0
  %353 = vmatpush1.msra.mxu0 0.0
  %354 = vmatprep.subr.mxu0 0.0
  %355 = vmatpush1.msra.mxu0 0.0
  %356 = vmatprep.subr.mxu0 0.0
  %357 = vmatpush1.msra.mxu0 0.0
  %358 = vmatprep.subr.mxu0 0.0
  %359 = vmatpush1.msra.mxu0 0.0
  %360 = vmatprep.subr.mxu0 0.0
  %361 = vmatpush1.msra.mxu0 0.0
  %362 = vmatprep.subr.mxu0 0.0
  %363 = vmatpush1.msra.mxu0 0.0
  %364 = vmatprep.subr.mxu0 0.0
  %365 = vmatpush1.msra.mxu0 0.0
  %366 = vmatprep.subr.mxu0 0.0
  %367 = vmatpush1.msra.mxu0 0.0
  %368 = vmatprep.subr.mxu0 0.0
  %369 = vmatpush1.msra.mxu0 0.0
  %370 = vmatprep.subr.mxu0 0.0
  %371 = vmatpush1.msra.mxu0 0.0
  %372 = vmatprep.subr.mxu0 0.0
  %373 = vmatpush1.msra.mxu0 0.0
  %374 = vmatprep.subr.mxu0 0.0
  %375 = vmatpush1.msra.mxu0 0.0
  %376 = vmatprep.subr.mxu0 0.0
  %377 = vmatpush1.msra.mxu0 0.0
  %378 = vmatprep.subr.mxu0 0.0
  %379 = vmatpush1.msra.mxu0 0.0
  %380 = vmatprep.subr.mxu0 0.0
  %381 = vmatpush1.msra.mxu0 0.0
  %382 = vmatprep.subr.mxu0 0.0
  %383 = vmatpush1.msra.mxu0 0.0
  %384 = vmatprep.subr.mxu0 0.0
  %385 = vmatpush1.msra.mxu0 0.0
  %386 = vmatprep.subr.mxu0 0.0
  %387 = vmatpush1.msra.mxu0 0.0
  %388 = vmatprep.subr.mxu0 0.0
  %389 = vmatpush1.msra.mxu0 0.0
  %390 = vmatprep.subr.mxu0 0.0
  %391 = vmatpush1.msra.mxu0 0.0
  %392 = vmatprep.subr.mxu0 0.0
  %393 = vmatpush1.msra.mxu0 0.0
  %394 = vmatprep.subr.mxu0 0.0
  %395 = vmatpush1.msra.mxu0 0.0
  %396 = vmatprep.subr.mxu0 0.0
  %397 = vmatpush1.msra.mxu0 0.0
  %398 = vmatprep.subr.mxu0 0.0
  %399 = vmatpush1.msra.mxu0 0.0
  %400 = vmatprep.subr.mxu0 0.0
  %401 = vmatpush1.msra.mxu0 0.0
  %402 = vmatprep.mubr.f32.mxu0 0.0
  %403 = vmatmul.mubr.f32.gmra.mrb[0].mxu0 %v287
  %v404 = vpop.f32.mrb[0].mxu0
  %v405 = vadd.f32 %v283, %v404
  %v406 = vpop.f32.mrb[0].mxu0
  %407 = vmatprep.mubr.f32.mxu0 0.0
  %408 = vmatmul.mubr.f32.gmra.mrb[0].mxu0 %v290
  %v409 = vpop.f32.mrb[0].mxu0
  %v410 = vadd.f32 %v283, %v409
  %v411 = vpop.f32.mrb[0].mxu0
  %412 = vmatprep.mubr.f32.mxu0 0.0
  %413 = vmatmul.mubr.f32.gmra.mrb[0].mxu0 %v293
  %v414 = vpop.f32.mrb[0].mxu0
  %v415 = vadd.f32 %v283, %v414
  %v416 = vpop.f32.mrb[0].mxu0
  %417 = vmatprep.mubr.f32.mxu0 0.0
  %418 = vmatmul.mubr.f32.gmra.mrb[0].mxu0 %v296
  %v419 = vpop.f32.mrb[0].mxu0
  %v420 = vadd.f32 %v283, %v419
  %v421 = vpop.f32.mrb[0].mxu0
  %422 = vmatprep.mubr.f32.mxu0 0.0
  %423 = vmatmul.mubr.f32.gmra.mrb[0].mxu0 %v299
  %v424 = vpop.f32.mrb[0].mxu0
  %v425 = vadd.f32 %v283, %v424
  %v426 = vpop.f32.mrb[0].mxu0
  %427 = vmatprep.mubr.f32.mxu0 0.0
  %428 = vmatmul.mubr.f32.gmra.mrb[0].mxu0 %v302
  %v429 = vpop.f32.mrb[0].mxu0
  %v430 = vadd.f32 %v283, %v429
  %v431 = vpop.f32.mrb[0].mxu0
  %432 = vmatprep.mubr.f32.mxu0 0.0
  %433 = vmatmul.mubr.f32.gmra.mrb[0].mxu0 %v305
  %v434 = vpop.f32.mrb[0].mxu0
  %v435 = vadd.f32 %v283, %v434
  %v436 = vpop.f32.mrb[0].mxu0
  %437 = vmatprep.mubr.f32.mxu0 0.0
  %438 = vmatmul.mubr.f32.gmra.mrb[0].mxu0 %v308
  %v439 = vpop.f32.mrb[0].mxu0
  %v440 = vadd.f32 %v283, %v439
  %v441 = vpop.f32.mrb[0].mxu0
  %442 = vmatprep.mubr.f32.mxu0 0.0
  %443 = vmatmul.mubr.f32.gmra.mrb[0].mxu0 %v311
  %v444 = vpop.f32.mrb[0].mxu0
  %v445 = vadd.f32 %v283, %v444
  %v446 = vpop.f32.mrb[0].mxu0
  %447 = vmatprep.mubr.f32.mxu0 0.0
  %448 = vmatmul.mubr.f32.gmra.mrb[0].mxu0 %v314
  %v449 = vpop.f32.mrb[0].mxu0
  %v450 = vadd.f32 %v283, %v449
  %v451 = vpop.f32.mrb[0].mxu0
  %452 = vmatprep.mubr.f32.mxu0 0.0
  %453 = vmatmul.mubr.f32.gmra.mrb[0].mxu0 %v317
  %v454 = vpop.f32.mrb[0].mxu0
  %v455 = vadd.f32 %v283, %v454
  %v456 = vpop.f32.mrb[0].mxu0
  %457 = vmatprep.mubr.f32.mxu0 0.0
  %458 = vmatmul.mubr.f32.gmra.mrb[0].mxu0 %v320
  %v459 = vpop.f32.mrb[0].mxu0
  %v460 = vadd.f32 %v283, %v459
  %v461 = vpop.f32.mrb[0].mxu0
  %462 = vmatprep.mubr.f32.mxu0 0.0
  %463 = vmatmul.mubr.f32.gmra.mrb[0].mxu0 %v323
  %v464 = vpop.f32.mrb[0].mxu0
  %v465 = vadd.f32 %v283, %v464
  %v466 = vpop.f32.mrb[0].mxu0
  %467 = vmatprep.mubr.f32.mxu0 0.0
  %468 = vmatmul.mubr.f32.gmra.mrb[0].mxu0 %v326
  %v469 = vpop.f32.mrb[0].mxu0
  %v470 = vadd.f32 %v283, %v469
  %v471 = vpop.f32.mrb[0].mxu0
  %472 = vmatprep.mubr.f32.mxu0 0.0
  %473 = vmatmul.mubr.f32.gmra.mrb[0].mxu0 %v329
  %v474 = vpop.f32.mrb[0].mxu0
  %v475 = vadd.f32 %v283, %v474
  %v476 = vpop.f32.mrb[0].mxu0
  %477 = vmatprep.mubr.f32.mxu0 0.0
  %478 = vmatmul.mubr.f32.gmra.mrb[0].mxu0 %v332
  %v479 = vpop.f32.mrb[0].mxu0
  %v480 = vadd.f32 %v283, %v479
  %v481 = vpop.f32.mrb[0].mxu0
  %482 = vdwg.mxu0
  %v483 = vmax.f32 %v405, 0.0
  %v484 = vmax.f32 %v410, 0.0
  %v485 = vmax.f32 %v415, 0.0
  %v486 = vmax.f32 %v420, 0.0
  %v487 = vmax.f32 %v425, 0.0
  %v488 = vmax.f32 %v430, 0.0
  %v489 = vmax.f32 %v435, 0.0
  %v490 = vmax.f32 %v440, 0.0
  %v491 = vmax.f32 %v445, 0.0
  %v492 = vmax.f32 %v450, 0.0
  %v493 = vmax.f32 %v455, 0.0
  %v494 = vmax.f32 %v460, 0.0
  %v495 = vmax.f32 %v465, 0.0
  %v496 = vmax.f32 %v470, 0.0
  %v497 = vmax.f32 %v475, 0.0
  %v498 = vmax.f32 %v480, 0.0
  %v499 = vld [vmem:[%s5] sm:$0xf]
  %v501 = vsel %vm285, %v483, 0
  %v504 = vsel %vm285, %v484, 0
  %v507 = vsel %vm285, %v485, 0
  %v510 = vsel %vm285, %v486, 0
  %v513 = vsel %vm285, %v487, 0
  %v516 = vsel %vm285, %v488, 0
  %v519 = vsel %vm285, %v489, 0
  %v522 = vsel %vm285, %v490, 0
  %v525 = vsel %vm285, %v491, 0
  %v528 = vsel %vm285, %v492, 0
  %v531 = vsel %vm285, %v493, 0
  %v534 = vsel %vm285, %v494, 0
  %v537 = vsel %vm285, %v495, 0
  %v540 = vsel %vm285, %v496, 0
  %v543 = vsel %vm285, %v497, 0
  %v546 = vsel %vm285, %v498, 0
  %v549 = vsel %vm334, %v499, 0
  %551 = vmatprep.subr.mxu0 0.0
  %552 = vmatpush1.msra.mxu0 %v549
  %553 = vmatprep.subr.mxu0 0.0
  %554 = vmatpush1.msra.mxu0 0.0
  %555 = vmatprep.subr.mxu0 0.0
  %556 = vmatpush1.msra.mxu0 0.0
  %557 = vmatprep.subr.mxu0 0.0
  %558 = vmatpush1.msra.mxu0 0.0
  %559 = vmatprep.subr.mxu0 0.0
  %560 = vmatpush1.msra.mxu0 0.0
  %561 = vmatprep.subr.mxu0 0.0
  %562 = vmatpush1.msra.mxu0 0.0
  %563 = vmatprep.subr.mxu0 0.0
  %564 = vmatpush1.msra.mxu0 0.0
  %565 = vmatprep.subr.mxu0 0.0
  %566 = vmatpush1.msra.mxu0 0.0
  %567 = vmatprep.subr.mxu0 0.0
  %568 = vmatpush1.msra.mxu0 0.0
  %569 = vmatprep.subr.mxu0 0.0
  %570 = vmatpush1.msra.mxu0 0.0
  %571 = vmatprep.subr.mxu0 0.0
  %572 = vmatpush1.msra.mxu0 0.0
  %573 = vmatprep.subr.mxu0 0.0
  %574 = vmatpush1.msra.mxu0 0.0
  %575 = vmatprep.subr.mxu0 0.0
  %576 = vmatpush1.msra.mxu0 0.0
  %577 = vmatprep.subr.mxu0 0.0
  %578 = vmatpush1.msra.mxu0 0.0
  %579 = vmatprep.subr.mxu0 0.0
  %580 = vmatpush1.msra.mxu0 0.0
  %581 = vmatprep.subr.mxu0 0.0
  %582 = vmatpush1.msra.mxu0 0.0
  %583 = vmatprep.subr.mxu0 0.0
  %584 = vmatpush1.msra.mxu0 0.0
  %585 = vmatprep.subr.mxu0 0.0
  %586 = vmatpush1.msra.mxu0 0.0
  %587 = vmatprep.subr.mxu0 0.0
  %588 = vmatpush1.msra.mxu0 0.0
  %589 = vmatprep.subr.mxu0 0.0
  %590 = vmatpush1.msra.mxu0 0.0
  %591 = vmatprep.subr.mxu0 0.0
  %592 = vmatpush1.msra.mxu0 0.0
  %593 = vmatprep.subr.mxu0 0.0
  %594 = vmatpush1.msra.mxu0 0.0
  %595 = vmatprep.subr.mxu0 0.0
  %596 = vmatpush1.msra.mxu0 0.0
  %597 = vmatprep.subr.mxu0 0.0
  %598 = vmatpush1.msra.mxu0 0.0
  %599 = vmatprep.subr.mxu0 0.0
  %600 = vmatpush1.msra.mxu0 0.0
  %601 = vmatprep.subr.mxu0 0.0
  %602 = vmatpush1.msra.mxu0 0.0
  %603 = vmatprep.subr.mxu0 0.0
  %604 = vmatpush1.msra.mxu0 0.0
  %605 = vmatprep.subr.mxu0 0.0
  %606 = vmatpush1.msra.mxu0 0.0
  %607 = vmatprep.subr.mxu0 0.0
  %608 = vmatpush1.msra.mxu0 0.0
  %609 = vmatprep.subr.mxu0 0.0
  %610 = vmatpush1.msra.mxu0 0.0
  %611 = vmatprep.subr.mxu0 0.0
  %612 = vmatpush1.msra.mxu0 0.0
  %613 = vmatprep.subr.mxu0 0.0
  %614 = vmatpush1.msra.mxu0 0.0
  %615 = vmatprep.mubr.f32.mxu0 0.0
  %616 = vmatmul.mubr.f32.gmra.mrb[0].mxu0 %v501
  %v617 = vpop.f32.mrb[0].mxu0
  %v618 = vadd.f32 0.0, %v617
  %v619 = vpop.f32.mrb[0].mxu0
  %620 = vmatprep.mubr.f32.mxu0 0.0
  %621 = vmatmul.mubr.f32.gmra.mrb[0].mxu0 %v504
  %v622 = vpop.f32.mrb[0].mxu0
  %v623 = vadd.f32 0.0, %v622
  %v624 = vpop.f32.mrb[0].mxu0
  %625 = vmatprep.mubr.f32.mxu0 0.0
  %626 = vmatmul.mubr.f32.gmra.mrb[0].mxu0 %v507
  %v627 = vpop.f32.mrb[0].mxu0
  %v628 = vadd.f32 0.0, %v627
  %v629 = vpop.f32.mrb[0].mxu0
  %630 = vmatprep.mubr.f32.mxu0 0.0
  %631 = vmatmul.mubr.f32.gmra.mrb[0].mxu0 %v510
  %v632 = vpop.f32.mrb[0].mxu0
  %v633 = vadd.f32 0.0, %v632
  %v634 = vpop.f32.mrb[0].mxu0
  %635 = vmatprep.mubr.f32.mxu0 0.0
  %636 = vmatmul.mubr.f32.gmra.mrb[0].mxu0 %v513
  %v637 = vpop.f32.mrb[0].mxu0
  %v638 = vadd.f32 0.0, %v637
  %v639 = vpop.f32.mrb[0].mxu0
  %640 = vmatprep.mubr.f32.mxu0 0.0
  %641 = vmatmul.mubr.f32.gmra.mrb[0].mxu0 %v516
  %v642 = vpop.f32.mrb[0].mxu0
  %v643 = vadd.f32 0.0, %v642
  %v644 = vpop.f32.mrb[0].mxu0
  %645 = vmatprep.mubr.f32.mxu0 0.0
  %646 = vmatmul.mubr.f32.gmra.mrb[0].mxu0 %v519
  %v647 = vpop.f32.mrb[0].mxu0
  %v648 = vadd.f32 0.0, %v647
  %v649 = vpop.f32.mrb[0].mxu0
  %650 = vmatprep.mubr.f32.mxu0 0.0
  %651 = vmatmul.mubr.f32.gmra.mrb[0].mxu0 %v522
  %v652 = vpop.f32.mrb[0].mxu0
  %v653 = vadd.f32 0.0, %v652
  %v654 = vpop.f32.mrb[0].mxu0
  %655 = vmatprep.mubr.f32.mxu0 0.0
  %656 = vmatmul.mubr.f32.gmra.mrb[0].mxu0 %v525
  %v657 = vpop.f32.mrb[0].mxu0
  %v658 = vadd.f32 0.0, %v657
  %v659 = vpop.f32.mrb[0].mxu0
  %660 = vmatprep.mubr.f32.mxu0 0.0
  %661 = vmatmul.mubr.f32.gmra.mrb[0].mxu0 %v528
  %v662 = vpop.f32.mrb[0].mxu0
  %v663 = vadd.f32 0.0, %v662
  %v664 = vpop.f32.mrb[0].mxu0
  %665 = vmatprep.mubr.f32.mxu0 0.0
  %666 = vmatmul.mubr.f32.gmra.mrb[0].mxu0 %v531
  %v667 = vpop.f32.mrb[0].mxu0
  %v668 = vadd.f32 0.0, %v667
  %v669 = vpop.f32.mrb[0].mxu0
  %670 = vmatprep.mubr.f32.mxu0 0.0
  %671 = vmatmul.mubr.f32.gmra.mrb[0].mxu0 %v534
  %v672 = vpop.f32.mrb[0].mxu0
  %v673 = vadd.f32 0.0, %v672
  %v674 = vpop.f32.mrb[0].mxu0
  %675 = vmatprep.mubr.f32.mxu0 0.0
  %676 = vmatmul.mubr.f32.gmra.mrb[0].mxu0 %v537
  %v677 = vpop.f32.mrb[0].mxu0
  %v678 = vadd.f32 0.0, %v677
  %v679 = vpop.f32.mrb[0].mxu0
  %680 = vmatprep.mubr.f32.mxu0 0.0
  %681 = vmatmul.mubr.f32.gmra.mrb[0].mxu0 %v540
  %v682 = vpop.f32.mrb[0].mxu0
  %v683 = vadd.f32 0.0, %v682
  %v684 = vpop.f32.mrb[0].mxu0
  %685 = vmatprep.mubr.f32.mxu0 0.0
  %686 = vmatmul.mubr.f32.gmra.mrb[0].mxu0 %v543
  %v687 = vpop.f32.mrb[0].mxu0
  %v688 = vadd.f32 0.0, %v687
  %v689 = vpop.f32.mrb[0].mxu0
  %690 = vmatprep.mubr.f32.mxu0 0.0
  %691 = vmatmul.mubr.f32.gmra.mrb[0].mxu0 %v546
  %v692 = vpop.f32.mrb[0].mxu0
  %v693 = vadd.f32 0.0, %v692
  %v694 = vpop.f32.mrb[0].mxu0
  %695 = vdwg.mxu0
  %696 = vrot.lane.b32.xlu0 %v483, 124
  %v697 = vpop.permute.xlu0 %696
  %698 = vrot.lane.b32.xlu0 %v484, 124
  %v699 = vpop.permute.xlu0 %698
  %700 = vrot.lane.b32.xlu0 %v485, 124
  %v701 = vpop.permute.xlu0 %700
  %702 = vrot.lane.b32.xlu0 %v486, 124
  %v703 = vpop.permute.xlu0 %702
  %704 = vrot.lane.b32.xlu0 %v487, 124
  %v705 = vpop.permute.xlu0 %704
  %706 = vrot.lane.b32.xlu0 %v488, 124
  %v707 = vpop.permute.xlu0 %706
  %708 = vrot.lane.b32.xlu0 %v489, 124
  %v709 = vpop.permute.xlu0 %708
  %710 = vrot.lane.b32.xlu0 %v490, 124
  %v711 = vpop.permute.xlu0 %710
  %712 = vrot.lane.b32.xlu0 %v491, 124
  %v713 = vpop.permute.xlu0 %712
  %714 = vrot.lane.b32.xlu0 %v492, 124
  %v715 = vpop.permute.xlu0 %714
  %716 = vrot.lane.b32.xlu0 %v493, 124
  %v717 = vpop.permute.xlu0 %716
  %718 = vrot.lane.b32.xlu0 %v494, 124
  %v719 = vpop.permute.xlu0 %718
  %720 = vrot.lane.b32.xlu0 %v495, 124
  %v721 = vpop.permute.xlu0 %720
  %722 = vrot.lane.b32.xlu0 %v496, 124
  %v723 = vpop.permute.xlu0 %722
  %724 = vrot.lane.b32.xlu0 %v497, 124
  %v725 = vpop.permute.xlu0 %724
  %726 = vrot.lane.b32.xlu0 %v498, 124
  %v727 = vpop.permute.xlu0 %726
  %v728 = vsel %vm285, %v697, 0
  %v730 = vsel %vm285, %v699, 0
  %v732 = vsel %vm285, %v701, 0
  %v734 = vsel %vm285, %v703, 0
  %v736 = vsel %vm285, %v705, 0
  %v738 = vsel %vm285, %v707, 0
  %v740 = vsel %vm285, %v709, 0
  %v742 = vsel %vm285, %v711, 0
  %v744 = vsel %vm285, %v713, 0
  %v746 = vsel %vm285, %v715, 0
  %v748 = vsel %vm285, %v717, 0
  %v750 = vsel %vm285, %v719, 0
  %v752 = vsel %vm285, %v721, 0
  %v754 = vsel %vm285, %v723, 0
  %v756 = vsel %vm285, %v725, 0
  %v758 = vsel %vm285, %v727, 0
  %760 = vmatprep.subr.mxu0 0.0
  %761 = vmatpush1.msra.mxu0 %v549
  %762 = vmatprep.subr.mxu0 0.0
  %763 = vmatpush1.msra.mxu0 0.0
  %764 = vmatprep.subr.mxu0 0.0
  %765 = vmatpush1.msra.mxu0 0.0
  %766 = vmatprep.subr.mxu0 0.0
  %767 = vmatpush1.msra.mxu0 0.0
  %768 = vmatprep.subr.mxu0 0.0
  %769 = vmatpush1.msra.mxu0 0.0
  %770 = vmatprep.subr.mxu0 0.0
  %771 = vmatpush1.msra.mxu0 0.0
  %772 = vmatprep.subr.mxu0 0.0
  %773 = vmatpush1.msra.mxu0 0.0
  %774 = vmatprep.subr.mxu0 0.0
  %775 = vmatpush1.msra.mxu0 0.0
  %776 = vmatprep.subr.mxu0 0.0
  %777 = vmatpush1.msra.mxu0 0.0
  %778 = vmatprep.subr.mxu0 0.0
  %779 = vmatpush1.msra.mxu0 0.0
  %780 = vmatprep.subr.mxu0 0.0
  %781 = vmatpush1.msra.mxu0 0.0
  %782 = vmatprep.subr.mxu0 0.0
  %783 = vmatpush1.msra.mxu0 0.0
  %784 = vmatprep.subr.mxu0 0.0
  %785 = vmatpush1.msra.mxu0 0.0
  %786 = vmatprep.subr.mxu0 0.0
  %787 = vmatpush1.msra.mxu0 0.0
  %788 = vmatprep.subr.mxu0 0.0
  %789 = vmatpush1.msra.mxu0 0.0
  %790 = vmatprep.subr.mxu0 0.0
  %791 = vmatpush1.msra.mxu0 0.0
  %792 = vmatprep.subr.mxu0 0.0
  %793 = vmatpush1.msra.mxu0 0.0
  %794 = vmatprep.subr.mxu0 0.0
  %795 = vmatpush1.msra.mxu0 0.0
  %796 = vmatprep.subr.mxu0 0.0
  %797 = vmatpush1.msra.mxu0 0.0
  %798 = vmatprep.subr.mxu0 0.0
  %799 = vmatpush1.msra.mxu0 0.0
  %800 = vmatprep.subr.mxu0 0.0
  %801 = vmatpush1.msra.mxu0 0.0
  %802 = vmatprep.subr.mxu0 0.0
  %803 = vmatpush1.msra.mxu0 0.0
  %804 = vmatprep.subr.mxu0 0.0
  %805 = vmatpush1.msra.mxu0 0.0
  %806 = vmatprep.subr.mxu0 0.0
  %807 = vmatpush1.msra.mxu0 0.0
  %808 = vmatprep.subr.mxu0 0.0
  %809 = vmatpush1.msra.mxu0 0.0
  %810 = vmatprep.subr.mxu0 0.0
  %811 = vmatpush1.msra.mxu0 0.0
  %812 = vmatprep.subr.mxu0 0.0
  %813 = vmatpush1.msra.mxu0 0.0
  %814 = vmatprep.subr.mxu0 0.0
  %815 = vmatpush1.msra.mxu0 0.0
  %816 = vmatprep.subr.mxu0 0.0
  %817 = vmatpush1.msra.mxu0 0.0
  %818 = vmatprep.subr.mxu0 0.0
  %819 = vmatpush1.msra.mxu0 0.0
  %820 = vmatprep.subr.mxu0 0.0
  %821 = vmatpush1.msra.mxu0 0.0
  %822 = vmatprep.subr.mxu0 0.0
  %823 = vmatpush1.msra.mxu0 0.0
  %824 = vmatprep.mubr.f32.mxu0 0.0
  %825 = vmatmul.mubr.f32.gmra.mrb[0].mxu0 %v728
  %v826 = vpop.f32.mrb[0].mxu0
  %v827 = vadd.f32 0.0, %v826
  %v828 = vpop.f32.mrb[0].mxu0
  %829 = vmatprep.mubr.f32.mxu0 0.0
  %830 = vmatmul.mubr.f32.gmra.mrb[0].mxu0 %v730
  %v831 = vpop.f32.mrb[0].mxu0
  %v832 = vadd.f32 0.0, %v831
  %v833 = vpop.f32.mrb[0].mxu0
  %834 = vmatprep.mubr.f32.mxu0 0.0
  %835 = vmatmul.mubr.f32.gmra.mrb[0].mxu0 %v732
  %v836 = vpop.f32.mrb[0].mxu0
  %v837 = vadd.f32 0.0, %v836
  %v838 = vpop.f32.mrb[0].mxu0
  %839 = vmatprep.mubr.f32.mxu0 0.0
  %840 = vmatmul.mubr.f32.gmra.mrb[0].mxu0 %v734
  %v841 = vpop.f32.mrb[0].mxu0
  %v842 = vadd.f32 0.0, %v841
  %v843 = vpop.f32.mrb[0].mxu0
  %844 = vmatprep.mubr.f32.mxu0 0.0
  %845 = vmatmul.mubr.f32.gmra.mrb[0].mxu0 %v736
  %v846 = vpop.f32.mrb[0].mxu0
  %v847 = vadd.f32 0.0, %v846
  %v848 = vpop.f32.mrb[0].mxu0
  %849 = vmatprep.mubr.f32.mxu0 0.0
  %850 = vmatmul.mubr.f32.gmra.mrb[0].mxu0 %v738
  %v851 = vpop.f32.mrb[0].mxu0
  %v852 = vadd.f32 0.0, %v851
  %v853 = vpop.f32.mrb[0].mxu0
  %854 = vmatprep.mubr.f32.mxu0 0.0
  %855 = vmatmul.mubr.f32.gmra.mrb[0].mxu0 %v740
  %v856 = vpop.f32.mrb[0].mxu0
  %v857 = vadd.f32 0.0, %v856
  %v858 = vpop.f32.mrb[0].mxu0
  %859 = vmatprep.mubr.f32.mxu0 0.0
  %860 = vmatmul.mubr.f32.gmra.mrb[0].mxu0 %v742
  %v861 = vpop.f32.mrb[0].mxu0
  %v862 = vadd.f32 0.0, %v861
  %v863 = vpop.f32.mrb[0].mxu0
  %864 = vmatprep.mubr.f32.mxu0 0.0
  %865 = vmatmul.mubr.f32.gmra.mrb[0].mxu0 %v744
  %v866 = vpop.f32.mrb[0].mxu0
  %v867 = vadd.f32 0.0, %v866
  %v868 = vpop.f32.mrb[0].mxu0
  %869 = vmatprep.mubr.f32.mxu0 0.0
  %870 = vmatmul.mubr.f32.gmra.mrb[0].mxu0 %v746
  %v871 = vpop.f32.mrb[0].mxu0
  %v872 = vadd.f32 0.0, %v871
  %v873 = vpop.f32.mrb[0].mxu0
  %874 = vmatprep.mubr.f32.mxu0 0.0
  %875 = vmatmul.mubr.f32.gmra.mrb[0].mxu0 %v748
  %v876 = vpop.f32.mrb[0].mxu0
  %v877 = vadd.f32 0.0, %v876
  %v878 = vpop.f32.mrb[0].mxu0
  %879 = vmatprep.mubr.f32.mxu0 0.0
  %880 = vmatmul.mubr.f32.gmra.mrb[0].mxu0 %v750
  %v881 = vpop.f32.mrb[0].mxu0
  %v882 = vadd.f32 0.0, %v881
  %v883 = vpop.f32.mrb[0].mxu0
  %884 = vmatprep.mubr.f32.mxu0 0.0
  %885 = vmatmul.mubr.f32.gmra.mrb[0].mxu0 %v752
  %v886 = vpop.f32.mrb[0].mxu0
  %v887 = vadd.f32 0.0, %v886
  %v888 = vpop.f32.mrb[0].mxu0
  %889 = vmatprep.mubr.f32.mxu0 0.0
  %890 = vmatmul.mubr.f32.gmra.mrb[0].mxu0 %v754
  %v891 = vpop.f32.mrb[0].mxu0
  %v892 = vadd.f32 0.0, %v891
  %v893 = vpop.f32.mrb[0].mxu0
  %894 = vmatprep.mubr.f32.mxu0 0.0
  %895 = vmatmul.mubr.f32.gmra.mrb[0].mxu0 %v756
  %v896 = vpop.f32.mrb[0].mxu0
  %v897 = vadd.f32 0.0, %v896
  %v898 = vpop.f32.mrb[0].mxu0
  %899 = vmatprep.mubr.f32.mxu0 0.0
  %900 = vmatmul.mubr.f32.gmra.mrb[0].mxu0 %v758
  %v901 = vpop.f32.mrb[0].mxu0
  %v902 = vadd.f32 0.0, %v901
  %v903 = vpop.f32.mrb[0].mxu0
  %904 = vdwg.mxu0
  %905 = vrot.lane.b32.xlu0 %v483, 120
  %v906 = vpop.permute.xlu0 %905
  %907 = vrot.lane.b32.xlu0 %v484, 120
  %v908 = vpop.permute.xlu0 %907
  %909 = vrot.lane.b32.xlu0 %v485, 120
  %v910 = vpop.permute.xlu0 %909
  %911 = vrot.lane.b32.xlu0 %v486, 120
  %v912 = vpop.permute.xlu0 %911
  %913 = vrot.lane.b32.xlu0 %v487, 120
  %v914 = vpop.permute.xlu0 %913
  %915 = vrot.lane.b32.xlu0 %v488, 120
  %v916 = vpop.permute.xlu0 %915
  %917 = vrot.lane.b32.xlu0 %v489, 120
  %v918 = vpop.permute.xlu0 %917
  %919 = vrot.lane.b32.xlu0 %v490, 120
  %v920 = vpop.permute.xlu0 %919
  %921 = vrot.lane.b32.xlu0 %v491, 120
  %v922 = vpop.permute.xlu0 %921
  %923 = vrot.lane.b32.xlu0 %v492, 120
  %v924 = vpop.permute.xlu0 %923
  %925 = vrot.lane.b32.xlu0 %v493, 120
  %v926 = vpop.permute.xlu0 %925
  %927 = vrot.lane.b32.xlu0 %v494, 120
  %v928 = vpop.permute.xlu0 %927
  %929 = vrot.lane.b32.xlu0 %v495, 120
  %v930 = vpop.permute.xlu0 %929
  %931 = vrot.lane.b32.xlu0 %v496, 120
  %v932 = vpop.permute.xlu0 %931
  %933 = vrot.lane.b32.xlu0 %v497, 120
  %v934 = vpop.permute.xlu0 %933
  %935 = vrot.lane.b32.xlu0 %v498, 120
  %v936 = vpop.permute.xlu0 %935
  %v937 = vsel %vm285, %v906, 0
  %v939 = vsel %vm285, %v908, 0
  %v941 = vsel %vm285, %v910, 0
  %v943 = vsel %vm285, %v912, 0
  %v945 = vsel %vm285, %v914, 0
  %v947 = vsel %vm285, %v916, 0
  %v949 = vsel %vm285, %v918, 0
  %v951 = vsel %vm285, %v920, 0
  %v953 = vsel %vm285, %v922, 0
  %v955 = vsel %vm285, %v924, 0
  %v957 = vsel %vm285, %v926, 0
  %v959 = vsel %vm285, %v928, 0
  %v961 = vsel %vm285, %v930, 0
  %v963 = vsel %vm285, %v932, 0
  %v965 = vsel %vm285, %v934, 0
  %v967 = vsel %vm285, %v936, 0
  %969 = vmatprep.subr.mxu0 0.0
  %970 = vmatpush1.msra.mxu0 %v549
  %971 = vmatprep.subr.mxu0 0.0
  %972 = vmatpush1.msra.mxu0 0.0
  %973 = vmatprep.subr.mxu0 0.0
  %974 = vmatpush1.msra.mxu0 0.0
  %975 = vmatprep.subr.mxu0 0.0
  %976 = vmatpush1.msra.mxu0 0.0
  %977 = vmatprep.subr.mxu0 0.0
  %978 = vmatpush1.msra.mxu0 0.0
  %979 = vmatprep.subr.mxu0 0.0
  %980 = vmatpush1.msra.mxu0 0.0
  %981 = vmatprep.subr.mxu0 0.0
  %982 = vmatpush1.msra.mxu0 0.0
  %983 = vmatprep.subr.mxu0 0.0
  %984 = vmatpush1.msra.mxu0 0.0
  %985 = vmatprep.subr.mxu0 0.0
  %986 = vmatpush1.msra.mxu0 0.0
  %987 = vmatprep.subr.mxu0 0.0
  %988 = vmatpush1.msra.mxu0 0.0
  %989 = vmatprep.subr.mxu0 0.0
  %990 = vmatpush1.msra.mxu0 0.0
  %991 = vmatprep.subr.mxu0 0.0
  %992 = vmatpush1.msra.mxu0 0.0
  %993 = vmatprep.subr.mxu0 0.0
  %994 = vmatpush1.msra.mxu0 0.0
  %995 = vmatprep.subr.mxu0 0.0
  %996 = vmatpush1.msra.mxu0 0.0
  %997 = vmatprep.subr.mxu0 0.0
  %998 = vmatpush1.msra.mxu0 0.0
  %999 = vmatprep.subr.mxu0 0.0
  %1000 = vmatpush1.msra.mxu0 0.0
  %1001 = vmatprep.subr.mxu0 0.0
  %1002 = vmatpush1.msra.mxu0 0.0
  %1003 = vmatprep.subr.mxu0 0.0
  %1004 = vmatpush1.msra.mxu0 0.0
  %1005 = vmatprep.subr.mxu0 0.0
  %1006 = vmatpush1.msra.mxu0 0.0
  %1007 = vmatprep.subr.mxu0 0.0
  %1008 = vmatpush1.msra.mxu0 0.0
  %1009 = vmatprep.subr.mxu0 0.0
  %1010 = vmatpush1.msra.mxu0 0.0
  %1011 = vmatprep.subr.mxu0 0.0
  %1012 = vmatpush1.msra.mxu0 0.0
  %1013 = vmatprep.subr.mxu0 0.0
  %1014 = vmatpush1.msra.mxu0 0.0
  %1015 = vmatprep.subr.mxu0 0.0
  %1016 = vmatpush1.msra.mxu0 0.0
  %1017 = vmatprep.subr.mxu0 0.0
  %1018 = vmatpush1.msra.mxu0 0.0
  %1019 = vmatprep.subr.mxu0 0.0
  %1020 = vmatpush1.msra.mxu0 0.0
  %1021 = vmatprep.subr.mxu0 0.0
  %1022 = vmatpush1.msra.mxu0 0.0
  %1023 = vmatprep.subr.mxu0 0.0
  %1024 = vmatpush1.msra.mxu0 0.0
  %1025 = vmatprep.subr.mxu0 0.0
  %1026 = vmatpush1.msra.mxu0 0.0
  %1027 = vmatprep.subr.mxu0 0.0
  %1028 = vmatpush1.msra.mxu0 0.0
  %1029 = vmatprep.subr.mxu0 0.0
  %1030 = vmatpush1.msra.mxu0 0.0
  %1031 = vmatprep.subr.mxu0 0.0
  %1032 = vmatpush1.msra.mxu0 0.0
  %1033 = vmatprep.mubr.f32.mxu0 0.0
  %1034 = vmatmul.mubr.f32.gmra.mrb[0].mxu0 %v937
  %v1035 = vpop.f32.mrb[0].mxu0
  %v1036 = vadd.f32 0.0, %v1035
  %v1037 = vpop.f32.mrb[0].mxu0
  %1038 = vmatprep.mubr.f32.mxu0 0.0
  %1039 = vmatmul.mubr.f32.gmra.mrb[0].mxu0 %v939
  %v1040 = vpop.f32.mrb[0].mxu0
  %v1041 = vadd.f32 0.0, %v1040
  %v1042 = vpop.f32.mrb[0].mxu0
  %1043 = vmatprep.mubr.f32.mxu0 0.0
  %1044 = vmatmul.mubr.f32.gmra.mrb[0].mxu0 %v941
  %v1045 = vpop.f32.mrb[0].mxu0
  %v1046 = vadd.f32 0.0, %v1045
  %v1047 = vpop.f32.mrb[0].mxu0
  %1048 = vmatprep.mubr.f32.mxu0 0.0
  %1049 = vmatmul.mubr.f32.gmra.mrb[0].mxu0 %v943
  %v1050 = vpop.f32.mrb[0].mxu0
  %v1051 = vadd.f32 0.0, %v1050
  %v1052 = vpop.f32.mrb[0].mxu0
  %1053 = vmatprep.mubr.f32.mxu0 0.0
  %1054 = vmatmul.mubr.f32.gmra.mrb[0].mxu0 %v945
  %v1055 = vpop.f32.mrb[0].mxu0
  %v1056 = vadd.f32 0.0, %v1055
  %v1057 = vpop.f32.mrb[0].mxu0
  %1058 = vmatprep.mubr.f32.mxu0 0.0
  %1059 = vmatmul.mubr.f32.gmra.mrb[0].mxu0 %v947
  %v1060 = vpop.f32.mrb[0].mxu0
  %v1061 = vadd.f32 0.0, %v1060
  %v1062 = vpop.f32.mrb[0].mxu0
  %1063 = vmatprep.mubr.f32.mxu0 0.0
  %1064 = vmatmul.mubr.f32.gmra.mrb[0].mxu0 %v949
  %v1065 = vpop.f32.mrb[0].mxu0
  %v1066 = vadd.f32 0.0, %v1065
  %v1067 = vpop.f32.mrb[0].mxu0
  %1068 = vmatprep.mubr.f32.mxu0 0.0
  %1069 = vmatmul.mubr.f32.gmra.mrb[0].mxu0 %v951
  %v1070 = vpop.f32.mrb[0].mxu0
  %v1071 = vadd.f32 0.0, %v1070
  %v1072 = vpop.f32.mrb[0].mxu0
  %1073 = vmatprep.mubr.f32.mxu0 0.0
  %1074 = vmatmul.mubr.f32.gmra.mrb[0].mxu0 %v953
  %v1075 = vpop.f32.mrb[0].mxu0
  %v1076 = vadd.f32 0.0, %v1075
  %v1077 = vpop.f32.mrb[0].mxu0
  %1078 = vmatprep.mubr.f32.mxu0 0.0
  %1079 = vmatmul.mubr.f32.gmra.mrb[0].mxu0 %v955
  %v1080 = vpop.f32.mrb[0].mxu0
  %v1081 = vadd.f32 0.0, %v1080
  %v1082 = vpop.f32.mrb[0].mxu0
  %1083 = vmatprep.mubr.f32.mxu0 0.0
  %1084 = vmatmul.mubr.f32.gmra.mrb[0].mxu0 %v957
  %v1085 = vpop.f32.mrb[0].mxu0
  %v1086 = vadd.f32 0.0, %v1085
  %v1087 = vpop.f32.mrb[0].mxu0
  %1088 = vmatprep.mubr.f32.mxu0 0.0
  %1089 = vmatmul.mubr.f32.gmra.mrb[0].mxu0 %v959
  %v1090 = vpop.f32.mrb[0].mxu0
  %v1091 = vadd.f32 0.0, %v1090
  %v1092 = vpop.f32.mrb[0].mxu0
  %1093 = vmatprep.mubr.f32.mxu0 0.0
  %1094 = vmatmul.mubr.f32.gmra.mrb[0].mxu0 %v961
  %v1095 = vpop.f32.mrb[0].mxu0
  %v1096 = vadd.f32 0.0, %v1095
  %v1097 = vpop.f32.mrb[0].mxu0
  %1098 = vmatprep.mubr.f32.mxu0 0.0
  %1099 = vmatmul.mubr.f32.gmra.mrb[0].mxu0 %v963
  %v1100 = vpop.f32.mrb[0].mxu0
  %v1101 = vadd.f32 0.0, %v1100
  %v1102 = vpop.f32.mrb[0].mxu0
  %1103 = vmatprep.mubr.f32.mxu0 0.0
  %1104 = vmatmul.mubr.f32.gmra.mrb[0].mxu0 %v965
  %v1105 = vpop.f32.mrb[0].mxu0
  %v1106 = vadd.f32 0.0, %v1105
  %v1107 = vpop.f32.mrb[0].mxu0
  %1108 = vmatprep.mubr.f32.mxu0 0.0
  %1109 = vmatmul.mubr.f32.gmra.mrb[0].mxu0 %v967
  %v1110 = vpop.f32.mrb[0].mxu0
  %v1111 = vadd.f32 0.0, %v1110
  %v1112 = vpop.f32.mrb[0].mxu0
  %1113 = vdwg.mxu0
  %1114 = vrot.lane.b32.xlu0 %v483, 116
  %v1115 = vpop.permute.xlu0 %1114
  %1116 = vrot.lane.b32.xlu0 %v484, 116
  %v1117 = vpop.permute.xlu0 %1116
  %1118 = vrot.lane.b32.xlu0 %v485, 116
  %v1119 = vpop.permute.xlu0 %1118
  %1120 = vrot.lane.b32.xlu0 %v486, 116
  %v1121 = vpop.permute.xlu0 %1120
  %1122 = vrot.lane.b32.xlu0 %v487, 116
  %v1123 = vpop.permute.xlu0 %1122
  %1124 = vrot.lane.b32.xlu0 %v488, 116
  %v1125 = vpop.permute.xlu0 %1124
  %1126 = vrot.lane.b32.xlu0 %v489, 116
  %v1127 = vpop.permute.xlu0 %1126
  %1128 = vrot.lane.b32.xlu0 %v490, 116
  %v1129 = vpop.permute.xlu0 %1128
  %1130 = vrot.lane.b32.xlu0 %v491, 116
  %v1131 = vpop.permute.xlu0 %1130
  %1132 = vrot.lane.b32.xlu0 %v492, 116
  %v1133 = vpop.permute.xlu0 %1132
  %1134 = vrot.lane.b32.xlu0 %v493, 116
  %v1135 = vpop.permute.xlu0 %1134
  %1136 = vrot.lane.b32.xlu0 %v494, 116
  %v1137 = vpop.permute.xlu0 %1136
  %1138 = vrot.lane.b32.xlu0 %v495, 116
  %v1139 = vpop.permute.xlu0 %1138
  %1140 = vrot.lane.b32.xlu0 %v496, 116
  %v1141 = vpop.permute.xlu0 %1140
  %1142 = vrot.lane.b32.xlu0 %v497, 116
  %v1143 = vpop.permute.xlu0 %1142
  %1144 = vrot.lane.b32.xlu0 %v498, 116
  %v1145 = vpop.permute.xlu0 %1144
  %v1146 = vsel %vm285, %v1115, 0
  %v1148 = vsel %vm285, %v1117, 0
  %v1150 = vsel %vm285, %v1119, 0
  %v1152 = vsel %vm285, %v1121, 0
  %v1154 = vsel %vm285, %v1123, 0
  %v1156 = vsel %vm285, %v1125, 0
  %v1158 = vsel %vm285, %v1127, 0
  %v1160 = vsel %vm285, %v1129, 0
  %v1162 = vsel %vm285, %v1131, 0
  %v1164 = vsel %vm285, %v1133, 0
  %v1166 = vsel %vm285, %v1135, 0
  %v1168 = vsel %vm285, %v1137, 0
  %v1170 = vsel %vm285, %v1139, 0
  %v1172 = vsel %vm285, %v1141, 0
  %v1174 = vsel %vm285, %v1143, 0
  %v1176 = vsel %vm285, %v1145, 0
  %1178 = vmatprep.subr.mxu0 0.0
  %1179 = vmatpush1.msra.mxu0 %v549
  %1180 = vmatprep.subr.mxu0 0.0
  %1181 = vmatpush1.msra.mxu0 0.0
  %1182 = vmatprep.subr.mxu0 0.0
  %1183 = vmatpush1.msra.mxu0 0.0
  %1184 = vmatprep.subr.mxu0 0.0
  %1185 = vmatpush1.msra.mxu0 0.0
  %1186 = vmatprep.subr.mxu0 0.0
  %1187 = vmatpush1.msra.mxu0 0.0
  %1188 = vmatprep.subr.mxu0 0.0
  %1189 = vmatpush1.msra.mxu0 0.0
  %1190 = vmatprep.subr.mxu0 0.0
  %1191 = vmatpush1.msra.mxu0 0.0
  %1192 = vmatprep.subr.mxu0 0.0
  %1193 = vmatpush1.msra.mxu0 0.0
  %1194 = vmatprep.subr.mxu0 0.0
  %1195 = vmatpush1.msra.mxu0 0.0
  %1196 = vmatprep.subr.mxu0 0.0
  %1197 = vmatpush1.msra.mxu0 0.0
  %1198 = vmatprep.subr.mxu0 0.0
  %1199 = vmatpush1.msra.mxu0 0.0
  %1200 = vmatprep.subr.mxu0 0.0
  %1201 = vmatpush1.msra.mxu0 0.0
  %1202 = vmatprep.subr.mxu0 0.0
  %1203 = vmatpush1.msra.mxu0 0.0
  %1204 = vmatprep.subr.mxu0 0.0
  %1205 = vmatpush1.msra.mxu0 0.0
  %1206 = vmatprep.subr.mxu0 0.0
  %1207 = vmatpush1.msra.mxu0 0.0
  %1208 = vmatprep.subr.mxu0 0.0
  %1209 = vmatpush1.msra.mxu0 0.0
  %1210 = vmatprep.subr.mxu0 0.0
  %1211 = vmatpush1.msra.mxu0 0.0
  %1212 = vmatprep.subr.mxu0 0.0
  %1213 = vmatpush1.msra.mxu0 0.0
  %1214 = vmatprep.subr.mxu0 0.0
  %1215 = vmatpush1.msra.mxu0 0.0
  %1216 = vmatprep.subr.mxu0 0.0
  %1217 = vmatpush1.msra.mxu0 0.0
  %1218 = vmatprep.subr.mxu0 0.0
  %1219 = vmatpush1.msra.mxu0 0.0
  %1220 = vmatprep.subr.mxu0 0.0
  %1221 = vmatpush1.msra.mxu0 0.0
  %1222 = vmatprep.subr.mxu0 0.0
  %1223 = vmatpush1.msra.mxu0 0.0
  %1224 = vmatprep.subr.mxu0 0.0
  %1225 = vmatpush1.msra.mxu0 0.0
  %1226 = vmatprep.subr.mxu0 0.0
  %1227 = vmatpush1.msra.mxu0 0.0
  %1228 = vmatprep.subr.mxu0 0.0
  %1229 = vmatpush1.msra.mxu0 0.0
  %1230 = vmatprep.subr.mxu0 0.0
  %1231 = vmatpush1.msra.mxu0 0.0
  %1232 = vmatprep.subr.mxu0 0.0
  %1233 = vmatpush1.msra.mxu0 0.0
  %1234 = vmatprep.subr.mxu0 0.0
  %1235 = vmatpush1.msra.mxu0 0.0
  %1236 = vmatprep.subr.mxu0 0.0
  %1237 = vmatpush1.msra.mxu0 0.0
  %1238 = vmatprep.subr.mxu0 0.0
  %1239 = vmatpush1.msra.mxu0 0.0
  %1240 = vmatprep.subr.mxu0 0.0
  %1241 = vmatpush1.msra.mxu0 0.0
  %1242 = vmatprep.mubr.f32.mxu0 0.0
  %1243 = vmatmul.mubr.f32.gmra.mrb[0].mxu0 %v1146
  %v1244 = vpop.f32.mrb[0].mxu0
  %v1245 = vadd.f32 0.0, %v1244
  %v1246 = vpop.f32.mrb[0].mxu0
  %1247 = vmatprep.mubr.f32.mxu0 0.0
  %1248 = vmatmul.mubr.f32.gmra.mrb[0].mxu0 %v1148
  %v1249 = vpop.f32.mrb[0].mxu0
  %v1250 = vadd.f32 0.0, %v1249
  %v1251 = vpop.f32.mrb[0].mxu0
  %1252 = vmatprep.mubr.f32.mxu0 0.0
  %1253 = vmatmul.mubr.f32.gmra.mrb[0].mxu0 %v1150
  %v1254 = vpop.f32.mrb[0].mxu0
  %v1255 = vadd.f32 0.0, %v1254
  %v1256 = vpop.f32.mrb[0].mxu0
  %1257 = vmatprep.mubr.f32.mxu0 0.0
  %1258 = vmatmul.mubr.f32.gmra.mrb[0].mxu0 %v1152
  %v1259 = vpop.f32.mrb[0].mxu0
  %v1260 = vadd.f32 0.0, %v1259
  %v1261 = vpop.f32.mrb[0].mxu0
  %1262 = vmatprep.mubr.f32.mxu0 0.0
  %1263 = vmatmul.mubr.f32.gmra.mrb[0].mxu0 %v1154
  %v1264 = vpop.f32.mrb[0].mxu0
  %v1265 = vadd.f32 0.0, %v1264
  %v1266 = vpop.f32.mrb[0].mxu0
  %1267 = vmatprep.mubr.f32.mxu0 0.0
  %1268 = vmatmul.mubr.f32.gmra.mrb[0].mxu0 %v1156
  %v1269 = vpop.f32.mrb[0].mxu0
  %v1270 = vadd.f32 0.0, %v1269
  %v1271 = vpop.f32.mrb[0].mxu0
  %1272 = vmatprep.mubr.f32.mxu0 0.0
  %1273 = vmatmul.mubr.f32.gmra.mrb[0].mxu0 %v1158
  %v1274 = vpop.f32.mrb[0].mxu0
  %v1275 = vadd.f32 0.0, %v1274
  %v1276 = vpop.f32.mrb[0].mxu0
  %1277 = vmatprep.mubr.f32.mxu0 0.0
  %1278 = vmatmul.mubr.f32.gmra.mrb[0].mxu0 %v1160
  %v1279 = vpop.f32.mrb[0].mxu0
  %v1280 = vadd.f32 0.0, %v1279
  %v1281 = vpop.f32.mrb[0].mxu0
  %1282 = vmatprep.mubr.f32.mxu0 0.0
  %1283 = vmatmul.mubr.f32.gmra.mrb[0].mxu0 %v1162
  %v1284 = vpop.f32.mrb[0].mxu0
  %v1285 = vadd.f32 0.0, %v1284
  %v1286 = vpop.f32.mrb[0].mxu0
  %1287 = vmatprep.mubr.f32.mxu0 0.0
  %1288 = vmatmul.mubr.f32.gmra.mrb[0].mxu0 %v1164
  %v1289 = vpop.f32.mrb[0].mxu0
  %v1290 = vadd.f32 0.0, %v1289
  %v1291 = vpop.f32.mrb[0].mxu0
  %1292 = vmatprep.mubr.f32.mxu0 0.0
  %1293 = vmatmul.mubr.f32.gmra.mrb[0].mxu0 %v1166
  %v1294 = vpop.f32.mrb[0].mxu0
  %v1295 = vadd.f32 0.0, %v1294
  %v1296 = vpop.f32.mrb[0].mxu0
  %1297 = vmatprep.mubr.f32.mxu0 0.0
  %1298 = vmatmul.mubr.f32.gmra.mrb[0].mxu0 %v1168
  %v1299 = vpop.f32.mrb[0].mxu0
  %v1300 = vadd.f32 0.0, %v1299
  %v1301 = vpop.f32.mrb[0].mxu0
  %1302 = vmatprep.mubr.f32.mxu0 0.0
  %1303 = vmatmul.mubr.f32.gmra.mrb[0].mxu0 %v1170
  %v1304 = vpop.f32.mrb[0].mxu0
  %v1305 = vadd.f32 0.0, %v1304
  %v1306 = vpop.f32.mrb[0].mxu0
  %1307 = vmatprep.mubr.f32.mxu0 0.0
  %1308 = vmatmul.mubr.f32.gmra.mrb[0].mxu0 %v1172
  %v1309 = vpop.f32.mrb[0].mxu0
  %v1310 = vadd.f32 0.0, %v1309
  %v1311 = vpop.f32.mrb[0].mxu0
  %1312 = vmatprep.mubr.f32.mxu0 0.0
  %1313 = vmatmul.mubr.f32.gmra.mrb[0].mxu0 %v1174
  %v1314 = vpop.f32.mrb[0].mxu0
  %v1315 = vadd.f32 0.0, %v1314
  %v1316 = vpop.f32.mrb[0].mxu0
  %1317 = vmatprep.mubr.f32.mxu0 0.0
  %1318 = vmatmul.mubr.f32.gmra.mrb[0].mxu0 %v1176
  %v1319 = vpop.f32.mrb[0].mxu0
  %v1320 = vadd.f32 0.0, %v1319
  %v1321 = vpop.f32.mrb[0].mxu0
  %1322 = vdwg.mxu0
  %1339 = vrot.lane.b32.xlu0 %v827, 8
  %v1340 = vpop.permute.xlu0 %1339
  %1341 = vrot.lane.b32.xlu0 %v832, 8
  %v1342 = vpop.permute.xlu0 %1341
  %1343 = vrot.lane.b32.xlu0 %v837, 8
  %v1344 = vpop.permute.xlu0 %1343
  %1345 = vrot.lane.b32.xlu0 %v842, 8
  %v1346 = vpop.permute.xlu0 %1345
  %1347 = vrot.lane.b32.xlu0 %v847, 8
  %v1348 = vpop.permute.xlu0 %1347
  %1349 = vrot.lane.b32.xlu0 %v852, 8
  %v1350 = vpop.permute.xlu0 %1349
  %1351 = vrot.lane.b32.xlu0 %v857, 8
  %v1352 = vpop.permute.xlu0 %1351
  %1353 = vrot.lane.b32.xlu0 %v862, 8
  %v1354 = vpop.permute.xlu0 %1353
  %1355 = vrot.lane.b32.xlu0 %v867, 8
  %v1356 = vpop.permute.xlu0 %1355
  %1357 = vrot.lane.b32.xlu0 %v872, 8
  %v1358 = vpop.permute.xlu0 %1357
  %1359 = vrot.lane.b32.xlu0 %v877, 8
  %v1360 = vpop.permute.xlu0 %1359
  %1361 = vrot.lane.b32.xlu0 %v882, 8
  %v1362 = vpop.permute.xlu0 %1361
  %1363 = vrot.lane.b32.xlu0 %v887, 8
  %v1364 = vpop.permute.xlu0 %1363
  %1365 = vrot.lane.b32.xlu0 %v892, 8
  %v1366 = vpop.permute.xlu0 %1365
  %1367 = vrot.lane.b32.xlu0 %v897, 8
  %v1368 = vpop.permute.xlu0 %1367
  %1369 = vrot.lane.b32.xlu0 %v902, 8
  %v1370 = vpop.permute.xlu0 %1369
  %1403 = vrot.lane.b32.xlu0 %v1036, 16
  %v1404 = vpop.permute.xlu0 %1403
  %1405 = vrot.lane.b32.xlu0 %v1041, 16
  %v1406 = vpop.permute.xlu0 %1405
  %1407 = vrot.lane.b32.xlu0 %v1046, 16
  %v1408 = vpop.permute.xlu0 %1407
  %1409 = vrot.lane.b32.xlu0 %v1051, 16
  %v1410 = vpop.permute.xlu0 %1409
  %1411 = vrot.lane.b32.xlu0 %v1056, 16
  %v1412 = vpop.permute.xlu0 %1411
  %1413 = vrot.lane.b32.xlu0 %v1061, 16
  %v1414 = vpop.permute.xlu0 %1413
  %1415 = vrot.lane.b32.xlu0 %v1066, 16
  %v1416 = vpop.permute.xlu0 %1415
  %1417 = vrot.lane.b32.xlu0 %v1071, 16
  %v1418 = vpop.permute.xlu0 %1417
  %1419 = vrot.lane.b32.xlu0 %v1076, 16
  %v1420 = vpop.permute.xlu0 %1419
  %1421 = vrot.lane.b32.xlu0 %v1081, 16
  %v1422 = vpop.permute.xlu0 %1421
  %1423 = vrot.lane.b32.xlu0 %v1086, 16
  %v1424 = vpop.permute.xlu0 %1423
  %1425 = vrot.lane.b32.xlu0 %v1091, 16
  %v1426 = vpop.permute.xlu0 %1425
  %1427 = vrot.lane.b32.xlu0 %v1096, 16
  %v1428 = vpop.permute.xlu0 %1427
  %1429 = vrot.lane.b32.xlu0 %v1101, 16
  %v1430 = vpop.permute.xlu0 %1429
  %1431 = vrot.lane.b32.xlu0 %v1106, 16
  %v1432 = vpop.permute.xlu0 %1431
  %1433 = vrot.lane.b32.xlu0 %v1111, 16
  %v1434 = vpop.permute.xlu0 %1433
  %1467 = vrot.lane.b32.xlu0 %v1245, 24
  %v1468 = vpop.permute.xlu0 %1467
  %1469 = vrot.lane.b32.xlu0 %v1250, 24
  %v1470 = vpop.permute.xlu0 %1469
  %1471 = vrot.lane.b32.xlu0 %v1255, 24
  %v1472 = vpop.permute.xlu0 %1471
  %1473 = vrot.lane.b32.xlu0 %v1260, 24
  %v1474 = vpop.permute.xlu0 %1473
  %1475 = vrot.lane.b32.xlu0 %v1265, 24
  %v1476 = vpop.permute.xlu0 %1475
  %1477 = vrot.lane.b32.xlu0 %v1270, 24
  %v1478 = vpop.permute.xlu0 %1477
  %1479 = vrot.lane.b32.xlu0 %v1275, 24
  %v1480 = vpop.permute.xlu0 %1479
  %1481 = vrot.lane.b32.xlu0 %v1280, 24
  %v1482 = vpop.permute.xlu0 %1481
  %1483 = vrot.lane.b32.xlu0 %v1285, 24
  %v1484 = vpop.permute.xlu0 %1483
  %1485 = vrot.lane.b32.xlu0 %v1290, 24
  %v1486 = vpop.permute.xlu0 %1485
  %1487 = vrot.lane.b32.xlu0 %v1295, 24
  %v1488 = vpop.permute.xlu0 %1487
  %1489 = vrot.lane.b32.xlu0 %v1300, 24
  %v1490 = vpop.permute.xlu0 %1489
  %1491 = vrot.lane.b32.xlu0 %v1305, 24
  %v1492 = vpop.permute.xlu0 %1491
  %1493 = vrot.lane.b32.xlu0 %v1310, 24
  %v1494 = vpop.permute.xlu0 %1493
  %1495 = vrot.lane.b32.xlu0 %v1315, 24
  %v1496 = vpop.permute.xlu0 %1495
  %1497 = vrot.lane.b32.xlu0 %v1320, 24
  %v1498 = vpop.permute.xlu0 %1497
  %vm1515 = vcmask 64512
  %v1516 = vsel %vm1515, %v618, %v1340
  %v1517 = vsel %vm1515, %v623, %v1342
  %v1518 = vsel %vm1515, %v628, %v1344
  %v1519 = vsel %vm1515, %v633, %v1346
  %v1520 = vsel %vm1515, %v638, %v1348
  %v1521 = vsel %vm1515, %v643, %v1350
  %v1522 = vsel %vm1515, %v648, %v1352
  %v1523 = vsel %vm1515, %v653, %v1354
  %v1524 = vsel %vm1515, %v658, %v1356
  %v1525 = vsel %vm1515, %v663, %v1358
  %v1526 = vsel %vm1515, %v668, %v1360
  %v1527 = vsel %vm1515, %v673, %v1362
  %v1528 = vsel %vm1515, %v678, %v1364
  %v1529 = vsel %vm1515, %v683, %v1366
  %v1530 = vsel %vm1515, %v688, %v1368
  %v1531 = vsel %vm1515, %v693, %v1370
  %v1532 = vsel %vm44, %v1516, %v1404
  %v1533 = vsel %vm44, %v1517, %v1406
  %v1534 = vsel %vm44, %v1518, %v1408
  %v1535 = vsel %vm44, %v1519, %v1410
  %v1536 = vsel %vm44, %v1520, %v1412
  %v1537 = vsel %vm44, %v1521, %v1414
  %v1538 = vsel %vm44, %v1522, %v1416
  %v1539 = vsel %vm44, %v1523, %v1418
  %v1540 = vsel %vm44, %v1524, %v1420
  %v1541 = vsel %vm44, %v1525, %v1422
  %v1542 = vsel %vm44, %v1526, %v1424
  %v1543 = vsel %vm44, %v1527, %v1426
  %v1544 = vsel %vm44, %v1528, %v1428
  %v1545 = vsel %vm44, %v1529, %v1430
  %v1546 = vsel %vm44, %v1530, %v1432
  %v1547 = vsel %vm44, %v1531, %v1434
  %vm1548 = vcmask 195584
  %v1549 = vsel %vm1548, %v1532, %v1468
  %v1550 = vsel %vm1548, %v1533, %v1470
  %v1551 = vsel %vm1548, %v1534, %v1472
  %v1552 = vsel %vm1548, %v1535, %v1474
  %v1553 = vsel %vm1548, %v1536, %v1476
  %v1554 = vsel %vm1548, %v1537, %v1478
  %v1555 = vsel %vm1548, %v1538, %v1480
  %v1556 = vsel %vm1548, %v1539, %v1482
  %v1557 = vsel %vm1548, %v1540, %v1484
  %v1558 = vsel %vm1548, %v1541, %v1486
  %v1559 = vsel %vm1548, %v1542, %v1488
  %v1560 = vsel %vm1548, %v1543, %v1490
  %v1561 = vsel %vm1548, %v1544, %v1492
  %v1562 = vsel %vm1548, %v1545, %v1494
  %v1563 = vsel %vm1548, %v1546, %v1496
  %v1564 = vsel %vm1548, %v1547, %v1498
  %1581 = vrot.lane.b32.xlu0 %v160, 124
  %v1582 = vpop.permute.xlu0 %1581
  %1583 = vrot.lane.b32.xlu0 %v165, 124
  %v1584 = vpop.permute.xlu0 %1583
  %1585 = vrot.lane.b32.xlu0 %v170, 124
  %v1586 = vpop.permute.xlu0 %1585
  %1587 = vrot.lane.b32.xlu0 %v175, 124
  %v1588 = vpop.permute.xlu0 %1587
  %1589 = vrot.lane.b32.xlu0 %v180, 124
  %v1590 = vpop.permute.xlu0 %1589
  %1591 = vrot.lane.b32.xlu0 %v185, 124
  %v1592 = vpop.permute.xlu0 %1591
  %1593 = vrot.lane.b32.xlu0 %v190, 124
  %v1594 = vpop.permute.xlu0 %1593
  %1595 = vrot.lane.b32.xlu0 %v195, 124
  %v1596 = vpop.permute.xlu0 %1595
  %1597 = vrot.lane.b32.xlu0 %v200, 124
  %v1598 = vpop.permute.xlu0 %1597
  %1599 = vrot.lane.b32.xlu0 %v205, 124
  %v1600 = vpop.permute.xlu0 %1599
  %1601 = vrot.lane.b32.xlu0 %v210, 124
  %v1602 = vpop.permute.xlu0 %1601
  %1603 = vrot.lane.b32.xlu0 %v215, 124
  %v1604 = vpop.permute.xlu0 %1603
  %1605 = vrot.lane.b32.xlu0 %v220, 124
  %v1606 = vpop.permute.xlu0 %1605
  %1607 = vrot.lane.b32.xlu0 %v225, 124
  %v1608 = vpop.permute.xlu0 %1607
  %1609 = vrot.lane.b32.xlu0 %v230, 124
  %v1610 = vpop.permute.xlu0 %1609
  %1611 = vrot.lane.b32.xlu0 %v235, 124
  %v1612 = vpop.permute.xlu0 %1611
  %v1629 = vadd.f32 %v1549, %v1582
  %v1630 = vadd.f32 %v1550, %v1584
  %v1631 = vadd.f32 %v1551, %v1586
  %v1632 = vadd.f32 %v1552, %v1588
  %v1633 = vadd.f32 %v1553, %v1590
  %v1634 = vadd.f32 %v1554, %v1592
  %v1635 = vadd.f32 %v1555, %v1594
  %v1636 = vadd.f32 %v1556, %v1596
  %v1637 = vadd.f32 %v1557, %v1598
  %v1638 = vadd.f32 %v1558, %v1600
  %v1639 = vadd.f32 %v1559, %v1602
  %v1640 = vadd.f32 %v1560, %v1604
  %v1641 = vadd.f32 %v1561, %v1606
  %v1642 = vadd.f32 %v1562, %v1608
  %v1643 = vadd.f32 %v1563, %v1610
  %v1644 = vadd.f32 %v1564, %v1612
  %v1645 = vld [vmem:[%s6] sm:$0x1]
  %v1647 = vlaneseq
  %v1648 = vshrl.u32 %v1647, 7
  %v1649 = vsub.s32 0, %v1648
  %v1650 = vrot.slane %v1645, %v1649
  %v1652 = vadd.f32 %v1629, %v1650
  %v1653 = vadd.f32 %v1630, %v1650
  %v1654 = vadd.f32 %v1631, %v1650
  %v1655 = vadd.f32 %v1632, %v1650
  %v1656 = vadd.f32 %v1633, %v1650
  %v1657 = vadd.f32 %v1634, %v1650
  %v1658 = vadd.f32 %v1635, %v1650
  %v1659 = vadd.f32 %v1636, %v1650
  %v1660 = vadd.f32 %v1637, %v1650
  %v1661 = vadd.f32 %v1638, %v1650
  %v1662 = vadd.f32 %v1639, %v1650
  %v1663 = vadd.f32 %v1640, %v1650
  %v1664 = vadd.f32 %v1641, %v1650
  %v1665 = vadd.f32 %v1642, %v1650
  %v1666 = vadd.f32 %v1643, %v1650
  %v1667 = vadd.f32 %v1644, %v1650
  %v1668 = vmax.f32 %v1652, 0.0
  %v1669 = vmax.f32 %v1653, 0.0
  %v1670 = vmax.f32 %v1654, 0.0
  %v1671 = vmax.f32 %v1655, 0.0
  %v1672 = vmax.f32 %v1656, 0.0
  %v1673 = vmax.f32 %v1657, 0.0
  %v1674 = vmax.f32 %v1658, 0.0
  %v1675 = vmax.f32 %v1659, 0.0
  %v1676 = vmax.f32 %v1660, 0.0
  %v1677 = vmax.f32 %v1661, 0.0
  %v1678 = vmax.f32 %v1662, 0.0
  %v1679 = vmax.f32 %v1663, 0.0
  %v1680 = vmax.f32 %v1664, 0.0
  %v1681 = vmax.f32 %v1665, 0.0
  %v1682 = vmax.f32 %v1666, 0.0
  %v1683 = vmax.f32 %v1667, 0.0
  %vm1684 = vcmask 261120
  %1685 = vst.msk [vmem:[%s7] sm:$0xff] %vm1684, %v1668
  %1686 = vst.msk [vmem:[%s7 + $0x8] sm:$0xff] %vm1684, %v1669
  %1687 = vst.msk [vmem:[%s7 + $0x10] sm:$0xff] %vm1684, %v1670
  %1688 = vst.msk [vmem:[%s7 + $0x18] sm:$0xff] %vm1684, %v1671
  %1689 = vst.msk [vmem:[%s7 + $0x20] sm:$0xff] %vm1684, %v1672
  %1690 = vst.msk [vmem:[%s7 + $0x28] sm:$0xff] %vm1684, %v1673
  %1691 = vst.msk [vmem:[%s7 + $0x30] sm:$0xff] %vm1684, %v1674
  %1692 = vst.msk [vmem:[%s7 + $0x38] sm:$0xff] %vm1684, %v1675
  %1693 = vst.msk [vmem:[%s7 + $0x40] sm:$0xff] %vm1684, %v1676
  %1694 = vst.msk [vmem:[%s7 + $0x48] sm:$0xff] %vm1684, %v1677
  %1695 = vst.msk [vmem:[%s7 + $0x50] sm:$0xff] %vm1684, %v1678
  %1696 = vst.msk [vmem:[%s7 + $0x58] sm:$0xff] %vm1684, %v1679
  %1697 = vst.msk [vmem:[%s7 + $0x60] sm:$0xff] %vm1684, %v1680
  %1698 = vst.msk [vmem:[%s7 + $0x68] sm:$0xff] %vm1684, %v1681
  %1699 = vst.msk [vmem:[%s7 + $0x70] sm:$0xff] %vm1684, %v1682
  %1700 = vst.msk [vmem:[%s7 + $0x78] sm:$0xff] %vm1684, %v1683
  // Predicated region
  $region30: #{tpu_custom_call.1} parent=0 // pred_check
    _
  $region31: #{tpu_custom_call.1} parent=0 // pred_check_branch
    %1702 = sbr.rel (0) target = $region33
  $region32: #{tpu_custom_call.1} parent=0 // pred_region
    _
  $region33: #{tpu_custom_call.1} parent=0 // pred_fallthru
    _
  // Predicated region
  $region34: #{tpu_custom_call.1} parent=0 // pred_check
    _
  $region35: #{tpu_custom_call.1} parent=0 // pred_check_branch
    %1704 = sbr.rel (0) target = $region37
  $region36: #{tpu_custom_call.1} parent=0 // pred_region
    _
  $region37: #{tpu_custom_call.1} parent=0 // pred_fallthru
    _

// kernel: tpu_custom_call.1
$region0: #{tpu_custom_call.1}
  #allocation0 [shape = 'u32[]', space=smem, size = 0x4, offset = 0x4, fixed_abs, tag = 'smem constant byte address 0x4 - core index']
  #allocation1 [shape = 'u32[144,128]{1,0:T(1,128)}', space=vmem, size = 0x12000, scoped, tag = 'internal scratch']
  %s0 = inlined_call_operand.vmem [shape: f32[128,16], index: 0, kind: input, shape index: {}]
  %s1 = inlined_call_operand.vmem [shape: f32[16,36], index: 1, kind: input, shape index: {}]
  %s2 = inlined_call_operand.vmem [shape: f32[1,4], index: 2, kind: input, shape index: {}]
  %s3 = inlined_call_operand.vmem [shape: f32[4,16], index: 3, kind: input, shape index: {}]
  %s4 = inlined_call_operand.vmem [shape: f32[1,16], index: 4, kind: input, shape index: {}]
  %s5 = inlined_call_operand.vmem [shape: f32[4,8], index: 5, kind: input, shape index: {}]
  %s6 = inlined_call_operand.vmem [shape: f32[1,32], index: 6, kind: input, shape index: {}]
  %s7 = inlined_call_operand.vmem [shape: f32[128,32], index: 7, kind: output, shape index: {}]
  %s8 = sld [smem:[#allocation0]]
  $region38: #{tpu_custom_call.1} parent=0
    _
  %s10 = ssub.s32 1, %s8
  %s11 = scalar_select 0, %s10, %s8
  // Predicated region
  $region2: #{tpu_custom_call.1} parent=0 // pred_check
    _
  $region3: #{tpu_custom_call.1} parent=0 // pred_check_branch
    %13 = sbr.rel (0) target = $region5
  $region4: #{tpu_custom_call.1} parent=0 // pred_region
    _
  $region5: #{tpu_custom_call.1} parent=0 // pred_fallthru
    _
  // Predicated region
  $region6: #{tpu_custom_call.1} parent=0 // pred_check
    _
  $region7: #{tpu_custom_call.1} parent=0 // pred_check_branch
    %15 = sbr.rel (0) target = $region9
  $region8: #{tpu_custom_call.1} parent=0 // pred_region
    _
  $region9: #{tpu_custom_call.1} parent=0 // pred_fallthru
    _
  // Predicated region
  $region10: #{tpu_custom_call.1} parent=0 // pred_check
    _
  $region11: #{tpu_custom_call.1} parent=0 // pred_check_branch
    %17 = sbr.rel (0) target = $region13
  $region12: #{tpu_custom_call.1} parent=0 // pred_region
    _
  $region13: #{tpu_custom_call.1} parent=0 // pred_fallthru
    _
  // Predicated region
  $region14: #{tpu_custom_call.1} parent=0 // pred_check
    _
  $region15: #{tpu_custom_call.1} parent=0 // pred_check_branch
    %19 = sbr.rel (0) target = $region17
  $region16: #{tpu_custom_call.1} parent=0 // pred_region
    _
  $region17: #{tpu_custom_call.1} parent=0 // pred_fallthru
    _
  // Predicated region
  $region18: #{tpu_custom_call.1} parent=0 // pred_check
    _
  $region19: #{tpu_custom_call.1} parent=0 // pred_check_branch
    %21 = sbr.rel (0) target = $region21
  $region20: #{tpu_custom_call.1} parent=0 // pred_region
    _
  $region21: #{tpu_custom_call.1} parent=0 // pred_fallthru
    _
  // Predicated region
  $region22: #{tpu_custom_call.1} parent=0 // pred_check
    _
  $region23: #{tpu_custom_call.1} parent=0 // pred_check_branch
    %23 = sbr.rel (0) target = $region25
  $region24: #{tpu_custom_call.1} parent=0 // pred_region
    _
  $region25: #{tpu_custom_call.1} parent=0 // pred_fallthru
    _
  // Predicated region
  $region26: #{tpu_custom_call.1} parent=0 // pred_check
    _
  $region27: #{tpu_custom_call.1} parent=0 // pred_check_branch
    %25 = sbr.rel (0) target = $region29
  $region28: #{tpu_custom_call.1} parent=0 // pred_region
    _
  $region29: #{tpu_custom_call.1} parent=0 // pred_fallthru
    _
  %v26 = vld [vmem:[%s0] sm:$0xff]
  %v27 = vld [vmem:[%s0 + $0x8] sm:$0xff]
  %v28 = vld [vmem:[%s0 + $0x10] sm:$0xff]
  %v29 = vld [vmem:[%s0 + $0x18] sm:$0xff]
  %v30 = vld [vmem:[%s0 + $0x20] sm:$0xff]
  %v31 = vld [vmem:[%s0 + $0x28] sm:$0xff]
  %v32 = vld [vmem:[%s0 + $0x30] sm:$0xff]
  %v33 = vld [vmem:[%s0 + $0x38] sm:$0xff]
  %v34 = vld [vmem:[%s0 + $0x40] sm:$0xff]
  %v35 = vld [vmem:[%s0 + $0x48] sm:$0xff]
  %v36 = vld [vmem:[%s0 + $0x50] sm:$0xff]
  %v37 = vld [vmem:[%s0 + $0x58] sm:$0xff]
  %v38 = vld [vmem:[%s0 + $0x60] sm:$0xff]
  %v39 = vld [vmem:[%s0 + $0x68] sm:$0xff]
  %v40 = vld [vmem:[%s0 + $0x70] sm:$0xff]
  %v41 = vld [vmem:[%s0 + $0x78] sm:$0xff]
  %v42 = vld [vmem:[%s1] sm:$0xff]
  %v43 = vld [vmem:[%s1 + $0x8] sm:$0xff]
  %vm44 = vcmask 130048
  %v46 = vsel %vm44, %v26, 0
  %v49 = vsel %vm44, %v27, 0
  %v52 = vsel %vm44, %v28, 0
  %v55 = vsel %vm44, %v29, 0
  %v58 = vsel %vm44, %v30, 0
  %v61 = vsel %vm44, %v31, 0
  %v64 = vsel %vm44, %v32, 0
  %v67 = vsel %vm44, %v33, 0
  %v70 = vsel %vm44, %v34, 0
  %v73 = vsel %vm44, %v35, 0
  %v76 = vsel %vm44, %v36, 0
  %v79 = vsel %vm44, %v37, 0
  %v82 = vsel %vm44, %v38, 0
  %v85 = vsel %vm44, %v39, 0
  %v88 = vsel %vm44, %v40, 0
  %v91 = vsel %vm44, %v41, 0
  %93 = vmatprep.subr.mxu0 0.0
  %94 = vmatpush1.msra.mxu0 %v42
  %95 = vmatprep.subr.mxu0 0.0
  %96 = vmatpush1.msra.mxu0 %v43
  %97 = vmatprep.subr.mxu0 0.0
  %98 = vmatpush1.msra.mxu0 0.0
  %99 = vmatprep.subr.mxu0 0.0
  %100 = vmatpush1.msra.mxu0 0.0
  %101 = vmatprep.subr.mxu0 0.0
  %102 = vmatpush1.msra.mxu0 0.0
  %103 = vmatprep.subr.mxu0 0.0
  %104 = vmatpush1.msra.mxu0 0.0
  %105 = vmatprep.subr.mxu0 0.0
  %106 = vmatpush1.msra.mxu0 0.0
  %107 = vmatprep.subr.mxu0 0.0
  %108 = vmatpush1.msra.mxu0 0.0
  %109 = vmatprep.subr.mxu0 0.0
  %110 = vmatpush1.msra.mxu0 0.0
  %111 = vmatprep.subr.mxu0 0.0
  %112 = vmatpush1.msra.mxu0 0.0
  %113 = vmatprep.subr.mxu0 0.0
  %114 = vmatpush1.msra.mxu0 0.0
  %115 = vmatprep.subr.mxu0 0.0
  %116 = vmatpush1.msra.mxu0 0.0
  %117 = vmatprep.subr.mxu0 0.0
  %118 = vmatpush1.msra.mxu0 0.0
  %119 = vmatprep.subr.mxu0 0.0
  %120 = vmatpush1.msra.mxu0 0.0
  %121 = vmatprep.subr.mxu0 0.0
  %122 = vmatpush1.msra.mxu0 0.0
  %123 = vmatprep.subr.mxu0 0.0
  %124 = vmatpush1.msra.mxu0 0.0
  %125 = vmatprep.subr.mxu0 0.0
  %126 = vmatpush1.msra.mxu0 0.0
  %127 = vmatprep.subr.mxu0 0.0
  %128 = vmatpush1.msra.mxu0 0.0
  %129 = vmatprep.subr.mxu0 0.0
  %130 = vmatpush1.msra.mxu0 0.0
  %131 = vmatprep.subr.mxu0 0.0
  %132 = vmatpush1.msra.mxu0 0.0
  %133 = vmatprep.subr.mxu0 0.0
  %134 = vmatpush1.msra.mxu0 0.0
  %135 = vmatprep.subr.mxu0 0.0
  %136 = vmatpush1.msra.mxu0 0.0
  %137 = vmatprep.subr.mxu0 0.0
  %138 = vmatpush1.msra.mxu0 0.0
  %139 = vmatprep.subr.mxu0 0.0
  %140 = vmatpush1.msra.mxu0 0.0
  %141 = vmatprep.subr.mxu0 0.0
  %142 = vmatpush1.msra.mxu0 0.0
  %143 = vmatprep.subr.mxu0 0.0
  %144 = vmatpush1.msra.mxu0 0.0
  %145 = vmatprep.subr.mxu0 0.0
  %146 = vmatpush1.msra.mxu0 0.0
  %147 = vmatprep.subr.mxu0 0.0
  %148 = vmatpush1.msra.mxu0 0.0
  %149 = vmatprep.subr.mxu0 0.0
  %150 = vmatpush1.msra.mxu0 0.0
  %151 = vmatprep.subr.mxu0 0.0
  %152 = vmatpush1.msra.mxu0 0.0
  %153 = vmatprep.subr.mxu0 0.0
  %154 = vmatpush1.msra.mxu0 0.0
  %155 = vmatprep.subr.mxu0 0.0
  %156 = vmatpush1.msra.mxu0 0.0
  %157 = vmatprep.mubr.f32.mxu0 0.0
  %158 = vmatmul.mubr.f32.gmra.mrb[0].mxu0 %v46
  %v159 = vpop.f32.mrb[0].mxu0
  %v160 = vadd.f32 0.0, %v159
  %v161 = vpop.f32.mrb[0].mxu0
  %162 = vmatprep.mubr.f32.mxu0 0.0
  %163 = vmatmul.mubr.f32.gmra.mrb[0].mxu0 %v49
  %v164 = vpop.f32.mrb[0].mxu0
  %v165 = vadd.f32 0.0, %v164
  %v166 = vpop.f32.mrb[0].mxu0
  %167 = vmatprep.mubr.f32.mxu0 0.0
  %168 = vmatmul.mubr.f32.gmra.mrb[0].mxu0 %v52
  %v169 = vpop.f32.mrb[0].mxu0
  %v170 = vadd.f32 0.0, %v169
  %v171 = vpop.f32.mrb[0].mxu0
  %172 = vmatprep.mubr.f32.mxu0 0.0
  %173 = vmatmul.mubr.f32.gmra.mrb[0].mxu0 %v55
  %v174 = vpop.f32.mrb[0].mxu0
  %v175 = vadd.f32 0.0, %v174
  %v176 = vpop.f32.mrb[0].mxu0
  %177 = vmatprep.mubr.f32.mxu0 0.0
  %178 = vmatmul.mubr.f32.gmra.mrb[0].mxu0 %v58
  %v179 = vpop.f32.mrb[0].mxu0
  %v180 = vadd.f32 0.0, %v179
  %v181 = vpop.f32.mrb[0].mxu0
  %182 = vmatprep.mubr.f32.mxu0 0.0
  %183 = vmatmul.mubr.f32.gmra.mrb[0].mxu0 %v61
  %v184 = vpop.f32.mrb[0].mxu0
  %v185 = vadd.f32 0.0, %v184
  %v186 = vpop.f32.mrb[0].mxu0
  %187 = vmatprep.mubr.f32.mxu0 0.0
  %188 = vmatmul.mubr.f32.gmra.mrb[0].mxu0 %v64
  %v189 = vpop.f32.mrb[0].mxu0
  %v190 = vadd.f32 0.0, %v189
  %v191 = vpop.f32.mrb[0].mxu0
  %192 = vmatprep.mubr.f32.mxu0 0.0
  %193 = vmatmul.mubr.f32.gmra.mrb[0].mxu0 %v67
  %v194 = vpop.f32.mrb[0].mxu0
  %v195 = vadd.f32 0.0, %v194
  %v196 = vpop.f32.mrb[0].mxu0
  %197 = vmatprep.mubr.f32.mxu0 0.0
  %198 = vmatmul.mubr.f32.gmra.mrb[0].mxu0 %v70
  %v199 = vpop.f32.mrb[0].mxu0
  %v200 = vadd.f32 0.0, %v199
  %v201 = vpop.f32.mrb[0].mxu0
  %202 = vmatprep.mubr.f32.mxu0 0.0
  %203 = vmatmul.mubr.f32.gmra.mrb[0].mxu0 %v73
  %v204 = vpop.f32.mrb[0].mxu0
  %v205 = vadd.f32 0.0, %v204
  %v206 = vpop.f32.mrb[0].mxu0
  %207 = vmatprep.mubr.f32.mxu0 0.0
  %208 = vmatmul.mubr.f32.gmra.mrb[0].mxu0 %v76
  %v209 = vpop.f32.mrb[0].mxu0
  %v210 = vadd.f32 0.0, %v209
  %v211 = vpop.f32.mrb[0].mxu0
  %212 = vmatprep.mubr.f32.mxu0 0.0
  %213 = vmatmul.mubr.f32.gmra.mrb[0].mxu0 %v79
  %v214 = vpop.f32.mrb[0].mxu0
  %v215 = vadd.f32 0.0, %v214
  %v216 = vpop.f32.mrb[0].mxu0
  %217 = vmatprep.mubr.f32.mxu0 0.0
  %218 = vmatmul.mubr.f32.gmra.mrb[0].mxu0 %v82
  %v219 = vpop.f32.mrb[0].mxu0
  %v220 = vadd.f32 0.0, %v219
  %v221 = vpop.f32.mrb[0].mxu0
  %222 = vmatprep.mubr.f32.mxu0 0.0
  %223 = vmatmul.mubr.f32.gmra.mrb[0].mxu0 %v85
  %v224 = vpop.f32.mrb[0].mxu0
  %v225 = vadd.f32 0.0, %v224
  %v226 = vpop.f32.mrb[0].mxu0
  %227 = vmatprep.mubr.f32.mxu0 0.0
  %228 = vmatmul.mubr.f32.gmra.mrb[0].mxu0 %v88
  %v229 = vpop.f32.mrb[0].mxu0
  %v230 = vadd.f32 0.0, %v229
  %v231 = vpop.f32.mrb[0].mxu0
  %232 = vmatprep.mubr.f32.mxu0 0.0
  %233 = vmatmul.mubr.f32.gmra.mrb[0].mxu0 %v91
  %v234 = vpop.f32.mrb[0].mxu0
  %v235 = vadd.f32 0.0, %v234
  %v236 = vpop.f32.mrb[0].mxu0
  %237 = vdwg.mxu0
  %v238 = vld [vmem:[%s2] sm:$0x1]
  %v240 = vlaneseq
  %v241 = vshrl.u32 %v240, 7
  %v242 = vsub.s32 0, %v241
  %v243 = vrot.slane %v238, %v242
  %v245 = vadd.f32 %v160, %v243
  %v246 = vadd.f32 %v165, %v243
  %v247 = vadd.f32 %v170, %v243
  %v248 = vadd.f32 %v175, %v243
  %v249 = vadd.f32 %v180, %v243
  %v250 = vadd.f32 %v185, %v243
  %v251 = vadd.f32 %v190, %v243
  %v252 = vadd.f32 %v195, %v243
  %v253 = vadd.f32 %v200, %v243
  %v254 = vadd.f32 %v205, %v243
  %v255 = vadd.f32 %v210, %v243
  %v256 = vadd.f32 %v215, %v243
  %v257 = vadd.f32 %v220, %v243
  %v258 = vadd.f32 %v225, %v243
  %v259 = vadd.f32 %v230, %v243
  %v260 = vadd.f32 %v235, %v243
  %v261 = vmax.f32 %v245, 0.0
  %v262 = vmax.f32 %v246, 0.0
  %v263 = vmax.f32 %v247, 0.0
  %v264 = vmax.f32 %v248, 0.0
  %v265 = vmax.f32 %v249, 0.0
  %v266 = vmax.f32 %v250, 0.0
  %v267 = vmax.f32 %v251, 0.0
  %v268 = vmax.f32 %v252, 0.0
  %v269 = vmax.f32 %v253, 0.0
  %v270 = vmax.f32 %v254, 0.0
  %v271 = vmax.f32 %v255, 0.0
  %v272 = vmax.f32 %v256, 0.0
  %v273 = vmax.f32 %v257, 0.0
  %v274 = vmax.f32 %v258, 0.0
  %v275 = vmax.f32 %v259, 0.0
  %v276 = vmax.f32 %v260, 0.0
  %v277 = vld [vmem:[%s3] sm:$0xf]
  %v278 = vld [vmem:[%s4] sm:$0x1]
  %v280 = vlaneseq
  %v281 = vshrl.u32 %v280, 7
  %v282 = vsub.s32 0, %v281
  %v283 = vrot.slane %v278, %v282
  %vm285 = vcmask 31744
  %v287 = vsel %vm285, %v261, 0
  %v290 = vsel %vm285, %v262, 0
  %v293 = vsel %vm285, %v263, 0
  %v296 = vsel %vm285, %v264, 0
  %v299 = vsel %vm285, %v265, 0
  %v302 = vsel %vm285, %v266, 0
  %v305 = vsel %vm285, %v267, 0
  %v308 = vsel %vm285, %v268, 0
  %v311 = vsel %vm285, %v269, 0
  %v314 = vsel %vm285, %v270, 0
  %v317 = vsel %vm285, %v271, 0
  %v320 = vsel %vm285, %v272, 0
  %v323 = vsel %vm285, %v273, 0
  %v326 = vsel %vm285, %v274, 0
  %v329 = vsel %vm285, %v275, 0
  %v332 = vsel %vm285, %v276, 0
  %vm334 = vcmask 1043456
  %v336 = vsel %vm334, %v277, 0
  %338 = vmatprep.subr.mxu0 0.0
  %339 = vmatpush1.msra.mxu0 %v336
  %340 = vmatprep.subr.mxu0 0.0
  %341 = vmatpush1.msra.mxu0 0.0
  %342 = vmatprep.subr.mxu0 0.0
  %343 = vmatpush1.msra.mxu0 0.0
  %344 = vmatprep.subr.mxu0 0.0
  %345 = vmatpush1.msra.mxu0 0.0
  %346 = vmatprep.subr.mxu0 0.0
  %347 = vmatpush1.msra.mxu0 0.0
  %348 = vmatprep.subr.mxu0 0.0
  %349 = vmatpush1.msra.mxu0 0.0
  %350 = vmatprep.subr.mxu0 0.0
  %351 = vmatpush1.msra.mxu0 0.0
  %352 = vmatprep.subr.mxu0 0.0
  %353 = vmatpush1.msra.mxu0 0.0
  %354 = vmatprep.subr.mxu0 0.0
  %355 = vmatpush1.msra.mxu0 0.0
  %356 = vmatprep.subr.mxu0 0.0
  %357 = vmatpush1.msra.mxu0 0.0
  %358 = vmatprep.subr.mxu0 0.0
  %359 = vmatpush1.msra.mxu0 0.0
  %360 = vmatprep.subr.mxu0 0.0
  %361 = vmatpush1.msra.mxu0 0.0
  %362 = vmatprep.subr.mxu0 0.0
  %363 = vmatpush1.msra.mxu0 0.0
  %364 = vmatprep.subr.mxu0 0.0
  %365 = vmatpush1.msra.mxu0 0.0
  %366 = vmatprep.subr.mxu0 0.0
  %367 = vmatpush1.msra.mxu0 0.0
  %368 = vmatprep.subr.mxu0 0.0
  %369 = vmatpush1.msra.mxu0 0.0
  %370 = vmatprep.subr.mxu0 0.0
  %371 = vmatpush1.msra.mxu0 0.0
  %372 = vmatprep.subr.mxu0 0.0
  %373 = vmatpush1.msra.mxu0 0.0
  %374 = vmatprep.subr.mxu0 0.0
  %375 = vmatpush1.msra.mxu0 0.0
  %376 = vmatprep.subr.mxu0 0.0
  %377 = vmatpush1.msra.mxu0 0.0
  %378 = vmatprep.subr.mxu0 0.0
  %379 = vmatpush1.msra.mxu0 0.0
  %380 = vmatprep.subr.mxu0 0.0
  %381 = vmatpush1.msra.mxu0 0.0
  %382 = vmatprep.subr.mxu0 0.0
  %383 = vmatpush1.msra.mxu0 0.0
  %384 = vmatprep.subr.mxu0 0.0
  %385 = vmatpush1.msra.mxu0 0.0
  %386 = vmatprep.subr.mxu0 0.0
  %387 = vmatpush1.msra.mxu0 0.0
  %388 = vmatprep.subr.mxu0 0.0
  %389 = vmatpush1.msra.mxu0 0.0
  %390 = vmatprep.subr.mxu0 0.0
  %391 = vmatpush1.msra.mxu0 0.0
  %392 = vmatprep.subr.mxu0 0.0
  %393 = vmatpush1.msra.mxu0 0.0
  %394 = vmatprep.subr.mxu0 0.0
  %395 = vmatpush1.msra.mxu0 0.0
  %396 = vmatprep.subr.mxu0 0.0
  %397 = vmatpush1.msra.mxu0 0.0
  %398 = vmatprep.subr.mxu0 0.0
  %399 = vmatpush1.msra.mxu0 0.0
  %400 = vmatprep.subr.mxu0 0.0
  %401 = vmatpush1.msra.mxu0 0.0
  %402 = vmatprep.mubr.f32.mxu0 0.0
  %403 = vmatmul.mubr.f32.gmra.mrb[0].mxu0 %v287
  %v404 = vpop.f32.mrb[0].mxu0
  %v405 = vadd.f32 %v283, %v404
  %v406 = vpop.f32.mrb[0].mxu0
  %407 = vmatprep.mubr.f32.mxu0 0.0
  %408 = vmatmul.mubr.f32.gmra.mrb[0].mxu0 %v290
  %v409 = vpop.f32.mrb[0].mxu0
  %v410 = vadd.f32 %v283, %v409
  %v411 = vpop.f32.mrb[0].mxu0
  %412 = vmatprep.mubr.f32.mxu0 0.0
  %413 = vmatmul.mubr.f32.gmra.mrb[0].mxu0 %v293
  %v414 = vpop.f32.mrb[0].mxu0
  %v415 = vadd.f32 %v283, %v414
  %v416 = vpop.f32.mrb[0].mxu0
  %417 = vmatprep.mubr.f32.mxu0 0.0
  %418 = vmatmul.mubr.f32.gmra.mrb[0].mxu0 %v296
  %v419 = vpop.f32.mrb[0].mxu0
  %v420 = vadd.f32 %v283, %v419
  %v421 = vpop.f32.mrb[0].mxu0
  %422 = vmatprep.mubr.f32.mxu0 0.0
  %423 = vmatmul.mubr.f32.gmra.mrb[0].mxu0 %v299
  %v424 = vpop.f32.mrb[0].mxu0
  %v425 = vadd.f32 %v283, %v424
  %v426 = vpop.f32.mrb[0].mxu0
  %427 = vmatprep.mubr.f32.mxu0 0.0
  %428 = vmatmul.mubr.f32.gmra.mrb[0].mxu0 %v302
  %v429 = vpop.f32.mrb[0].mxu0
  %v430 = vadd.f32 %v283, %v429
  %v431 = vpop.f32.mrb[0].mxu0
  %432 = vmatprep.mubr.f32.mxu0 0.0
  %433 = vmatmul.mubr.f32.gmra.mrb[0].mxu0 %v305
  %v434 = vpop.f32.mrb[0].mxu0
  %v435 = vadd.f32 %v283, %v434
  %v436 = vpop.f32.mrb[0].mxu0
  %437 = vmatprep.mubr.f32.mxu0 0.0
  %438 = vmatmul.mubr.f32.gmra.mrb[0].mxu0 %v308
  %v439 = vpop.f32.mrb[0].mxu0
  %v440 = vadd.f32 %v283, %v439
  %v441 = vpop.f32.mrb[0].mxu0
  %442 = vmatprep.mubr.f32.mxu0 0.0
  %443 = vmatmul.mubr.f32.gmra.mrb[0].mxu0 %v311
  %v444 = vpop.f32.mrb[0].mxu0
  %v445 = vadd.f32 %v283, %v444
  %v446 = vpop.f32.mrb[0].mxu0
  %447 = vmatprep.mubr.f32.mxu0 0.0
  %448 = vmatmul.mubr.f32.gmra.mrb[0].mxu0 %v314
  %v449 = vpop.f32.mrb[0].mxu0
  %v450 = vadd.f32 %v283, %v449
  %v451 = vpop.f32.mrb[0].mxu0
  %452 = vmatprep.mubr.f32.mxu0 0.0
  %453 = vmatmul.mubr.f32.gmra.mrb[0].mxu0 %v317
  %v454 = vpop.f32.mrb[0].mxu0
  %v455 = vadd.f32 %v283, %v454
  %v456 = vpop.f32.mrb[0].mxu0
  %457 = vmatprep.mubr.f32.mxu0 0.0
  %458 = vmatmul.mubr.f32.gmra.mrb[0].mxu0 %v320
  %v459 = vpop.f32.mrb[0].mxu0
  %v460 = vadd.f32 %v283, %v459
  %v461 = vpop.f32.mrb[0].mxu0
  %462 = vmatprep.mubr.f32.mxu0 0.0
  %463 = vmatmul.mubr.f32.gmra.mrb[0].mxu0 %v323
  %v464 = vpop.f32.mrb[0].mxu0
  %v465 = vadd.f32 %v283, %v464
  %v466 = vpop.f32.mrb[0].mxu0
  %467 = vmatprep.mubr.f32.mxu0 0.0
  %468 = vmatmul.mubr.f32.gmra.mrb[0].mxu0 %v326
  %v469 = vpop.f32.mrb[0].mxu0
  %v470 = vadd.f32 %v283, %v469
  %v471 = vpop.f32.mrb[0].mxu0
  %472 = vmatprep.mubr.f32.mxu0 0.0
  %473 = vmatmul.mubr.f32.gmra.mrb[0].mxu0 %v329
  %v474 = vpop.f32.mrb[0].mxu0
  %v475 = vadd.f32 %v283, %v474
  %v476 = vpop.f32.mrb[0].mxu0
  %477 = vmatprep.mubr.f32.mxu0 0.0
  %478 = vmatmul.mubr.f32.gmra.mrb[0].mxu0 %v332
  %v479 = vpop.f32.mrb[0].mxu0
  %v480 = vadd.f32 %v283, %v479
  %v481 = vpop.f32.mrb[0].mxu0
  %482 = vdwg.mxu0
  %v483 = vmax.f32 %v405, 0.0
  %v484 = vmax.f32 %v410, 0.0
  %v485 = vmax.f32 %v415, 0.0
  %v486 = vmax.f32 %v420, 0.0
  %v487 = vmax.f32 %v425, 0.0
  %v488 = vmax.f32 %v430, 0.0
  %v489 = vmax.f32 %v435, 0.0
  %v490 = vmax.f32 %v440, 0.0
  %v491 = vmax.f32 %v445, 0.0
  %v492 = vmax.f32 %v450, 0.0
  %v493 = vmax.f32 %v455, 0.0
  %v494 = vmax.f32 %v460, 0.0
  %v495 = vmax.f32 %v465, 0.0
  %v496 = vmax.f32 %v470, 0.0
  %v497 = vmax.f32 %v475, 0.0
  %v498 = vmax.f32 %v480, 0.0
  %v499 = vld [vmem:[%s5] sm:$0xf]
  %v501 = vsel %vm285, %v483, 0
  %v504 = vsel %vm285, %v484, 0
  %v507 = vsel %vm285, %v485, 0
  %v510 = vsel %vm285, %v486, 0
  %v513 = vsel %vm285, %v487, 0
  %v516 = vsel %vm285, %v488, 0
  %v519 = vsel %vm285, %v489, 0
  %v522 = vsel %vm285, %v490, 0
  %v525 = vsel %vm285, %v491, 0
  %v528 = vsel %vm285, %v492, 0
  %v531 = vsel %vm285, %v493, 0
  %v534 = vsel %vm285, %v494, 0
  %v537 = vsel %vm285, %v495, 0
  %v540 = vsel %vm285, %v496, 0
  %v543 = vsel %vm285, %v497, 0
  %v546 = vsel %vm285, %v498, 0
  %v549 = vsel %vm334, %v499, 0
  %551 = vmatprep.subr.mxu0 0.0
  %552 = vmatpush1.msra.mxu0 %v549
  %553 = vmatprep.subr.mxu0 0.0
  %554 = vmatpush1.msra.mxu0 0.0
  %555 = vmatprep.subr.mxu0 0.0
  %556 = vmatpush1.msra.mxu0 0.0
  %557 = vmatprep.subr.mxu0 0.0
  %558 = vmatpush1.msra.mxu0 0.0
  %559 = vmatprep.subr.mxu0 0.0
  %560 = vmatpush1.msra.mxu0 0.0
  %561 = vmatprep.subr.mxu0 0.0
  %562 = vmatpush1.msra.mxu0 0.0
  %563 = vmatprep.subr.mxu0 0.0
  %564 = vmatpush1.msra.mxu0 0.0
  %565 = vmatprep.subr.mxu0 0.0
  %566 = vmatpush1.msra.mxu0 0.0
  %567 = vmatprep.subr.mxu0 0.0
  %568 = vmatpush1.msra.mxu0 0.0
  %569 = vmatprep.subr.mxu0 0.0
  %570 = vmatpush1.msra.mxu0 0.0
  %571 = vmatprep.subr.mxu0 0.0
  %572 = vmatpush1.msra.mxu0 0.0
  %573 = vmatprep.subr.mxu0 0.0
  %574 = vmatpush1.msra.mxu0 0.0
  %575 = vmatprep.subr.mxu0 0.0
  %576 = vmatpush1.msra.mxu0 0.0
  %577 = vmatprep.subr.mxu0 0.0
  %578 = vmatpush1.msra.mxu0 0.0
  %579 = vmatprep.subr.mxu0 0.0
  %580 = vmatpush1.msra.mxu0 0.0
  %581 = vmatprep.subr.mxu0 0.0
  %582 = vmatpush1.msra.mxu0 0.0
  %583 = vmatprep.subr.mxu0 0.0
  %584 = vmatpush1.msra.mxu0 0.0
  %585 = vmatprep.subr.mxu0 0.0
  %586 = vmatpush1.msra.mxu0 0.0
  %587 = vmatprep.subr.mxu0 0.0
  %588 = vmatpush1.msra.mxu0 0.0
  %589 = vmatprep.subr.mxu0 0.0
  %590 = vmatpush1.msra.mxu0 0.0
  %591 = vmatprep.subr.mxu0 0.0
  %592 = vmatpush1.msra.mxu0 0.0
  %593 = vmatprep.subr.mxu0 0.0
  %594 = vmatpush1.msra.mxu0 0.0
  %595 = vmatprep.subr.mxu0 0.0
  %596 = vmatpush1.msra.mxu0 0.0
  %597 = vmatprep.subr.mxu0 0.0
  %598 = vmatpush1.msra.mxu0 0.0
  %599 = vmatprep.subr.mxu0 0.0
  %600 = vmatpush1.msra.mxu0 0.0
  %601 = vmatprep.subr.mxu0 0.0
  %602 = vmatpush1.msra.mxu0 0.0
  %603 = vmatprep.subr.mxu0 0.0
  %604 = vmatpush1.msra.mxu0 0.0
  %605 = vmatprep.subr.mxu0 0.0
  %606 = vmatpush1.msra.mxu0 0.0
  %607 = vmatprep.subr.mxu0 0.0
  %608 = vmatpush1.msra.mxu0 0.0
  %609 = vmatprep.subr.mxu0 0.0
  %610 = vmatpush1.msra.mxu0 0.0
  %611 = vmatprep.subr.mxu0 0.0
  %612 = vmatpush1.msra.mxu0 0.0
  %613 = vmatprep.subr.mxu0 0.0
  %614 = vmatpush1.msra.mxu0 0.0
  %615 = vmatprep.mubr.f32.mxu0 0.0
  %616 = vmatmul.mubr.f32.gmra.mrb[0].mxu0 %v501
  %v617 = vpop.f32.mrb[0].mxu0
  %v618 = vadd.f32 0.0, %v617
  %v619 = vpop.f32.mrb[0].mxu0
  %620 = vmatprep.mubr.f32.mxu0 0.0
  %621 = vmatmul.mubr.f32.gmra.mrb[0].mxu0 %v504
  %v622 = vpop.f32.mrb[0].mxu0
  %v623 = vadd.f32 0.0, %v622
  %v624 = vpop.f32.mrb[0].mxu0
  %625 = vmatprep.mubr.f32.mxu0 0.0
  %626 = vmatmul.mubr.f32.gmra.mrb[0].mxu0 %v507
  %v627 = vpop.f32.mrb[0].mxu0
  %v628 = vadd.f32 0.0, %v627
  %v629 = vpop.f32.mrb[0].mxu0
  %630 = vmatprep.mubr.f32.mxu0 0.0
  %631 = vmatmul.mubr.f32.gmra.mrb[0].mxu0 %v510
  %v632 = vpop.f32.mrb[0].mxu0
  %v633 = vadd.f32 0.0, %v632
  %v634 = vpop.f32.mrb[0].mxu0
  %635 = vmatprep.mubr.f32.mxu0 0.0
  %636 = vmatmul.mubr.f32.gmra.mrb[0].mxu0 %v513
  %v637 = vpop.f32.mrb[0].mxu0
  %v638 = vadd.f32 0.0, %v637
  %v639 = vpop.f32.mrb[0].mxu0
  %640 = vmatprep.mubr.f32.mxu0 0.0
  %641 = vmatmul.mubr.f32.gmra.mrb[0].mxu0 %v516
  %v642 = vpop.f32.mrb[0].mxu0
  %v643 = vadd.f32 0.0, %v642
  %v644 = vpop.f32.mrb[0].mxu0
  %645 = vmatprep.mubr.f32.mxu0 0.0
  %646 = vmatmul.mubr.f32.gmra.mrb[0].mxu0 %v519
  %v647 = vpop.f32.mrb[0].mxu0
  %v648 = vadd.f32 0.0, %v647
  %v649 = vpop.f32.mrb[0].mxu0
  %650 = vmatprep.mubr.f32.mxu0 0.0
  %651 = vmatmul.mubr.f32.gmra.mrb[0].mxu0 %v522
  %v652 = vpop.f32.mrb[0].mxu0
  %v653 = vadd.f32 0.0, %v652
  %v654 = vpop.f32.mrb[0].mxu0
  %655 = vmatprep.mubr.f32.mxu0 0.0
  %656 = vmatmul.mubr.f32.gmra.mrb[0].mxu0 %v525
  %v657 = vpop.f32.mrb[0].mxu0
  %v658 = vadd.f32 0.0, %v657
  %v659 = vpop.f32.mrb[0].mxu0
  %660 = vmatprep.mubr.f32.mxu0 0.0
  %661 = vmatmul.mubr.f32.gmra.mrb[0].mxu0 %v528
  %v662 = vpop.f32.mrb[0].mxu0
  %v663 = vadd.f32 0.0, %v662
  %v664 = vpop.f32.mrb[0].mxu0
  %665 = vmatprep.mubr.f32.mxu0 0.0
  %666 = vmatmul.mubr.f32.gmra.mrb[0].mxu0 %v531
  %v667 = vpop.f32.mrb[0].mxu0
  %v668 = vadd.f32 0.0, %v667
  %v669 = vpop.f32.mrb[0].mxu0
  %670 = vmatprep.mubr.f32.mxu0 0.0
  %671 = vmatmul.mubr.f32.gmra.mrb[0].mxu0 %v534
  %v672 = vpop.f32.mrb[0].mxu0
  %v673 = vadd.f32 0.0, %v672
  %v674 = vpop.f32.mrb[0].mxu0
  %675 = vmatprep.mubr.f32.mxu0 0.0
  %676 = vmatmul.mubr.f32.gmra.mrb[0].mxu0 %v537
  %v677 = vpop.f32.mrb[0].mxu0
  %v678 = vadd.f32 0.0, %v677
  %v679 = vpop.f32.mrb[0].mxu0
  %680 = vmatprep.mubr.f32.mxu0 0.0
  %681 = vmatmul.mubr.f32.gmra.mrb[0].mxu0 %v540
  %v682 = vpop.f32.mrb[0].mxu0
  %v683 = vadd.f32 0.0, %v682
  %v684 = vpop.f32.mrb[0].mxu0
  %685 = vmatprep.mubr.f32.mxu0 0.0
  %686 = vmatmul.mubr.f32.gmra.mrb[0].mxu0 %v543
  %v687 = vpop.f32.mrb[0].mxu0
  %v688 = vadd.f32 0.0, %v687
  %v689 = vpop.f32.mrb[0].mxu0
  %690 = vmatprep.mubr.f32.mxu0 0.0
  %691 = vmatmul.mubr.f32.gmra.mrb[0].mxu0 %v546
  %v692 = vpop.f32.mrb[0].mxu0
  %v693 = vadd.f32 0.0, %v692
  %v694 = vpop.f32.mrb[0].mxu0
  %695 = vdwg.mxu0
  %696 = vrot.lane.b32.xlu0 %v483, 124
  %v697 = vpop.permute.xlu0 %696
  %698 = vrot.lane.b32.xlu0 %v484, 124
  %v699 = vpop.permute.xlu0 %698
  %700 = vrot.lane.b32.xlu0 %v485, 124
  %v701 = vpop.permute.xlu0 %700
  %702 = vrot.lane.b32.xlu0 %v486, 124
  %v703 = vpop.permute.xlu0 %702
  %704 = vrot.lane.b32.xlu0 %v487, 124
  %v705 = vpop.permute.xlu0 %704
  %706 = vrot.lane.b32.xlu0 %v488, 124
  %v707 = vpop.permute.xlu0 %706
  %708 = vrot.lane.b32.xlu0 %v489, 124
  %v709 = vpop.permute.xlu0 %708
  %710 = vrot.lane.b32.xlu0 %v490, 124
  %v711 = vpop.permute.xlu0 %710
  %712 = vrot.lane.b32.xlu0 %v491, 124
  %v713 = vpop.permute.xlu0 %712
  %714 = vrot.lane.b32.xlu0 %v492, 124
  %v715 = vpop.permute.xlu0 %714
  %716 = vrot.lane.b32.xlu0 %v493, 124
  %v717 = vpop.permute.xlu0 %716
  %718 = vrot.lane.b32.xlu0 %v494, 124
  %v719 = vpop.permute.xlu0 %718
  %720 = vrot.lane.b32.xlu0 %v495, 124
  %v721 = vpop.permute.xlu0 %720
  %722 = vrot.lane.b32.xlu0 %v496, 124
  %v723 = vpop.permute.xlu0 %722
  %724 = vrot.lane.b32.xlu0 %v497, 124
  %v725 = vpop.permute.xlu0 %724
  %726 = vrot.lane.b32.xlu0 %v498, 124
  %v727 = vpop.permute.xlu0 %726
  %v728 = vsel %vm285, %v697, 0
  %v730 = vsel %vm285, %v699, 0
  %v732 = vsel %vm285, %v701, 0
  %v734 = vsel %vm285, %v703, 0
  %v736 = vsel %vm285, %v705, 0
  %v738 = vsel %vm285, %v707, 0
  %v740 = vsel %vm285, %v709, 0
  %v742 = vsel %vm285, %v711, 0
  %v744 = vsel %vm285, %v713, 0
  %v746 = vsel %vm285, %v715, 0
  %v748 = vsel %vm285, %v717, 0
  %v750 = vsel %vm285, %v719, 0
  %v752 = vsel %vm285, %v721, 0
  %v754 = vsel %vm285, %v723, 0
  %v756 = vsel %vm285, %v725, 0
  %v758 = vsel %vm285, %v727, 0
  %760 = vmatprep.subr.mxu0 0.0
  %761 = vmatpush1.msra.mxu0 %v549
  %762 = vmatprep.subr.mxu0 0.0
  %763 = vmatpush1.msra.mxu0 0.0
  %764 = vmatprep.subr.mxu0 0.0
  %765 = vmatpush1.msra.mxu0 0.0
  %766 = vmatprep.subr.mxu0 0.0
  %767 = vmatpush1.msra.mxu0 0.0
  %768 = vmatprep.subr.mxu0 0.0
  %769 = vmatpush1.msra.mxu0 0.0
  %770 = vmatprep.subr.mxu0 0.0
  %771 = vmatpush1.msra.mxu0 0.0
  %772 = vmatprep.subr.mxu0 0.0
  %773 = vmatpush1.msra.mxu0 0.0
  %774 = vmatprep.subr.mxu0 0.0
  %775 = vmatpush1.msra.mxu0 0.0
  %776 = vmatprep.subr.mxu0 0.0
  %777 = vmatpush1.msra.mxu0 0.0
  %778 = vmatprep.subr.mxu0 0.0
  %779 = vmatpush1.msra.mxu0 0.0
  %780 = vmatprep.subr.mxu0 0.0
  %781 = vmatpush1.msra.mxu0 0.0
  %782 = vmatprep.subr.mxu0 0.0
  %783 = vmatpush1.msra.mxu0 0.0
  %784 = vmatprep.subr.mxu0 0.0
  %785 = vmatpush1.msra.mxu0 0.0
  %786 = vmatprep.subr.mxu0 0.0
  %787 = vmatpush1.msra.mxu0 0.0
  %788 = vmatprep.subr.mxu0 0.0
  %789 = vmatpush1.msra.mxu0 0.0
  %790 = vmatprep.subr.mxu0 0.0
  %791 = vmatpush1.msra.mxu0 0.0
  %792 = vmatprep.subr.mxu0 0.0
  %793 = vmatpush1.msra.mxu0 0.0
  %794 = vmatprep.subr.mxu0 0.0
  %795 = vmatpush1.msra.mxu0 0.0
  %796 = vmatprep.subr.mxu0 0.0
  %797 = vmatpush1.msra.mxu0 0.0
  %798 = vmatprep.subr.mxu0 0.0
  %799 = vmatpush1.msra.mxu0 0.0
  %800 = vmatprep.subr.mxu0 0.0
  %801 = vmatpush1.msra.mxu0 0.0
  %802 = vmatprep.subr.mxu0 0.0
  %803 = vmatpush1.msra.mxu0 0.0
  %804 = vmatprep.subr.mxu0 0.0
  %805 = vmatpush1.msra.mxu0 0.0
  %806 = vmatprep.subr.mxu0 0.0
  %807 = vmatpush1.msra.mxu0 0.0
  %808 = vmatprep.subr.mxu0 0.0
  %809 = vmatpush1.msra.mxu0 0.0
  %810 = vmatprep.subr.mxu0 0.0
  %811 = vmatpush1.msra.mxu0 0.0
  %812 = vmatprep.subr.mxu0 0.0
  %813 = vmatpush1.msra.mxu0 0.0
  %814 = vmatprep.subr.mxu0 0.0
  %815 = vmatpush1.msra.mxu0 0.0
  %816 = vmatprep.subr.mxu0 0.0
  %817 = vmatpush1.msra.mxu0 0.0
  %818 = vmatprep.subr.mxu0 0.0
  %819 = vmatpush1.msra.mxu0 0.0
  %820 = vmatprep.subr.mxu0 0.0
  %821 = vmatpush1.msra.mxu0 0.0
  %822 = vmatprep.subr.mxu0 0.0
  %823 = vmatpush1.msra.mxu0 0.0
  %824 = vmatprep.mubr.f32.mxu0 0.0
  %825 = vmatmul.mubr.f32.gmra.mrb[0].mxu0 %v728
  %v826 = vpop.f32.mrb[0].mxu0
  %v827 = vadd.f32 0.0, %v826
  %v828 = vpop.f32.mrb[0].mxu0
  %829 = vmatprep.mubr.f32.mxu0 0.0
  %830 = vmatmul.mubr.f32.gmra.mrb[0].mxu0 %v730
  %v831 = vpop.f32.mrb[0].mxu0
  %v832 = vadd.f32 0.0, %v831
  %v833 = vpop.f32.mrb[0].mxu0
  %834 = vmatprep.mubr.f32.mxu0 0.0
  %835 = vmatmul.mubr.f32.gmra.mrb[0].mxu0 %v732
  %v836 = vpop.f32.mrb[0].mxu0
  %v837 = vadd.f32 0.0, %v836
  %v838 = vpop.f32.mrb[0].mxu0
  %839 = vmatprep.mubr.f32.mxu0 0.0
  %840 = vmatmul.mubr.f32.gmra.mrb[0].mxu0 %v734
  %v841 = vpop.f32.mrb[0].mxu0
  %v842 = vadd.f32 0.0, %v841
  %v843 = vpop.f32.mrb[0].mxu0
  %844 = vmatprep.mubr.f32.mxu0 0.0
  %845 = vmatmul.mubr.f32.gmra.mrb[0].mxu0 %v736
  %v846 = vpop.f32.mrb[0].mxu0
  %v847 = vadd.f32 0.0, %v846
  %v848 = vpop.f32.mrb[0].mxu0
  %849 = vmatprep.mubr.f32.mxu0 0.0
  %850 = vmatmul.mubr.f32.gmra.mrb[0].mxu0 %v738
  %v851 = vpop.f32.mrb[0].mxu0
  %v852 = vadd.f32 0.0, %v851
  %v853 = vpop.f32.mrb[0].mxu0
  %854 = vmatprep.mubr.f32.mxu0 0.0
  %855 = vmatmul.mubr.f32.gmra.mrb[0].mxu0 %v740
  %v856 = vpop.f32.mrb[0].mxu0
  %v857 = vadd.f32 0.0, %v856
  %v858 = vpop.f32.mrb[0].mxu0
  %859 = vmatprep.mubr.f32.mxu0 0.0
  %860 = vmatmul.mubr.f32.gmra.mrb[0].mxu0 %v742
  %v861 = vpop.f32.mrb[0].mxu0
  %v862 = vadd.f32 0.0, %v861
  %v863 = vpop.f32.mrb[0].mxu0
  %864 = vmatprep.mubr.f32.mxu0 0.0
  %865 = vmatmul.mubr.f32.gmra.mrb[0].mxu0 %v744
  %v866 = vpop.f32.mrb[0].mxu0
  %v867 = vadd.f32 0.0, %v866
  %v868 = vpop.f32.mrb[0].mxu0
  %869 = vmatprep.mubr.f32.mxu0 0.0
  %870 = vmatmul.mubr.f32.gmra.mrb[0].mxu0 %v746
  %v871 = vpop.f32.mrb[0].mxu0
  %v872 = vadd.f32 0.0, %v871
  %v873 = vpop.f32.mrb[0].mxu0
  %874 = vmatprep.mubr.f32.mxu0 0.0
  %875 = vmatmul.mubr.f32.gmra.mrb[0].mxu0 %v748
  %v876 = vpop.f32.mrb[0].mxu0
  %v877 = vadd.f32 0.0, %v876
  %v878 = vpop.f32.mrb[0].mxu0
  %879 = vmatprep.mubr.f32.mxu0 0.0
  %880 = vmatmul.mubr.f32.gmra.mrb[0].mxu0 %v750
  %v881 = vpop.f32.mrb[0].mxu0
  %v882 = vadd.f32 0.0, %v881
  %v883 = vpop.f32.mrb[0].mxu0
  %884 = vmatprep.mubr.f32.mxu0 0.0
  %885 = vmatmul.mubr.f32.gmra.mrb[0].mxu0 %v752
  %v886 = vpop.f32.mrb[0].mxu0
  %v887 = vadd.f32 0.0, %v886
  %v888 = vpop.f32.mrb[0].mxu0
  %889 = vmatprep.mubr.f32.mxu0 0.0
  %890 = vmatmul.mubr.f32.gmra.mrb[0].mxu0 %v754
  %v891 = vpop.f32.mrb[0].mxu0
  %v892 = vadd.f32 0.0, %v891
  %v893 = vpop.f32.mrb[0].mxu0
  %894 = vmatprep.mubr.f32.mxu0 0.0
  %895 = vmatmul.mubr.f32.gmra.mrb[0].mxu0 %v756
  %v896 = vpop.f32.mrb[0].mxu0
  %v897 = vadd.f32 0.0, %v896
  %v898 = vpop.f32.mrb[0].mxu0
  %899 = vmatprep.mubr.f32.mxu0 0.0
  %900 = vmatmul.mubr.f32.gmra.mrb[0].mxu0 %v758
  %v901 = vpop.f32.mrb[0].mxu0
  %v902 = vadd.f32 0.0, %v901
  %v903 = vpop.f32.mrb[0].mxu0
  %904 = vdwg.mxu0
  %905 = vrot.lane.b32.xlu0 %v483, 120
  %v906 = vpop.permute.xlu0 %905
  %907 = vrot.lane.b32.xlu0 %v484, 120
  %v908 = vpop.permute.xlu0 %907
  %909 = vrot.lane.b32.xlu0 %v485, 120
  %v910 = vpop.permute.xlu0 %909
  %911 = vrot.lane.b32.xlu0 %v486, 120
  %v912 = vpop.permute.xlu0 %911
  %913 = vrot.lane.b32.xlu0 %v487, 120
  %v914 = vpop.permute.xlu0 %913
  %915 = vrot.lane.b32.xlu0 %v488, 120
  %v916 = vpop.permute.xlu0 %915
  %917 = vrot.lane.b32.xlu0 %v489, 120
  %v918 = vpop.permute.xlu0 %917
  %919 = vrot.lane.b32.xlu0 %v490, 120
  %v920 = vpop.permute.xlu0 %919
  %921 = vrot.lane.b32.xlu0 %v491, 120
  %v922 = vpop.permute.xlu0 %921
  %923 = vrot.lane.b32.xlu0 %v492, 120
  %v924 = vpop.permute.xlu0 %923
  %925 = vrot.lane.b32.xlu0 %v493, 120
  %v926 = vpop.permute.xlu0 %925
  %927 = vrot.lane.b32.xlu0 %v494, 120
  %v928 = vpop.permute.xlu0 %927
  %929 = vrot.lane.b32.xlu0 %v495, 120
  %v930 = vpop.permute.xlu0 %929
  %931 = vrot.lane.b32.xlu0 %v496, 120
  %v932 = vpop.permute.xlu0 %931
  %933 = vrot.lane.b32.xlu0 %v497, 120
  %v934 = vpop.permute.xlu0 %933
  %935 = vrot.lane.b32.xlu0 %v498, 120
  %v936 = vpop.permute.xlu0 %935
  %v937 = vsel %vm285, %v906, 0
  %v939 = vsel %vm285, %v908, 0
  %v941 = vsel %vm285, %v910, 0
  %v943 = vsel %vm285, %v912, 0
  %v945 = vsel %vm285, %v914, 0
  %v947 = vsel %vm285, %v916, 0
  %v949 = vsel %vm285, %v918, 0
  %v951 = vsel %vm285, %v920, 0
  %v953 = vsel %vm285, %v922, 0
  %v955 = vsel %vm285, %v924, 0
  %v957 = vsel %vm285, %v926, 0
  %v959 = vsel %vm285, %v928, 0
  %v961 = vsel %vm285, %v930, 0
  %v963 = vsel %vm285, %v932, 0
  %v965 = vsel %vm285, %v934, 0
  %v967 = vsel %vm285, %v936, 0
  %969 = vmatprep.subr.mxu0 0.0
  %970 = vmatpush1.msra.mxu0 %v549
  %971 = vmatprep.subr.mxu0 0.0
  %972 = vmatpush1.msra.mxu0 0.0
  %973 = vmatprep.subr.mxu0 0.0
  %974 = vmatpush1.msra.mxu0 0.0
  %975 = vmatprep.subr.mxu0 0.0
  %976 = vmatpush1.msra.mxu0 0.0
  %977 = vmatprep.subr.mxu0 0.0
  %978 = vmatpush1.msra.mxu0 0.0
  %979 = vmatprep.subr.mxu0 0.0
  %980 = vmatpush1.msra.mxu0 0.0
  %981 = vmatprep.subr.mxu0 0.0
  %982 = vmatpush1.msra.mxu0 0.0
  %983 = vmatprep.subr.mxu0 0.0
  %984 = vmatpush1.msra.mxu0 0.0
  %985 = vmatprep.subr.mxu0 0.0
  %986 = vmatpush1.msra.mxu0 0.0
  %987 = vmatprep.subr.mxu0 0.0
  %988 = vmatpush1.msra.mxu0 0.0
  %989 = vmatprep.subr.mxu0 0.0
  %990 = vmatpush1.msra.mxu0 0.0
  %991 = vmatprep.subr.mxu0 0.0
  %992 = vmatpush1.msra.mxu0 0.0
  %993 = vmatprep.subr.mxu0 0.0
  %994 = vmatpush1.msra.mxu0 0.0
  %995 = vmatprep.subr.mxu0 0.0
  %996 = vmatpush1.msra.mxu0 0.0
  %997 = vmatprep.subr.mxu0 0.0
  %998 = vmatpush1.msra.mxu0 0.0
  %999 = vmatprep.subr.mxu0 0.0
  %1000 = vmatpush1.msra.mxu0 0.0
  %1001 = vmatprep.subr.mxu0 0.0
  %1002 = vmatpush1.msra.mxu0 0.0
  %1003 = vmatprep.subr.mxu0 0.0
  %1004 = vmatpush1.msra.mxu0 0.0
  %1005 = vmatprep.subr.mxu0 0.0
  %1006 = vmatpush1.msra.mxu0 0.0
  %1007 = vmatprep.subr.mxu0 0.0
  %1008 = vmatpush1.msra.mxu0 0.0
  %1009 = vmatprep.subr.mxu0 0.0
  %1010 = vmatpush1.msra.mxu0 0.0
  %1011 = vmatprep.subr.mxu0 0.0
  %1012 = vmatpush1.msra.mxu0 0.0
  %1013 = vmatprep.subr.mxu0 0.0
  %1014 = vmatpush1.msra.mxu0 0.0
  %1015 = vmatprep.subr.mxu0 0.0
  %1016 = vmatpush1.msra.mxu0 0.0
  %1017 = vmatprep.subr.mxu0 0.0
  %1018 = vmatpush1.msra.mxu0 0.0
  %1019 = vmatprep.subr.mxu0 0.0
  %1020 = vmatpush1.msra.mxu0 0.0
  %1021 = vmatprep.subr.mxu0 0.0
  %1022 = vmatpush1.msra.mxu0 0.0
  %1023 = vmatprep.subr.mxu0 0.0
  %1024 = vmatpush1.msra.mxu0 0.0
  %1025 = vmatprep.subr.mxu0 0.0
  %1026 = vmatpush1.msra.mxu0 0.0
  %1027 = vmatprep.subr.mxu0 0.0
  %1028 = vmatpush1.msra.mxu0 0.0
  %1029 = vmatprep.subr.mxu0 0.0
  %1030 = vmatpush1.msra.mxu0 0.0
  %1031 = vmatprep.subr.mxu0 0.0
  %1032 = vmatpush1.msra.mxu0 0.0
  %1033 = vmatprep.mubr.f32.mxu0 0.0
  %1034 = vmatmul.mubr.f32.gmra.mrb[0].mxu0 %v937
  %v1035 = vpop.f32.mrb[0].mxu0
  %v1036 = vadd.f32 0.0, %v1035
  %v1037 = vpop.f32.mrb[0].mxu0
  %1038 = vmatprep.mubr.f32.mxu0 0.0
  %1039 = vmatmul.mubr.f32.gmra.mrb[0].mxu0 %v939
  %v1040 = vpop.f32.mrb[0].mxu0
  %v1041 = vadd.f32 0.0, %v1040
  %v1042 = vpop.f32.mrb[0].mxu0
  %1043 = vmatprep.mubr.f32.mxu0 0.0
  %1044 = vmatmul.mubr.f32.gmra.mrb[0].mxu0 %v941
  %v1045 = vpop.f32.mrb[0].mxu0
  %v1046 = vadd.f32 0.0, %v1045
  %v1047 = vpop.f32.mrb[0].mxu0
  %1048 = vmatprep.mubr.f32.mxu0 0.0
  %1049 = vmatmul.mubr.f32.gmra.mrb[0].mxu0 %v943
  %v1050 = vpop.f32.mrb[0].mxu0
  %v1051 = vadd.f32 0.0, %v1050
  %v1052 = vpop.f32.mrb[0].mxu0
  %1053 = vmatprep.mubr.f32.mxu0 0.0
  %1054 = vmatmul.mubr.f32.gmra.mrb[0].mxu0 %v945
  %v1055 = vpop.f32.mrb[0].mxu0
  %v1056 = vadd.f32 0.0, %v1055
  %v1057 = vpop.f32.mrb[0].mxu0
  %1058 = vmatprep.mubr.f32.mxu0 0.0
  %1059 = vmatmul.mubr.f32.gmra.mrb[0].mxu0 %v947
  %v1060 = vpop.f32.mrb[0].mxu0
  %v1061 = vadd.f32 0.0, %v1060
  %v1062 = vpop.f32.mrb[0].mxu0
  %1063 = vmatprep.mubr.f32.mxu0 0.0
  %1064 = vmatmul.mubr.f32.gmra.mrb[0].mxu0 %v949
  %v1065 = vpop.f32.mrb[0].mxu0
  %v1066 = vadd.f32 0.0, %v1065
  %v1067 = vpop.f32.mrb[0].mxu0
  %1068 = vmatprep.mubr.f32.mxu0 0.0
  %1069 = vmatmul.mubr.f32.gmra.mrb[0].mxu0 %v951
  %v1070 = vpop.f32.mrb[0].mxu0
  %v1071 = vadd.f32 0.0, %v1070
  %v1072 = vpop.f32.mrb[0].mxu0
  %1073 = vmatprep.mubr.f32.mxu0 0.0
  %1074 = vmatmul.mubr.f32.gmra.mrb[0].mxu0 %v953
  %v1075 = vpop.f32.mrb[0].mxu0
  %v1076 = vadd.f32 0.0, %v1075
  %v1077 = vpop.f32.mrb[0].mxu0
  %1078 = vmatprep.mubr.f32.mxu0 0.0
  %1079 = vmatmul.mubr.f32.gmra.mrb[0].mxu0 %v955
  %v1080 = vpop.f32.mrb[0].mxu0
  %v1081 = vadd.f32 0.0, %v1080
  %v1082 = vpop.f32.mrb[0].mxu0
  %1083 = vmatprep.mubr.f32.mxu0 0.0
  %1084 = vmatmul.mubr.f32.gmra.mrb[0].mxu0 %v957
  %v1085 = vpop.f32.mrb[0].mxu0
  %v1086 = vadd.f32 0.0, %v1085
  %v1087 = vpop.f32.mrb[0].mxu0
  %1088 = vmatprep.mubr.f32.mxu0 0.0
  %1089 = vmatmul.mubr.f32.gmra.mrb[0].mxu0 %v959
  %v1090 = vpop.f32.mrb[0].mxu0
  %v1091 = vadd.f32 0.0, %v1090
  %v1092 = vpop.f32.mrb[0].mxu0
  %1093 = vmatprep.mubr.f32.mxu0 0.0
  %1094 = vmatmul.mubr.f32.gmra.mrb[0].mxu0 %v961
  %v1095 = vpop.f32.mrb[0].mxu0
  %v1096 = vadd.f32 0.0, %v1095
  %v1097 = vpop.f32.mrb[0].mxu0
  %1098 = vmatprep.mubr.f32.mxu0 0.0
  %1099 = vmatmul.mubr.f32.gmra.mrb[0].mxu0 %v963
  %v1100 = vpop.f32.mrb[0].mxu0
  %v1101 = vadd.f32 0.0, %v1100
  %v1102 = vpop.f32.mrb[0].mxu0
  %1103 = vmatprep.mubr.f32.mxu0 0.0
  %1104 = vmatmul.mubr.f32.gmra.mrb[0].mxu0 %v965
  %v1105 = vpop.f32.mrb[0].mxu0
  %v1106 = vadd.f32 0.0, %v1105
  %v1107 = vpop.f32.mrb[0].mxu0
  %1108 = vmatprep.mubr.f32.mxu0 0.0
  %1109 = vmatmul.mubr.f32.gmra.mrb[0].mxu0 %v967
  %v1110 = vpop.f32.mrb[0].mxu0
  %v1111 = vadd.f32 0.0, %v1110
  %v1112 = vpop.f32.mrb[0].mxu0
  %1113 = vdwg.mxu0
  %1114 = vrot.lane.b32.xlu0 %v483, 116
  %v1115 = vpop.permute.xlu0 %1114
  %1116 = vrot.lane.b32.xlu0 %v484, 116
  %v1117 = vpop.permute.xlu0 %1116
  %1118 = vrot.lane.b32.xlu0 %v485, 116
  %v1119 = vpop.permute.xlu0 %1118
  %1120 = vrot.lane.b32.xlu0 %v486, 116
  %v1121 = vpop.permute.xlu0 %1120
  %1122 = vrot.lane.b32.xlu0 %v487, 116
  %v1123 = vpop.permute.xlu0 %1122
  %1124 = vrot.lane.b32.xlu0 %v488, 116
  %v1125 = vpop.permute.xlu0 %1124
  %1126 = vrot.lane.b32.xlu0 %v489, 116
  %v1127 = vpop.permute.xlu0 %1126
  %1128 = vrot.lane.b32.xlu0 %v490, 116
  %v1129 = vpop.permute.xlu0 %1128
  %1130 = vrot.lane.b32.xlu0 %v491, 116
  %v1131 = vpop.permute.xlu0 %1130
  %1132 = vrot.lane.b32.xlu0 %v492, 116
  %v1133 = vpop.permute.xlu0 %1132
  %1134 = vrot.lane.b32.xlu0 %v493, 116
  %v1135 = vpop.permute.xlu0 %1134
  %1136 = vrot.lane.b32.xlu0 %v494, 116
  %v1137 = vpop.permute.xlu0 %1136
  %1138 = vrot.lane.b32.xlu0 %v495, 116
  %v1139 = vpop.permute.xlu0 %1138
  %1140 = vrot.lane.b32.xlu0 %v496, 116
  %v1141 = vpop.permute.xlu0 %1140
  %1142 = vrot.lane.b32.xlu0 %v497, 116
  %v1143 = vpop.permute.xlu0 %1142
  %1144 = vrot.lane.b32.xlu0 %v498, 116
  %v1145 = vpop.permute.xlu0 %1144
  %v1146 = vsel %vm285, %v1115, 0
  %v1148 = vsel %vm285, %v1117, 0
  %v1150 = vsel %vm285, %v1119, 0
  %v1152 = vsel %vm285, %v1121, 0
  %v1154 = vsel %vm285, %v1123, 0
  %v1156 = vsel %vm285, %v1125, 0
  %v1158 = vsel %vm285, %v1127, 0
  %v1160 = vsel %vm285, %v1129, 0
  %v1162 = vsel %vm285, %v1131, 0
  %v1164 = vsel %vm285, %v1133, 0
  %v1166 = vsel %vm285, %v1135, 0
  %v1168 = vsel %vm285, %v1137, 0
  %v1170 = vsel %vm285, %v1139, 0
  %v1172 = vsel %vm285, %v1141, 0
  %v1174 = vsel %vm285, %v1143, 0
  %v1176 = vsel %vm285, %v1145, 0
  %1178 = vmatprep.subr.mxu0 0.0
  %1179 = vmatpush1.msra.mxu0 %v549
  %1180 = vmatprep.subr.mxu0 0.0
  %1181 = vmatpush1.msra.mxu0 0.0
  %1182 = vmatprep.subr.mxu0 0.0
  %1183 = vmatpush1.msra.mxu0 0.0
  %1184 = vmatprep.subr.mxu0 0.0
  %1185 = vmatpush1.msra.mxu0 0.0
  %1186 = vmatprep.subr.mxu0 0.0
  %1187 = vmatpush1.msra.mxu0 0.0
  %1188 = vmatprep.subr.mxu0 0.0
  %1189 = vmatpush1.msra.mxu0 0.0
  %1190 = vmatprep.subr.mxu0 0.0
  %1191 = vmatpush1.msra.mxu0 0.0
  %1192 = vmatprep.subr.mxu0 0.0
  %1193 = vmatpush1.msra.mxu0 0.0
  %1194 = vmatprep.subr.mxu0 0.0
  %1195 = vmatpush1.msra.mxu0 0.0
  %1196 = vmatprep.subr.mxu0 0.0
  %1197 = vmatpush1.msra.mxu0 0.0
  %1198 = vmatprep.subr.mxu0 0.0
  %1199 = vmatpush1.msra.mxu0 0.0
  %1200 = vmatprep.subr.mxu0 0.0
  %1201 = vmatpush1.msra.mxu0 0.0
  %1202 = vmatprep.subr.mxu0 0.0
  %1203 = vmatpush1.msra.mxu0 0.0
  %1204 = vmatprep.subr.mxu0 0.0
  %1205 = vmatpush1.msra.mxu0 0.0
  %1206 = vmatprep.subr.mxu0 0.0
  %1207 = vmatpush1.msra.mxu0 0.0
  %1208 = vmatprep.subr.mxu0 0.0
  %1209 = vmatpush1.msra.mxu0 0.0
  %1210 = vmatprep.subr.mxu0 0.0
  %1211 = vmatpush1.msra.mxu0 0.0
  %1212 = vmatprep.subr.mxu0 0.0
  %1213 = vmatpush1.msra.mxu0 0.0
  %1214 = vmatprep.subr.mxu0 0.0
  %1215 = vmatpush1.msra.mxu0 0.0
  %1216 = vmatprep.subr.mxu0 0.0
  %1217 = vmatpush1.msra.mxu0 0.0
  %1218 = vmatprep.subr.mxu0 0.0
  %1219 = vmatpush1.msra.mxu0 0.0
  %1220 = vmatprep.subr.mxu0 0.0
  %1221 = vmatpush1.msra.mxu0 0.0
  %1222 = vmatprep.subr.mxu0 0.0
  %1223 = vmatpush1.msra.mxu0 0.0
  %1224 = vmatprep.subr.mxu0 0.0
  %1225 = vmatpush1.msra.mxu0 0.0
  %1226 = vmatprep.subr.mxu0 0.0
  %1227 = vmatpush1.msra.mxu0 0.0
  %1228 = vmatprep.subr.mxu0 0.0
  %1229 = vmatpush1.msra.mxu0 0.0
  %1230 = vmatprep.subr.mxu0 0.0
  %1231 = vmatpush1.msra.mxu0 0.0
  %1232 = vmatprep.subr.mxu0 0.0
  %1233 = vmatpush1.msra.mxu0 0.0
  %1234 = vmatprep.subr.mxu0 0.0
  %1235 = vmatpush1.msra.mxu0 0.0
  %1236 = vmatprep.subr.mxu0 0.0
  %1237 = vmatpush1.msra.mxu0 0.0
  %1238 = vmatprep.subr.mxu0 0.0
  %1239 = vmatpush1.msra.mxu0 0.0
  %1240 = vmatprep.subr.mxu0 0.0
  %1241 = vmatpush1.msra.mxu0 0.0
  %1242 = vmatprep.mubr.f32.mxu0 0.0
  %1243 = vmatmul.mubr.f32.gmra.mrb[0].mxu0 %v1146
  %v1244 = vpop.f32.mrb[0].mxu0
  %v1245 = vadd.f32 0.0, %v1244
  %v1246 = vpop.f32.mrb[0].mxu0
  %1247 = vmatprep.mubr.f32.mxu0 0.0
  %1248 = vmatmul.mubr.f32.gmra.mrb[0].mxu0 %v1148
  %v1249 = vpop.f32.mrb[0].mxu0
  %v1250 = vadd.f32 0.0, %v1249
  %v1251 = vpop.f32.mrb[0].mxu0
  %1252 = vmatprep.mubr.f32.mxu0 0.0
  %1253 = vmatmul.mubr.f32.gmra.mrb[0].mxu0 %v1150
  %v1254 = vpop.f32.mrb[0].mxu0
  %v1255 = vadd.f32 0.0, %v1254
  %v1256 = vpop.f32.mrb[0].mxu0
  %1257 = vmatprep.mubr.f32.mxu0 0.0
  %1258 = vmatmul.mubr.f32.gmra.mrb[0].mxu0 %v1152
  %v1259 = vpop.f32.mrb[0].mxu0
  %v1260 = vadd.f32 0.0, %v1259
  %v1261 = vpop.f32.mrb[0].mxu0
  %1262 = vmatprep.mubr.f32.mxu0 0.0
  %1263 = vmatmul.mubr.f32.gmra.mrb[0].mxu0 %v1154
  %v1264 = vpop.f32.mrb[0].mxu0
  %v1265 = vadd.f32 0.0, %v1264
  %v1266 = vpop.f32.mrb[0].mxu0
  %1267 = vmatprep.mubr.f32.mxu0 0.0
  %1268 = vmatmul.mubr.f32.gmra.mrb[0].mxu0 %v1156
  %v1269 = vpop.f32.mrb[0].mxu0
  %v1270 = vadd.f32 0.0, %v1269
  %v1271 = vpop.f32.mrb[0].mxu0
  %1272 = vmatprep.mubr.f32.mxu0 0.0
  %1273 = vmatmul.mubr.f32.gmra.mrb[0].mxu0 %v1158
  %v1274 = vpop.f32.mrb[0].mxu0
  %v1275 = vadd.f32 0.0, %v1274
  %v1276 = vpop.f32.mrb[0].mxu0
  %1277 = vmatprep.mubr.f32.mxu0 0.0
  %1278 = vmatmul.mubr.f32.gmra.mrb[0].mxu0 %v1160
  %v1279 = vpop.f32.mrb[0].mxu0
  %v1280 = vadd.f32 0.0, %v1279
  %v1281 = vpop.f32.mrb[0].mxu0
  %1282 = vmatprep.mubr.f32.mxu0 0.0
  %1283 = vmatmul.mubr.f32.gmra.mrb[0].mxu0 %v1162
  %v1284 = vpop.f32.mrb[0].mxu0
  %v1285 = vadd.f32 0.0, %v1284
  %v1286 = vpop.f32.mrb[0].mxu0
  %1287 = vmatprep.mubr.f32.mxu0 0.0
  %1288 = vmatmul.mubr.f32.gmra.mrb[0].mxu0 %v1164
  %v1289 = vpop.f32.mrb[0].mxu0
  %v1290 = vadd.f32 0.0, %v1289
  %v1291 = vpop.f32.mrb[0].mxu0
  %1292 = vmatprep.mubr.f32.mxu0 0.0
  %1293 = vmatmul.mubr.f32.gmra.mrb[0].mxu0 %v1166
  %v1294 = vpop.f32.mrb[0].mxu0
  %v1295 = vadd.f32 0.0, %v1294
  %v1296 = vpop.f32.mrb[0].mxu0
  %1297 = vmatprep.mubr.f32.mxu0 0.0
  %1298 = vmatmul.mubr.f32.gmra.mrb[0].mxu0 %v1168
  %v1299 = vpop.f32.mrb[0].mxu0
  %v1300 = vadd.f32 0.0, %v1299
  %v1301 = vpop.f32.mrb[0].mxu0
  %1302 = vmatprep.mubr.f32.mxu0 0.0
  %1303 = vmatmul.mubr.f32.gmra.mrb[0].mxu0 %v1170
  %v1304 = vpop.f32.mrb[0].mxu0
  %v1305 = vadd.f32 0.0, %v1304
  %v1306 = vpop.f32.mrb[0].mxu0
  %1307 = vmatprep.mubr.f32.mxu0 0.0
  %1308 = vmatmul.mubr.f32.gmra.mrb[0].mxu0 %v1172
  %v1309 = vpop.f32.mrb[0].mxu0
  %v1310 = vadd.f32 0.0, %v1309
  %v1311 = vpop.f32.mrb[0].mxu0
  %1312 = vmatprep.mubr.f32.mxu0 0.0
  %1313 = vmatmul.mubr.f32.gmra.mrb[0].mxu0 %v1174
  %v1314 = vpop.f32.mrb[0].mxu0
  %v1315 = vadd.f32 0.0, %v1314
  %v1316 = vpop.f32.mrb[0].mxu0
  %1317 = vmatprep.mubr.f32.mxu0 0.0
  %1318 = vmatmul.mubr.f32.gmra.mrb[0].mxu0 %v1176
  %v1319 = vpop.f32.mrb[0].mxu0
  %v1320 = vadd.f32 0.0, %v1319
  %v1321 = vpop.f32.mrb[0].mxu0
  %1322 = vdwg.mxu0
  %1339 = vrot.lane.b32.xlu0 %v827, 8
  %v1340 = vpop.permute.xlu0 %1339
  %1341 = vrot.lane.b32.xlu0 %v832, 8
  %v1342 = vpop.permute.xlu0 %1341
  %1343 = vrot.lane.b32.xlu0 %v837, 8
  %v1344 = vpop.permute.xlu0 %1343
  %1345 = vrot.lane.b32.xlu0 %v842, 8
  %v1346 = vpop.permute.xlu0 %1345
  %1347 = vrot.lane.b32.xlu0 %v847, 8
  %v1348 = vpop.permute.xlu0 %1347
  %1349 = vrot.lane.b32.xlu0 %v852, 8
  %v1350 = vpop.permute.xlu0 %1349
  %1351 = vrot.lane.b32.xlu0 %v857, 8
  %v1352 = vpop.permute.xlu0 %1351
  %1353 = vrot.lane.b32.xlu0 %v862, 8
  %v1354 = vpop.permute.xlu0 %1353
  %1355 = vrot.lane.b32.xlu0 %v867, 8
  %v1356 = vpop.permute.xlu0 %1355
  %1357 = vrot.lane.b32.xlu0 %v872, 8
  %v1358 = vpop.permute.xlu0 %1357
  %1359 = vrot.lane.b32.xlu0 %v877, 8
  %v1360 = vpop.permute.xlu0 %1359
  %1361 = vrot.lane.b32.xlu0 %v882, 8
  %v1362 = vpop.permute.xlu0 %1361
  %1363 = vrot.lane.b32.xlu0 %v887, 8
  %v1364 = vpop.permute.xlu0 %1363
  %1365 = vrot.lane.b32.xlu0 %v892, 8
  %v1366 = vpop.permute.xlu0 %1365
  %1367 = vrot.lane.b32.xlu0 %v897, 8
  %v1368 = vpop.permute.xlu0 %1367
  %1369 = vrot.lane.b32.xlu0 %v902, 8
  %v1370 = vpop.permute.xlu0 %1369
  %1403 = vrot.lane.b32.xlu0 %v1036, 16
  %v1404 = vpop.permute.xlu0 %1403
  %1405 = vrot.lane.b32.xlu0 %v1041, 16
  %v1406 = vpop.permute.xlu0 %1405
  %1407 = vrot.lane.b32.xlu0 %v1046, 16
  %v1408 = vpop.permute.xlu0 %1407
  %1409 = vrot.lane.b32.xlu0 %v1051, 16
  %v1410 = vpop.permute.xlu0 %1409
  %1411 = vrot.lane.b32.xlu0 %v1056, 16
  %v1412 = vpop.permute.xlu0 %1411
  %1413 = vrot.lane.b32.xlu0 %v1061, 16
  %v1414 = vpop.permute.xlu0 %1413
  %1415 = vrot.lane.b32.xlu0 %v1066, 16
  %v1416 = vpop.permute.xlu0 %1415
  %1417 = vrot.lane.b32.xlu0 %v1071, 16
  %v1418 = vpop.permute.xlu0 %1417
  %1419 = vrot.lane.b32.xlu0 %v1076, 16
  %v1420 = vpop.permute.xlu0 %1419
  %1421 = vrot.lane.b32.xlu0 %v1081, 16
  %v1422 = vpop.permute.xlu0 %1421
  %1423 = vrot.lane.b32.xlu0 %v1086, 16
  %v1424 = vpop.permute.xlu0 %1423
  %1425 = vrot.lane.b32.xlu0 %v1091, 16
  %v1426 = vpop.permute.xlu0 %1425
  %1427 = vrot.lane.b32.xlu0 %v1096, 16
  %v1428 = vpop.permute.xlu0 %1427
  %1429 = vrot.lane.b32.xlu0 %v1101, 16
  %v1430 = vpop.permute.xlu0 %1429
  %1431 = vrot.lane.b32.xlu0 %v1106, 16
  %v1432 = vpop.permute.xlu0 %1431
  %1433 = vrot.lane.b32.xlu0 %v1111, 16
  %v1434 = vpop.permute.xlu0 %1433
  %1467 = vrot.lane.b32.xlu0 %v1245, 24
  %v1468 = vpop.permute.xlu0 %1467
  %1469 = vrot.lane.b32.xlu0 %v1250, 24
  %v1470 = vpop.permute.xlu0 %1469
  %1471 = vrot.lane.b32.xlu0 %v1255, 24
  %v1472 = vpop.permute.xlu0 %1471
  %1473 = vrot.lane.b32.xlu0 %v1260, 24
  %v1474 = vpop.permute.xlu0 %1473
  %1475 = vrot.lane.b32.xlu0 %v1265, 24
  %v1476 = vpop.permute.xlu0 %1475
  %1477 = vrot.lane.b32.xlu0 %v1270, 24
  %v1478 = vpop.permute.xlu0 %1477
  %1479 = vrot.lane.b32.xlu0 %v1275, 24
  %v1480 = vpop.permute.xlu0 %1479
  %1481 = vrot.lane.b32.xlu0 %v1280, 24
  %v1482 = vpop.permute.xlu0 %1481
  %1483 = vrot.lane.b32.xlu0 %v1285, 24
  %v1484 = vpop.permute.xlu0 %1483
  %1485 = vrot.lane.b32.xlu0 %v1290, 24
  %v1486 = vpop.permute.xlu0 %1485
  %1487 = vrot.lane.b32.xlu0 %v1295, 24
  %v1488 = vpop.permute.xlu0 %1487
  %1489 = vrot.lane.b32.xlu0 %v1300, 24
  %v1490 = vpop.permute.xlu0 %1489
  %1491 = vrot.lane.b32.xlu0 %v1305, 24
  %v1492 = vpop.permute.xlu0 %1491
  %1493 = vrot.lane.b32.xlu0 %v1310, 24
  %v1494 = vpop.permute.xlu0 %1493
  %1495 = vrot.lane.b32.xlu0 %v1315, 24
  %v1496 = vpop.permute.xlu0 %1495
  %1497 = vrot.lane.b32.xlu0 %v1320, 24
  %v1498 = vpop.permute.xlu0 %1497
  %vm1515 = vcmask 64512
  %v1516 = vsel %vm1515, %v618, %v1340
  %v1517 = vsel %vm1515, %v623, %v1342
  %v1518 = vsel %vm1515, %v628, %v1344
  %v1519 = vsel %vm1515, %v633, %v1346
  %v1520 = vsel %vm1515, %v638, %v1348
  %v1521 = vsel %vm1515, %v643, %v1350
  %v1522 = vsel %vm1515, %v648, %v1352
  %v1523 = vsel %vm1515, %v653, %v1354
  %v1524 = vsel %vm1515, %v658, %v1356
  %v1525 = vsel %vm1515, %v663, %v1358
  %v1526 = vsel %vm1515, %v668, %v1360
  %v1527 = vsel %vm1515, %v673, %v1362
  %v1528 = vsel %vm1515, %v678, %v1364
  %v1529 = vsel %vm1515, %v683, %v1366
  %v1530 = vsel %vm1515, %v688, %v1368
  %v1531 = vsel %vm1515, %v693, %v1370
  %v1532 = vsel %vm44, %v1516, %v1404
  %v1533 = vsel %vm44, %v1517, %v1406
  %v1534 = vsel %vm44, %v1518, %v1408
  %v1535 = vsel %vm44, %v1519, %v1410
  %v1536 = vsel %vm44, %v1520, %v1412
  %v1537 = vsel %vm44, %v1521, %v1414
  %v1538 = vsel %vm44, %v1522, %v1416
  %v1539 = vsel %vm44, %v1523, %v1418
  %v1540 = vsel %vm44, %v1524, %v1420
  %v1541 = vsel %vm44, %v1525, %v1422
  %v1542 = vsel %vm44, %v1526, %v1424
  %v1543 = vsel %vm44, %v1527, %v1426
  %v1544 = vsel %vm44, %v1528, %v1428
  %v1545 = vsel %vm44, %v1529, %v1430
  %v1546 = vsel %vm44, %v1530, %v1432
  %v1547 = vsel %vm44, %v1531, %v1434
  %vm1548 = vcmask 195584
  %v1549 = vsel %vm1548, %v1532, %v1468
  %v1550 = vsel %vm1548, %v1533, %v1470
  %v1551 = vsel %vm1548, %v1534, %v1472
  %v1552 = vsel %vm1548, %v1535, %v1474
  %v1553 = vsel %vm1548, %v1536, %v1476
  %v1554 = vsel %vm1548, %v1537, %v1478
  %v1555 = vsel %vm1548, %v1538, %v1480
  %v1556 = vsel %vm1548, %v1539, %v1482
  %v1557 = vsel %vm1548, %v1540, %v1484
  %v1558 = vsel %vm1548, %v1541, %v1486
  %v1559 = vsel %vm1548, %v1542, %v1488
  %v1560 = vsel %vm1548, %v1543, %v1490
  %v1561 = vsel %vm1548, %v1544, %v1492
  %v1562 = vsel %vm1548, %v1545, %v1494
  %v1563 = vsel %vm1548, %v1546, %v1496
  %v1564 = vsel %vm1548, %v1547, %v1498
  %1581 = vrot.lane.b32.xlu0 %v160, 124
  %v1582 = vpop.permute.xlu0 %1581
  %1583 = vrot.lane.b32.xlu0 %v165, 124
  %v1584 = vpop.permute.xlu0 %1583
  %1585 = vrot.lane.b32.xlu0 %v170, 124
  %v1586 = vpop.permute.xlu0 %1585
  %1587 = vrot.lane.b32.xlu0 %v175, 124
  %v1588 = vpop.permute.xlu0 %1587
  %1589 = vrot.lane.b32.xlu0 %v180, 124
  %v1590 = vpop.permute.xlu0 %1589
  %1591 = vrot.lane.b32.xlu0 %v185, 124
  %v1592 = vpop.permute.xlu0 %1591
  %1593 = vrot.lane.b32.xlu0 %v190, 124
  %v1594 = vpop.permute.xlu0 %1593
  %1595 = vrot.lane.b32.xlu0 %v195, 124
  %v1596 = vpop.permute.xlu0 %1595
  %1597 = vrot.lane.b32.xlu0 %v200, 124
  %v1598 = vpop.permute.xlu0 %1597
  %1599 = vrot.lane.b32.xlu0 %v205, 124
  %v1600 = vpop.permute.xlu0 %1599
  %1601 = vrot.lane.b32.xlu0 %v210, 124
  %v1602 = vpop.permute.xlu0 %1601
  %1603 = vrot.lane.b32.xlu0 %v215, 124
  %v1604 = vpop.permute.xlu0 %1603
  %1605 = vrot.lane.b32.xlu0 %v220, 124
  %v1606 = vpop.permute.xlu0 %1605
  %1607 = vrot.lane.b32.xlu0 %v225, 124
  %v1608 = vpop.permute.xlu0 %1607
  %1609 = vrot.lane.b32.xlu0 %v230, 124
  %v1610 = vpop.permute.xlu0 %1609
  %1611 = vrot.lane.b32.xlu0 %v235, 124
  %v1612 = vpop.permute.xlu0 %1611
  %v1629 = vadd.f32 %v1549, %v1582
  %v1630 = vadd.f32 %v1550, %v1584
  %v1631 = vadd.f32 %v1551, %v1586
  %v1632 = vadd.f32 %v1552, %v1588
  %v1633 = vadd.f32 %v1553, %v1590
  %v1634 = vadd.f32 %v1554, %v1592
  %v1635 = vadd.f32 %v1555, %v1594
  %v1636 = vadd.f32 %v1556, %v1596
  %v1637 = vadd.f32 %v1557, %v1598
  %v1638 = vadd.f32 %v1558, %v1600
  %v1639 = vadd.f32 %v1559, %v1602
  %v1640 = vadd.f32 %v1560, %v1604
  %v1641 = vadd.f32 %v1561, %v1606
  %v1642 = vadd.f32 %v1562, %v1608
  %v1643 = vadd.f32 %v1563, %v1610
  %v1644 = vadd.f32 %v1564, %v1612
  %v1645 = vld [vmem:[%s6] sm:$0x1]
  %v1647 = vlaneseq
  %v1648 = vshrl.u32 %v1647, 7
  %v1649 = vsub.s32 0, %v1648
  %v1650 = vrot.slane %v1645, %v1649
  %v1652 = vadd.f32 %v1629, %v1650
  %v1653 = vadd.f32 %v1630, %v1650
  %v1654 = vadd.f32 %v1631, %v1650
  %v1655 = vadd.f32 %v1632, %v1650
  %v1656 = vadd.f32 %v1633, %v1650
  %v1657 = vadd.f32 %v1634, %v1650
  %v1658 = vadd.f32 %v1635, %v1650
  %v1659 = vadd.f32 %v1636, %v1650
  %v1660 = vadd.f32 %v1637, %v1650
  %v1661 = vadd.f32 %v1638, %v1650
  %v1662 = vadd.f32 %v1639, %v1650
  %v1663 = vadd.f32 %v1640, %v1650
  %v1664 = vadd.f32 %v1641, %v1650
  %v1665 = vadd.f32 %v1642, %v1650
  %v1666 = vadd.f32 %v1643, %v1650
  %v1667 = vadd.f32 %v1644, %v1650
  %v1668 = vmax.f32 %v1652, 0.0
  %v1669 = vmax.f32 %v1653, 0.0
  %v1670 = vmax.f32 %v1654, 0.0
  %v1671 = vmax.f32 %v1655, 0.0
  %v1672 = vmax.f32 %v1656, 0.0
  %v1673 = vmax.f32 %v1657, 0.0
  %v1674 = vmax.f32 %v1658, 0.0
  %v1675 = vmax.f32 %v1659, 0.0
  %v1676 = vmax.f32 %v1660, 0.0
  %v1677 = vmax.f32 %v1661, 0.0
  %v1678 = vmax.f32 %v1662, 0.0
  %v1679 = vmax.f32 %v1663, 0.0
  %v1680 = vmax.f32 %v1664, 0.0
  %v1681 = vmax.f32 %v1665, 0.0
  %v1682 = vmax.f32 %v1666, 0.0
  %v1683 = vmax.f32 %v1667, 0.0
  %vm1684 = vcmask 261120
  %1685 = vst.msk [vmem:[%s7] sm:$0xff] %vm1684, %v1668
  %1686 = vst.msk [vmem:[%s7 + $0x8] sm:$0xff] %vm1684, %v1669
  %1687 = vst.msk [vmem:[%s7 + $0x10] sm:$0xff] %vm1684, %v1670
  %1688 = vst.msk [vmem:[%s7 + $0x18] sm:$0xff] %vm1684, %v1671
  %1689 = vst.msk [vmem:[%s7 + $0x20] sm:$0xff] %vm1684, %v1672
  %1690 = vst.msk [vmem:[%s7 + $0x28] sm:$0xff] %vm1684, %v1673
  %1691 = vst.msk [vmem:[%s7 + $0x30] sm:$0xff] %vm1684, %v1674
  %1692 = vst.msk [vmem:[%s7 + $0x38] sm:$0xff] %vm1684, %v1675
  %1693 = vst.msk [vmem:[%s7 + $0x40] sm:$0xff] %vm1684, %v1676
  %1694 = vst.msk [vmem:[%s7 + $0x48] sm:$0xff] %vm1684, %v1677
  %1695 = vst.msk [vmem:[%s7 + $0x50] sm:$0xff] %vm1684, %v1678
  %1696 = vst.msk [vmem:[%s7 + $0x58] sm:$0xff] %vm1684, %v1679
  %1697 = vst.msk [vmem:[%s7 + $0x60] sm:$0xff] %vm1684, %v1680
  %1698 = vst.msk [vmem:[%s7 + $0x68] sm:$0xff] %vm1684, %v1681
  %1699 = vst.msk [vmem:[%s7 + $0x70] sm:$0xff] %vm1684, %v1682
  %1700 = vst.msk [vmem:[%s7 + $0x78] sm:$0xff] %vm1684, %v1683
  // Predicated region
  $region30: #{tpu_custom_call.1} parent=0 // pred_check
    _
  $region31: #{tpu_custom_call.1} parent=0 // pred_check_branch
    %1702 = sbr.rel (0) target = $region33
  $region32: #{tpu_custom_call.1} parent=0 // pred_region
    _
  $region33: #{tpu_custom_call.1} parent=0 // pred_fallthru
    _
  // Predicated region
  $region34: #{tpu_custom_call.1} parent=0 // pred_check
    _
  $region35: #{tpu_custom_call.1} parent=0 // pred_check_branch
    %1704 = sbr.rel (0) target = $region37
  $region36: #{tpu_custom_call.1} parent=0 // pred_region
    _
  $region37: #{tpu_custom_call.1} parent=0 // pred_fallthru
    _

</llo_original>
